<compile_context>
chip_gen: v6e
topology: v6e:2x2x1
jax: 0.10.0
libtpu: 0.0.40
codegen_flags: <defaults>
</compile_context>

<pallas_src>
import functools
import math

import jax
import jax.numpy as jnp
from jax import lax
from jax.experimental import pallas as pl
from jax.experimental.pallas import tpu as pltpu

RMS_EPS = 1e-5      # LLaMA-2 rms_norm_eps
LN_EPS = 1e-5       # nn.LayerNorm default eps
NEG_INF = -1e9      # large-but-finite mask value
VMEM_LIMIT = 48 * 1024 * 1024   # conservative; raise toward ~100MiB on v6e


# ----------------------------------------------------------------------------
# shared math helpers (used inside kernels and in the pure-JAX reference)
# ----------------------------------------------------------------------------
def _rmsnorm(x, w):
    var = jnp.mean(x * x, axis=-1, keepdims=True)
    return x * lax.rsqrt(var + RMS_EPS) * w


def _layernorm(x, g, b):
    mu = jnp.mean(x, axis=-1, keepdims=True)
    var = jnp.mean((x - mu) ** 2, axis=-1, keepdims=True)
    return (x - mu) * lax.rsqrt(var + LN_EPS) * g + b


def _rope_tables(seq_len, head_dim, base=10000.0):
    inv_freq = 1.0 / (base ** (jnp.arange(0, head_dim, 2, dtype=jnp.float32) / head_dim))
    t = jnp.arange(seq_len, dtype=jnp.float32)
    freqs = jnp.outer(t, inv_freq)
    emb = jnp.concatenate([freqs, freqs], axis=-1)          # [S, hd]
    return jnp.cos(emb), jnp.sin(emb)


def _pad_bias(attention_mask):
    # 1 -> 0.0 (keep), 0 -> NEG_INF (pad)
    return (attention_mask.astype(jnp.float32) - 1.0) * (-NEG_INF)


def _softmax_rows(s):
    # kernel-only helper (pl.reciprocal): f32 softmax over last axis
    m = jnp.max(s, axis=-1, keepdims=True)
    e = jnp.exp(s - m)
    return e * pl.reciprocal(jnp.sum(e, axis=-1, keepdims=True), approx=True)


# ----------------------------------------------------------------------------
# Pallas kernels
# ----------------------------------------------------------------------------
def linear_kernel(x_ref, w_ref, b_ref, o_ref):
    o_ref[...] = jnp.dot(x_ref[...].astype(jnp.bfloat16), w_ref[...],
                         preferred_element_type=jnp.float32) + b_ref[...]


def fused_layers_kernel(num_heads,
                        h0_ref, ctx_ref, bias_ref, cos_ref, sin_ref, lnf_ref,
                        ln1_ref, wqkv_ref, wo_ref, ln2_ref, wgu_ref, wd_ref,
                        cwq_ref, cbq_ref, cwkv_ref, cbkv_ref, cwo_ref, cbo_ref,
                        clng_ref, clnb_ref,
                        o_ref, attn_sc):
    """Runs one decoder layer + fMRI cross block per grid step l.

    o_ref holds the [M, H] hidden state resident in VMEM across all layers
    (constant output block index over the L grid axis).
    """
    bf16 = jnp.bfloat16
    l = pl.program_id(0)

    @pl.when(l == 0)
    def _():
        o_ref[...] = h0_ref[...]        # init carry from token embeddings

    M, H = o_ref.shape
    B, _, S = bias_ref.shape
    C = ctx_ref.shape[0] // B
    hd = H // num_heads
    half = hd // 2
    scale = 1.0 / math.sqrt(hd)

    x = o_ref[...]                       # [M, H] f32 carry (M = B*S)
    cos = cos_ref[...]                   # [M, H] (tiled per head / batch)
    sin = sin_ref[...]                   # [M, H] sign-folded sin

    # ---------------- LLaMA self-attention --------------------------------
    xn = _rmsnorm(x, ln1_ref[0])
    qkv = jnp.dot(xn.astype(bf16), wqkv_ref[0],
                  preferred_element_type=jnp.float32)            # [M, 3H]

    row = lax.broadcasted_iota(jnp.int32, (S, S), 0)
    col = lax.broadcasted_iota(jnp.int32, (S, S), 1)
    bias = jnp.where(col <= row, 0.0, NEG_INF)[None] + bias_ref[...]   # [B,S,S]

    # per-head, lane-aligned slices (hd == 128): no head transposes
    for hh in range(num_heads):
        q = qkv[:, hh * hd:(hh + 1) * hd]
        k = qkv[:, H + hh * hd:H + (hh + 1) * hd]
        v = qkv[:, 2 * H + hh * hd:2 * H + (hh + 1) * hd]
        ch = cos[:, hh * hd:(hh + 1) * hd]
        sh = sin[:, hh * hd:(hh + 1) * hd]
        # RoPE: rotate-half via XLU roll, sign folded into sh; fold 1/sqrt(hd) into q
        q = (q * ch + pltpu.roll(q, half, axis=1) * sh) * scale
        k = k * ch + pltpu.roll(k, half, axis=1) * sh
        s = jnp.einsum("bsd,btd->bst",
                       q.reshape(B, S, hd).astype(bf16),
                       k.reshape(B, S, hd).astype(bf16),
                       preferred_element_type=jnp.float32) + bias
        p = _softmax_rows(s)
        o = jnp.einsum("bst,btd->bsd", p.astype(bf16),
                       v.reshape(B, S, hd).astype(bf16),
                       preferred_element_type=jnp.float32)
        attn_sc[:, hh * hd:(hh + 1) * hd] = o.reshape(M, hd)

    h1 = x + jnp.dot(attn_sc[...].astype(bf16), wo_ref[0],
                     preferred_element_type=jnp.float32)

    # ---------------- LLaMA SwiGLU MLP -------------------------------------
    hn = _rmsnorm(h1, ln2_ref[0])
    gu = jnp.dot(hn.astype(bf16), wgu_ref[0],
                 preferred_element_type=jnp.float32)             # [M, 2I]
    inter = wd_ref.shape[1]
    act = jax.nn.silu(gu[:, :inter]) * gu[:, inter:]             # f32 elementwise
    y = h1 + jnp.dot(act.astype(bf16), wd_ref[0],
                     preferred_element_type=jnp.float32)

    # ---------------- fMRI cross-attention block (post-layer hook) ---------
    ctx = ctx_ref[...]                                           # [B*C, H] f32
    qc = jnp.dot(y.astype(bf16), cwq_ref[0],
                 preferred_element_type=jnp.float32) + cbq_ref[0]
    kvc = jnp.dot(ctx.astype(bf16), cwkv_ref[0],
                  preferred_element_type=jnp.float32) + cbkv_ref[0]
    for hh in range(num_heads):
        qh = (qc[:, hh * hd:(hh + 1) * hd] * scale).reshape(B, S, hd).astype(bf16)
        kh = kvc[:, hh * hd:(hh + 1) * hd].reshape(B, C, hd).astype(bf16)
        vh = kvc[:, H + hh * hd:H + (hh + 1) * hd].reshape(B, C, hd).astype(bf16)
        s = jnp.einsum("bsd,btd->bst", qh, kh, preferred_element_type=jnp.float32)
        p = _softmax_rows(s)
        o = jnp.einsum("bst,btd->bsd", p.astype(bf16), vh,
                       preferred_element_type=jnp.float32)
        attn_sc[:, hh * hd:(hh + 1) * hd] = o.reshape(M, hd)

    attn_c = jnp.dot(attn_sc[...].astype(bf16), cwo_ref[0],
                     preferred_element_type=jnp.float32) + cbo_ref[0]
    new_h = _layernorm(y + attn_c, clng_ref[0], clnb_ref[0])
    o_ref[...] = new_h

    # hoisted final RMSNorm (model.norm): applied once, on the last layer
    @pl.when(l == pl.num_programs(0) - 1)
    def _():
        o_ref[...] = _rmsnorm(new_h, lnf_ref[0])


def lm_head_kernel(h_ref, w_ref, o_ref):
    # h already final-RMSNorm'ed; weight stored [H, V] -> plain jnp.dot
    o_ref[...] = jnp.dot(h_ref[...].astype(jnp.bfloat16), w_ref[...],
                         preferred_element_type=jnp.float32)


# ----------------------------------------------------------------------------
# pallas_call wrappers
# ----------------------------------------------------------------------------
def fmri_proj(x, w, b):
    """x: [B, C, F] f32, w: [F, H] bf16, b: [1, H] f32 -> [B*C, H] f32."""
    B, C, F = x.shape
    H = w.shape[1]
    return pl.pallas_call(
        linear_kernel,
        out_shape=jax.ShapeDtypeStruct((B * C, H), jnp.float32),
        grid=(1,),
        in_specs=[pl.BlockSpec((B * C, F), lambda i: (0, 0)),
                  pl.BlockSpec((F, H), lambda i: (0, 0)),
                  pl.BlockSpec((1, H), lambda i: (0, 0))],
        out_specs=pl.BlockSpec((B * C, H), lambda i: (0, 0)),
    )(x.reshape(B * C, F), w, b)


def fused_layers(h0, ctx, pad_bias, cos, sin, lnf, lw, *, num_heads):
    """h0: [M,H] f32 (M=B*S), ctx: [B*C,H], pad_bias: [B,1,S], cos/sin: [M,H],
    lnf: [1,H], lw: dict of weights stacked along a leading L axis."""
    M, H = h0.shape
    L = lw["wqkv"].shape[0]
    inter = lw["wd"].shape[1]

    def const_spec(shp):
        return pl.BlockSpec(shp, lambda l: (0,) * len(shp))

    def layer_spec(shp):
        return pl.BlockSpec((1,) + shp, lambda l: (l,) + (0,) * len(shp))

    kernel = functools.partial(fused_layers_kernel, num_heads)
    return pl.pallas_call(
        kernel,
        out_shape=jax.ShapeDtypeStruct((M, H), jnp.float32),
        grid=(L,),
        in_specs=[
            const_spec((M, H)),                 # token-embedding hidden state
            const_spec(ctx.shape),              # fmri context [B*C, H]
            const_spec(pad_bias.shape),         # key-padding bias [B, 1, S]
            const_spec((M, H)),                 # rope cos (pre-tiled)
            const_spec((M, H)),                 # rope sin (sign-folded)
            const_spec((1, H)),                 # final RMSNorm weight
            layer_spec((1, H)),                 # ln1
            layer_spec((H, 3 * H)),             # fused wqkv
            layer_spec((H, H)),                 # wo
            layer_spec((1, H)),                 # ln2
            layer_spec((H, 2 * inter)),         # fused gate|up
            layer_spec((inter, H)),             # down
            layer_spec((H, H)),                 # cross q proj
            layer_spec((1, H)),                 # cross q bias
            layer_spec((H, 2 * H)),             # cross fused kv proj
            layer_spec((1, 2 * H)),             # cross kv bias
            layer_spec((H, H)),                 # cross out proj
            layer_spec((1, H)),                 # cross out bias
            layer_spec((1, H)),                 # cross LayerNorm gamma
            layer_spec((1, H)),                 # cross LayerNorm beta
        ],
        out_specs=pl.BlockSpec((M, H), lambda l: (0, 0)),   # resident carry
        scratch_shapes=[pltpu.VMEM((M, H), jnp.float32)],   # per-head attn slab
        compiler_params=pltpu.CompilerParams(
            dimension_semantics=("arbitrary",),
            vmem_limit_bytes=VMEM_LIMIT),
    )(h0, ctx, pad_bias, cos, sin, lnf,
      lw["ln1"], lw["wqkv"], lw["wo"], lw["ln2"], lw["wgu"], lw["wd"],
      lw["cwq"], lw["cbq"], lw["cwkv"], lw["cbkv"], lw["cwo"], lw["cbo"],
      lw["clng"], lw["clnb"])


def lm_head(hn, w_lm, *, tile_m=256, tile_v=512):
    """hn: [M,H] f32 (already final-norm'ed), w_lm: [H,V] bf16 -> [M,V] f32."""
    M, H = hn.shape
    V = w_lm.shape[1]
    tm = min(tile_m, M)
    tv = min(tile_v, V)
    assert M % tm == 0 and V % tv == 0, "pad M / vocab to tile multiples"
    return pl.pallas_call(
        lm_head_kernel,
        out_shape=jax.ShapeDtypeStruct((M, V), jnp.float32),
        grid=(M // tm, V // tv),
        in_specs=[pl.BlockSpec((tm, H), lambda i, j: (i, 0)),
                  pl.BlockSpec((H, tv), lambda i, j: (0, j))],
        out_specs=pl.BlockSpec((tm, tv), lambda i, j: (i, j)),
        compiler_params=pltpu.CompilerParams(
            dimension_semantics=("parallel", "parallel"),
            vmem_limit_bytes=VMEM_LIMIT),
    )(hn, w_lm)


def forward(params, input_ids, attention_mask, fmri_embedding, *, num_heads):
    B, S = input_ids.shape
    H = params["tok_emb"].shape[1]
    hd = H // num_heads

    # fMRI conditioning context [B*C, H] (cross-attention keys/values)
    ctx = fmri_proj(fmri_embedding, params["fmri_w"], params["fmri_b"])

    # embedding gather = glue JAX; flatten (B, S) -> M for all dense matmuls
    h0 = params["tok_emb"][input_ids].astype(jnp.float32).reshape(B * S, H)

    # hoisted: rotary tables (tiled per head/batch, sign folded into sin for the
    # pltpu.roll rotate-half) + additive key-padding bias
    cos, sin = _rope_tables(S, hd)
    sign = jnp.concatenate([-jnp.ones((hd // 2,), jnp.float32),
                            jnp.ones((hd // 2,), jnp.float32)])
    cos_mh = jnp.tile(jnp.tile(cos, (1, num_heads)), (B, 1))            # [B*S, H]
    sin_mh = jnp.tile(jnp.tile(sin * sign[None, :], (1, num_heads)), (B, 1))
    pad_bias = _pad_bias(attention_mask).reshape(B, 1, S)

    # all decoder layers + cross blocks + final RMSNorm in ONE pallas_call
    hn = fused_layers(h0, ctx, pad_bias, cos_mh, sin_mh, params["lnf"],
                      params["layers"], num_heads=num_heads)

    logits = lm_head(hn, params["w_lm"])
    return logits.reshape(B, S, -1)


# ----------------------------------------------------------------------------
# deterministic synthetic parameters (small LLaMA-like config, stacked layers)
# ----------------------------------------------------------------------------
def init_params(key, *, vocab, H, n_layers, nh, inter, fmri_dim):
    del nh
    keys = iter(jax.random.split(key, 20))
    f32, bf16 = jnp.float32, jnp.bfloat16
    L = n_layers

    def nrm(shp, dt=bf16):
        return (jax.random.normal(next(keys), shp, f32) * 0.02).astype(dt)

    return {
        "tok_emb": nrm((vocab, H), f32),
        "w_lm": nrm((H, vocab)),                 # [H, V] (lane-dense lm_head), bf16
        "fmri_w": nrm((fmri_dim, H)),
        "fmri_b": nrm((1, H), f32),
        "lnf": jnp.ones((1, H), f32),
        "layers": {
            "ln1": jnp.ones((L, 1, H), f32),
            "wqkv": nrm((L, H, 3 * H)),
            "wo": nrm((L, H, H)),
            "ln2": jnp.ones((L, 1, H), f32),
            "wgu": nrm((L, H, 2 * inter)),
            "wd": nrm((L, inter, H)),
            "cwq": nrm((L, H, H)),
            "cbq": nrm((L, 1, H), f32),
            "cwkv": nrm((L, H, 2 * H)),
            "cbkv": nrm((L, 1, 2 * H), f32),
            "cwo": nrm((L, H, H)),
            "cbo": nrm((L, 1, H), f32),
            "clng": jnp.ones((L, 1, H), f32),
            "clnb": jnp.zeros((L, 1, H), f32),
        },
    }


# ----------------------------------------------------------------------------
# pure-JAX reference (same math / same bf16 matmul operands) for verification
# ----------------------------------------------------------------------------
def reference_forward(params, input_ids, attention_mask, fmri_embedding, *, num_heads):
    bf16 = jnp.bfloat16
    B, S = input_ids.shape
    H = params["tok_emb"].shape[1]
    nh, hd = num_heads, H // num_heads
    scale = 1.0 / math.sqrt(hd)

    def mm(a, b):
        return jnp.dot(a.astype(bf16), b.astype(bf16), preferred_element_type=jnp.float32)

    def split(x):   # [B, T, H] -> [B, nh, T, hd]
        return jnp.transpose(x.reshape(B, -1, nh, hd), (0, 2, 1, 3))

    def merge(x):   # [B, nh, T, hd] -> [B, T, H]
        return jnp.transpose(x, (0, 2, 1, 3)).reshape(B, -1, H)

    cos, sin = _rope_tables(S, hd)

    def rope(x):
        half = hd // 2
        xr = jnp.concatenate([-x[..., half:], x[..., :half]], axis=-1)
        return x * cos[None, None] + xr * sin[None, None]

    def attn(q, k, v, b):
        s = jnp.einsum("bhsd,bhtd->bhst", q.astype(bf16), k.astype(bf16),
                       preferred_element_type=jnp.float32)
        if b is not None:
            s = s + b
        p = jax.nn.softmax(s, axis=-1)
        return jnp.einsum("bhst,bhtd->bhsd", p.astype(bf16), v.astype(bf16),
                          preferred_element_type=jnp.float32)

    fmri_ctx = mm(fmri_embedding, params["fmri_w"]) + params["fmri_b"]

    h = params["tok_emb"][input_ids].astype(jnp.float32)
    pad = _pad_bias(attention_mask)                       # [B, S]
    row = jnp.arange(S)[:, None]
    col = jnp.arange(S)[None, :]
    causal = jnp.where(col <= row, 0.0, NEG_INF)          # [S, S]
    bias = causal[None] + pad[:, None, :]                 # [B, S, S]

    L = params["layers"]["wqkv"].shape[0]
    for i in range(L):
        lp = {k: v[i] for k, v in params["layers"].items()}
        xn = _rmsnorm(h, lp["ln1"])
        qkv = mm(xn, lp["wqkv"])
        q = rope(split(qkv[..., :H])) * scale
        k = rope(split(qkv[..., H:2 * H]))
        v = split(qkv[..., 2 * H:])
        h1 = h + mm(merge(attn(q, k, v, bias[:, None])), lp["wo"])

        hn = _rmsnorm(h1, lp["ln2"])
        gu = mm(hn, lp["wgu"])
        inter = lp["wd"].shape[0]
        y = h1 + mm(jax.nn.silu(gu[..., :inter]) * gu[..., inter:], lp["wd"])

        qc = mm(y, lp["cwq"]) + lp["cbq"]
        kvc = mm(fmri_ctx, lp["cwkv"]) + lp["cbkv"]
        oc = attn(split(qc) * scale, split(kvc[..., :H]), split(kvc[..., H:]), None)
        attn_c = mm(merge(oc), lp["cwo"]) + lp["cbo"]
        h = _layernorm(y + attn_c, lp["clng"], lp["clnb"])

    hn = _rmsnorm(h, params["lnf"])
    return jnp.einsum("bsh,hv->bsv", hn.astype(bf16), params["w_lm"],
                      preferred_element_type=jnp.float32)


if __name__ == "__main__":
    # small LLaMA-like config (head_dim=128 like real LLaMA, everything else tiny)
    B, S, C = 2, 8, 8                  # batch, sequence, fmri-context length
    H, NH, NL = 256, 2, 2              # hidden, heads (hd=128), layers
    INTER, V, FD = 512, 256, 64        # mlp intermediate (mult of 128), vocab, fmri_dim

    key = jax.random.PRNGKey(0)
    kp, kid, kf = jax.random.split(key, 3)
    params = init_params(kp, vocab=V, H=H, n_layers=NL, nh=NH, inter=INTER, fmri_dim=FD)
    input_ids = jax.random.randint(kid, (B, S), 0, V)
    attention_mask = jnp.ones((B, S), jnp.int32).at[1, S - 2:].set(0)  # pad tail of batch 1
    fmri_embedding = jax.random.normal(kf, (B, C, FD), jnp.float32)

    fwd = jax.jit(functools.partial(forward, num_heads=NH))
    logits = fwd(params, input_ids, attention_mask, fmri_embedding)
    jax.block_until_ready(logits)

    assert logits.shape == (B, S, V)
    assert bool(jnp.all(jnp.isfinite(logits)))

    ref = reference_forward(params, input_ids, attention_mask, fmri_embedding, num_heads=NH)
    max_err = float(jnp.max(jnp.abs(logits - ref)))
    assert max_err < 5e-2, f"mismatch vs reference: {max_err}"

    print("KERNEL_OK")
</pallas_src>

<mosaic_0001>
module attributes {stable_mosaic.version = 11 : i64} {
  func.func @linear_kernel(%arg0: i32, %arg1: memref<16x64xf32, #tpu.memory_space<vmem>>, %arg2: memref<64x256xbf16, #tpu.memory_space<vmem>>, %arg3: memref<1x256xf32, #tpu.memory_space<vmem>>, %arg4: memref<16x256xf32, #tpu.memory_space<vmem>>) attributes {dimension_semantics = [#tpu.dimension_semantics<arbitrary>], iteration_bounds = array<i64: 1>, scalar_prefetch = 0 : i64, scratch_operands = 0 : i64, tpu.core_type = #tpu.core_type<tc>, window_params = [{pipeline_mode = #tpu.pipeline_mode<synchronous>, transform_indices = @transform_0, window_bounds = array<i64: 16, 64>}, {pipeline_mode = #tpu.pipeline_mode<synchronous>, transform_indices = @transform_1, window_bounds = array<i64: 64, 256>}, {pipeline_mode = #tpu.pipeline_mode<synchronous>, transform_indices = @transform_2, window_bounds = array<i64: 1, 256>}, {pipeline_mode = #tpu.pipeline_mode<synchronous>, transform_indices = @transform_3, window_bounds = array<i64: 16, 256>}]} {
    %c0 = arith.constant 0 : index
    %c0_0 = arith.constant 0 : index
    %0 = vector.load %arg1[%c0, %c0_0] : memref<16x64xf32, #tpu.memory_space<vmem>>, vector<16x64xf32>
    %1 = arith.truncf %0 : vector<16x64xf32> to vector<16x64xbf16>
    %c0_1 = arith.constant 0 : index
    %c0_2 = arith.constant 0 : index
    %2 = vector.load %arg2[%c0_1, %c0_2] : memref<64x256xbf16, #tpu.memory_space<vmem>>, vector<64x256xbf16>
    %cst = arith.constant dense<0.000000e+00> : vector<16x256xf32>
    %3 = tpu.matmul %1, %2, %cst {dimension_numbers = #tpu.dot_dimension_numbers<[1], [0], [0], [1], [0, 0, 1, 1], [], []>} : vector<16x64xbf16>, vector<64x256xbf16>, vector<16x256xf32> -> vector<16x256xf32>
    %c0_3 = arith.constant 0 : index
    %c0_4 = arith.constant 0 : index
    %4 = vector.load %arg3[%c0_3, %c0_4] : memref<1x256xf32, #tpu.memory_space<vmem>>, vector<1x256xf32>
    %5 = vector.broadcast %4 : vector<1x256xf32> to vector<16x256xf32>
    %6 = arith.addf %3, %5 : vector<16x256xf32>
    %c0_5 = arith.constant 0 : index
    %c0_6 = arith.constant 0 : index
    %7 = vector.load %arg4[%c0_5, %c0_6] : memref<16x256xf32, #tpu.memory_space<vmem>>, vector<16x256xf32>
    tpu.vector_store %arg4[%c0_5, %c0_6], %6 {strides = array<i32>} : memref<16x256xf32, #tpu.memory_space<vmem>>, vector<16x256xf32>,
    return
  }
  func.func @transform_0(%arg0: i32) -> (i32, i32) {
    %c0_i32 = arith.constant 0 : i32
    %c0_i32_0 = arith.constant 0 : i32
    %c0_i32_1 = arith.constant 0 : i32
    return %c0_i32, %c0_i32_0 : i32, i32
  }
  func.func @transform_1(%arg0: i32) -> (i32, i32) {
    %c0_i32 = arith.constant 0 : i32
    %c0_i32_0 = arith.constant 0 : i32
    %c0_i32_1 = arith.constant 0 : i32
    return %c0_i32, %c0_i32_0 : i32, i32
  }
  func.func @transform_2(%arg0: i32) -> (i32, i32) {
    %c0_i32 = arith.constant 0 : i32
    %c0_i32_0 = arith.constant 0 : i32
    %c0_i32_1 = arith.constant 0 : i32
    return %c0_i32, %c0_i32_0 : i32, i32
  }
  func.func @transform_3(%arg0: i32) -> (i32, i32) {
    %c0_i32 = arith.constant 0 : i32
    %c0_i32_0 = arith.constant 0 : i32
    %c0_i32_1 = arith.constant 0 : i32
    return %c0_i32, %c0_i32_0 : i32, i32
  }
}

module attributes {stable_mosaic.version = 11 : i64} {
  func.func @fused_layers_kernel(%arg0: i32, %arg1: memref<16x256xf32, #tpu.memory_space<vmem>>, %arg2: memref<16x256xf32, #tpu.memory_space<vmem>>, %arg3: memref<2x1x8xf32, #tpu.memory_space<vmem>>, %arg4: memref<16x256xf32, #tpu.memory_space<vmem>>, %arg5: memref<16x256xf32, #tpu.memory_space<vmem>>, %arg6: memref<1x256xf32, #tpu.memory_space<vmem>>, %arg7: memref<1x1x256xf32, #tpu.memory_space<vmem>>, %arg8: memref<1x256x768xbf16, #tpu.memory_space<vmem>>, %arg9: memref<1x256x256xbf16, #tpu.memory_space<vmem>>, %arg10: memref<1x1x256xf32, #tpu.memory_space<vmem>>, %arg11: memref<1x256x1024xbf16, #tpu.memory_space<vmem>>, %arg12: memref<1x512x256xbf16, #tpu.memory_space<vmem>>, %arg13: memref<1x256x256xbf16, #tpu.memory_space<vmem>>, %arg14: memref<1x1x256xf32, #tpu.memory_space<vmem>>, %arg15: memref<1x256x512xbf16, #tpu.memory_space<vmem>>, %arg16: memref<1x1x512xf32, #tpu.memory_space<vmem>>, %arg17: memref<1x256x256xbf16, #tpu.memory_space<vmem>>, %arg18: memref<1x1x256xf32, #tpu.memory_space<vmem>>, %arg19: memref<1x1x256xf32, #tpu.memory_space<vmem>>, %arg20: memref<1x1x256xf32, #tpu.memory_space<vmem>>, %arg21: memref<16x256xf32, #tpu.memory_space<vmem>>, %arg22: memref<16x256xf32, #tpu.memory_space<vmem>>) attributes {dimension_semantics = [#tpu.dimension_semantics<arbitrary>], iteration_bounds = array<i64: 2>, scalar_prefetch = 0 : i64, scratch_operands = 1 : i64, tpu.core_type = #tpu.core_type<tc>, window_params = [{pipeline_mode = #tpu.pipeline_mode<synchronous>, transform_indices = @transform_0, window_bounds = array<i64: 16, 256>}, {pipeline_mode = #tpu.pipeline_mode<synchronous>, transform_indices = @transform_1, window_bounds = array<i64: 16, 256>}, {pipeline_mode = #tpu.pipeline_mode<synchronous>, transform_indices = @transform_2, window_bounds = array<i64: 2, 1, 8>}, {pipeline_mode = #tpu.pipeline_mode<synchronous>, transform_indices = @transform_3, window_bounds = array<i64: 16, 256>}, {pipeline_mode = #tpu.pipeline_mode<synchronous>, transform_indices = @transform_4, window_bounds = array<i64: 16, 256>}, {pipeline_mode = #tpu.pipeline_mode<synchronous>, transform_indices = @transform_5, window_bounds = array<i64: 1, 256>}, {transform_indices = @transform_6, window_bounds = array<i64: 1, 1, 256>}, {transform_indices = @transform_7, window_bounds = array<i64: 1, 256, 768>}, {transform_indices = @transform_8, window_bounds = array<i64: 1, 256, 256>}, {transform_indices = @transform_9, window_bounds = array<i64: 1, 1, 256>}, {transform_indices = @transform_10, window_bounds = array<i64: 1, 256, 1024>}, {transform_indices = @transform_11, window_bounds = array<i64: 1, 512, 256>}, {transform_indices = @transform_12, window_bounds = array<i64: 1, 256, 256>}, {transform_indices = @transform_13, window_bounds = array<i64: 1, 1, 256>}, {transform_indices = @transform_14, window_bounds = array<i64: 1, 256, 512>}, {transform_indices = @transform_15, window_bounds = array<i64: 1, 1, 512>}, {transform_indices = @transform_16, window_bounds = array<i64: 1, 256, 256>}, {transform_indices = @transform_17, window_bounds = array<i64: 1, 1, 256>}, {transform_indices = @transform_18, window_bounds = array<i64: 1, 1, 256>}, {transform_indices = @transform_19, window_bounds = array<i64: 1, 1, 256>}, {pipeline_mode = #tpu.pipeline_mode<synchronous>, transform_indices = @transform_20, window_bounds = array<i64: 16, 256>}]} {
    %c0_i32 = arith.constant 0 : i32
    %0 = arith.cmpi eq, %arg0, %c0_i32 : i32
    %1 = arith.extui %0 : i1 to i32
    %c0_i32_0 = arith.constant 0 : i32
    %2 = arith.cmpi ne, %1, %c0_i32_0 : i32
    scf.if %2 {
      %c0_110 = arith.constant 0 : index
      %c0_111 = arith.constant 0 : index
      %256 = vector.load %arg1[%c0_110, %c0_111] : memref<16x256xf32, #tpu.memory_space<vmem>>, vector<16x256xf32>
      %c0_112 = arith.constant 0 : index
      %c0_113 = arith.constant 0 : index
      %257 = vector.load %arg21[%c0_112, %c0_113] : memref<16x256xf32, #tpu.memory_space<vmem>>, vector<16x256xf32>
      tpu.vector_store %arg21[%c0_112, %c0_113], %256 {strides = array<i32>} : memref<16x256xf32, #tpu.memory_space<vmem>>, vector<16x256xf32>,
    } else {
    }
    %c0 = arith.constant 0 : index
    %c0_1 = arith.constant 0 : index
    %3 = vector.load %arg21[%c0, %c0_1] : memref<16x256xf32, #tpu.memory_space<vmem>>, vector<16x256xf32>
    %c0_2 = arith.constant 0 : index
    %c0_3 = arith.constant 0 : index
    %4 = vector.load %arg4[%c0_2, %c0_3] : memref<16x256xf32, #tpu.memory_space<vmem>>, vector<16x256xf32>
    %c0_4 = arith.constant 0 : index
    %c0_5 = arith.constant 0 : index
    %5 = vector.load %arg5[%c0_4, %c0_5] : memref<16x256xf32, #tpu.memory_space<vmem>>, vector<16x256xf32>
    %c0_6 = arith.constant 0 : index
    %c0_7 = arith.constant 0 : index
    %c0_8 = arith.constant 0 : index
    %6 = vector.load %arg7[%c0_6, %c0_7, %c0_8] : memref<1x1x256xf32, #tpu.memory_space<vmem>>, vector<1x1x256xf32>
    %7 = vector.shape_cast %6 : vector<1x1x256xf32> to vector<1x256xf32>
    %8 = arith.mulf %3, %3 : vector<16x256xf32>
    %cst = arith.constant dense<0.000000e+00> : vector<16xf32>
    %9 = vector.multi_reduction <add>, %8, %cst [1] : vector<16x256xf32> to vector<16xf32>
    %10 = vector.shape_cast %9 : vector<16xf32> to vector<16x1xf32>
    %cst_9 = arith.constant 2.560000e+02 : f32
    %11 = vector.broadcast %cst_9 : f32 to vector<16x1xf32>
    %12 = arith.divf %10, %11 : vector<16x1xf32>
    %cst_10 = arith.constant 9.99999974E-6 : f32
    %13 = vector.broadcast %cst_10 : f32 to vector<16x1xf32>
    %14 = arith.addf %12, %13 : vector<16x1xf32>
    %15 = math.rsqrt %14 : vector<16x1xf32>
    %16 = vector.broadcast %15 : vector<16x1xf32> to vector<16x256xf32>
    %17 = arith.mulf %3, %16 : vector<16x256xf32>
    %18 = vector.broadcast %7 : vector<1x256xf32> to vector<16x256xf32>
    %19 = arith.mulf %17, %18 : vector<16x256xf32>
    %20 = arith.truncf %19 : vector<16x256xf32> to vector<16x256xbf16>
    %c0_11 = arith.constant 0 : index
    %c0_12 = arith.constant 0 : index
    %c0_13 = arith.constant 0 : index
    %21 = vector.load %arg8[%c0_11, %c0_12, %c0_13] : memref<1x256x768xbf16, #tpu.memory_space<vmem>>, vector<1x256x768xbf16>
    %22 = vector.shape_cast %21 : vector<1x256x768xbf16> to vector<256x768xbf16>
    %cst_14 = arith.constant dense<0.000000e+00> : vector<16x768xf32>
    %23 = tpu.matmul %20, %22, %cst_14 {dimension_numbers = #tpu.dot_dimension_numbers<[1], [0], [0], [1], [0, 0, 1, 1], [], []>} : vector<16x256xbf16>, vector<256x768xbf16>, vector<16x768xf32> -> vector<16x768xf32>
    %24 = tpu.iota {dimensions = array<i32: 0>} : vector<8x8xi32>
    %25 = tpu.iota {dimensions = array<i32: 1>} : vector<8x8xi32>
    %26 = arith.cmpi sle, %25, %24 : vector<8x8xi32>
    %cst_15 = arith.constant 0.000000e+00 : f32
    %cst_16 = arith.constant -1.000000e+09 : f32
    %27 = vector.broadcast %cst_15 : f32 to vector<8x8xf32>
    %28 = vector.broadcast %cst_16 : f32 to vector<8x8xf32>
    %29 = arith.select %26, %27, %28 : vector<8x8xi1>, vector<8x8xf32>
    %30 = vector.shape_cast %29 : vector<8x8xf32> to vector<1x8x8xf32>
    %c0_17 = arith.constant 0 : index
    %c0_18 = arith.constant 0 : index
    %c0_19 = arith.constant 0 : index
    %31 = vector.load %arg3[%c0_17, %c0_18, %c0_19] : memref<2x1x8xf32, #tpu.memory_space<vmem>>, vector<2x1x8xf32>
    %32 = vector.broadcast %30 : vector<1x8x8xf32> to vector<2x8x8xf32>
    %33 = vector.broadcast %31 : vector<2x1x8xf32> to vector<2x8x8xf32>
    %34 = arith.addf %32, %33 : vector<2x8x8xf32>
    %35 = vector.extract_strided_slice %23 {offsets = [0, 0], sizes = [16, 128], strides = [1, 1]} : vector<16x768xf32> to vector<16x128xf32>
    %36 = vector.extract_strided_slice %23 {offsets = [0, 256], sizes = [16, 128], strides = [1, 1]} : vector<16x768xf32> to vector<16x128xf32>
    %37 = vector.extract_strided_slice %23 {offsets = [0, 512], sizes = [16, 128], strides = [1, 1]} : vector<16x768xf32> to vector<16x128xf32>
    %38 = vector.extract_strided_slice %4 {offsets = [0, 0], sizes = [16, 128], strides = [1, 1]} : vector<16x256xf32> to vector<16x128xf32>
    %39 = vector.extract_strided_slice %5 {offsets = [0, 0], sizes = [16, 128], strides = [1, 1]} : vector<16x256xf32> to vector<16x128xf32>
    %40 = arith.mulf %35, %38 : vector<16x128xf32>
    %c64_i32 = arith.constant 64 : i32
    %41 = tpu.dynamic_rotate %35 by %c64_i32 dim 1 : vector<16x128xf32>, i32 -> vector<16x128xf32>
    %42 = arith.mulf %41, %39 : vector<16x128xf32>
    %43 = arith.addf %40, %42 : vector<16x128xf32>
    %cst_20 = arith.constant 0.0883883461 : f32
    %44 = vector.broadcast %cst_20 : f32 to vector<16x128xf32>
    %45 = arith.mulf %43, %44 : vector<16x128xf32>
    %46 = arith.mulf %36, %38 : vector<16x128xf32>
    %c64_i32_21 = arith.constant 64 : i32
    %47 = tpu.dynamic_rotate %36 by %c64_i32_21 dim 1 : vector<16x128xf32>, i32 -> vector<16x128xf32>
    %48 = arith.mulf %47, %39 : vector<16x128xf32>
    %49 = arith.addf %46, %48 : vector<16x128xf32>
    %50 = vector.shape_cast %45 : vector<16x128xf32> to vector<2x8x128xf32>
    %51 = arith.truncf %50 : vector<2x8x128xf32> to vector<2x8x128xbf16>
    %52 = vector.shape_cast %49 : vector<16x128xf32> to vector<2x8x128xf32>
    %53 = arith.truncf %52 : vector<2x8x128xf32> to vector<2x8x128xbf16>
    "tpu.trace_start"() <{level = 10 : i32, message = "bsd,btd->bst"}> : () -> ()
    %cst_22 = arith.constant dense<0.000000e+00> : vector<2x8x8xf32>
    %54 = tpu.matmul %51, %53, %cst_22 {dimension_numbers = #tpu.dot_dimension_numbers<[2], [2], [1], [1], [0, 0, 0, 1, 1, 1], [0], [0]>} : vector<2x8x128xbf16>, vector<2x8x128xbf16>, vector<2x8x8xf32> -> vector<2x8x8xf32>
    "tpu.trace_stop"() : () -> ()
    %55 = arith.addf %54, %34 : vector<2x8x8xf32>
    %cst_23 = arith.constant dense<0xFF800000> : vector<2x8xf32>
    %56 = vector.multi_reduction <maximumf>, %55, %cst_23 [2] : vector<2x8x8xf32> to vector<2x8xf32>
    %57 = vector.shape_cast %56 : vector<2x8xf32> to vector<2x8x1xf32>
    %58 = vector.broadcast %57 : vector<2x8x1xf32> to vector<2x8x8xf32>
    %59 = arith.subf %55, %58 : vector<2x8x8xf32>
    %60 = math.exp %59 : vector<2x8x8xf32>
    %cst_24 = arith.constant dense<0.000000e+00> : vector<2x8xf32>
    %61 = vector.multi_reduction <add>, %60, %cst_24 [2] : vector<2x8x8xf32> to vector<2x8xf32>
    %62 = vector.shape_cast %61 : vector<2x8xf32> to vector<2x8x1xf32>
    %63 = tpu.reciprocal %62 {approx = true} : vector<2x8x1xf32> -> vector<2x8x1xf32>
    %64 = vector.broadcast %63 : vector<2x8x1xf32> to vector<2x8x8xf32>
    %65 = arith.mulf %60, %64 : vector<2x8x8xf32>
    %66 = arith.truncf %65 : vector<2x8x8xf32> to vector<2x8x8xbf16>
    %67 = vector.shape_cast %37 : vector<16x128xf32> to vector<2x8x128xf32>
    %68 = arith.truncf %67 : vector<2x8x128xf32> to vector<2x8x128xbf16>
    "tpu.trace_start"() <{level = 10 : i32, message = "bst,btd->bsd"}> : () -> ()
    %cst_25 = arith.constant dense<0.000000e+00> : vector<2x8x128xf32>
    %69 = tpu.matmul %66, %68, %cst_25 {dimension_numbers = #tpu.dot_dimension_numbers<[2], [1], [1], [2], [0, 0, 0, 1, 1, 2], [0], [0]>} : vector<2x8x8xbf16>, vector<2x8x128xbf16>, vector<2x8x128xf32> -> vector<2x8x128xf32>
    "tpu.trace_stop"() : () -> ()
    %70 = vector.shape_cast %69 : vector<2x8x128xf32> to vector<16x128xf32>
    %c0_26 = arith.constant 0 : index
    %c0_27 = arith.constant 0 : index
    %71 = vector.load %arg22[%c0_26, %c0_27] : memref<16x256xf32, #tpu.memory_space<vmem>>, vector<16x128xf32>
    tpu.vector_store %arg22[%c0_26, %c0_27], %70 {strides = array<i32>} : memref<16x256xf32, #tpu.memory_space<vmem>>, vector<16x128xf32>,
    %72 = vector.extract_strided_slice %23 {offsets = [0, 128], sizes = [16, 128], strides = [1, 1]} : vector<16x768xf32> to vector<16x128xf32>
    %73 = vector.extract_strided_slice %23 {offsets = [0, 384], sizes = [16, 128], strides = [1, 1]} : vector<16x768xf32> to vector<16x128xf32>
    %74 = vector.extract_strided_slice %23 {offsets = [0, 640], sizes = [16, 128], strides = [1, 1]} : vector<16x768xf32> to vector<16x128xf32>
    %75 = vector.extract_strided_slice %4 {offsets = [0, 128], sizes = [16, 128], strides = [1, 1]} : vector<16x256xf32> to vector<16x128xf32>
    %76 = vector.extract_strided_slice %5 {offsets = [0, 128], sizes = [16, 128], strides = [1, 1]} : vector<16x256xf32> to vector<16x128xf32>
    %77 = arith.mulf %72, %75 : vector<16x128xf32>
    %c64_i32_28 = arith.constant 64 : i32
    %78 = tpu.dynamic_rotate %72 by %c64_i32_28 dim 1 : vector<16x128xf32>, i32 -> vector<16x128xf32>
    %79 = arith.mulf %78, %76 : vector<16x128xf32>
    %80 = arith.addf %77, %79 : vector<16x128xf32>
    %cst_29 = arith.constant 0.0883883461 : f32
    %81 = vector.broadcast %cst_29 : f32 to vector<16x128xf32>
    %82 = arith.mulf %80, %81 : vector<16x128xf32>
    %83 = arith.mulf %73, %75 : vector<16x128xf32>
    %c64_i32_30 = arith.constant 64 : i32
    %84 = tpu.dynamic_rotate %73 by %c64_i32_30 dim 1 : vector<16x128xf32>, i32 -> vector<16x128xf32>
    %85 = arith.mulf %84, %76 : vector<16x128xf32>
    %86 = arith.addf %83, %85 : vector<16x128xf32>
    %87 = vector.shape_cast %82 : vector<16x128xf32> to vector<2x8x128xf32>
    %88 = arith.truncf %87 : vector<2x8x128xf32> to vector<2x8x128xbf16>
    %89 = vector.shape_cast %86 : vector<16x128xf32> to vector<2x8x128xf32>
    %90 = arith.truncf %89 : vector<2x8x128xf32> to vector<2x8x128xbf16>
    "tpu.trace_start"() <{level = 10 : i32, message = "bsd,btd->bst"}> : () -> ()
    %cst_31 = arith.constant dense<0.000000e+00> : vector<2x8x8xf32>
    %91 = tpu.matmul %88, %90, %cst_31 {dimension_numbers = #tpu.dot_dimension_numbers<[2], [2], [1], [1], [0, 0, 0, 1, 1, 1], [0], [0]>} : vector<2x8x128xbf16>, vector<2x8x128xbf16>, vector<2x8x8xf32> -> vector<2x8x8xf32>
    "tpu.trace_stop"() : () -> ()
    %92 = arith.addf %91, %34 : vector<2x8x8xf32>
    %cst_32 = arith.constant dense<0xFF800000> : vector<2x8xf32>
    %93 = vector.multi_reduction <maximumf>, %92, %cst_32 [2] : vector<2x8x8xf32> to vector<2x8xf32>
    %94 = vector.shape_cast %93 : vector<2x8xf32> to vector<2x8x1xf32>
    %95 = vector.broadcast %94 : vector<2x8x1xf32> to vector<2x8x8xf32>
    %96 = arith.subf %92, %95 : vector<2x8x8xf32>
    %97 = math.exp %96 : vector<2x8x8xf32>
    %cst_33 = arith.constant dense<0.000000e+00> : vector<2x8xf32>
    %98 = vector.multi_reduction <add>, %97, %cst_33 [2] : vector<2x8x8xf32> to vector<2x8xf32>
    %99 = vector.shape_cast %98 : vector<2x8xf32> to vector<2x8x1xf32>
    %100 = tpu.reciprocal %99 {approx = true} : vector<2x8x1xf32> -> vector<2x8x1xf32>
    %101 = vector.broadcast %100 : vector<2x8x1xf32> to vector<2x8x8xf32>
    %102 = arith.mulf %97, %101 : vector<2x8x8xf32>
    %103 = arith.truncf %102 : vector<2x8x8xf32> to vector<2x8x8xbf16>
    %104 = vector.shape_cast %74 : vector<16x128xf32> to vector<2x8x128xf32>
    %105 = arith.truncf %104 : vector<2x8x128xf32> to vector<2x8x128xbf16>
    "tpu.trace_start"() <{level = 10 : i32, message = "bst,btd->bsd"}> : () -> ()
    %cst_34 = arith.constant dense<0.000000e+00> : vector<2x8x128xf32>
    %106 = tpu.matmul %103, %105, %cst_34 {dimension_numbers = #tpu.dot_dimension_numbers<[2], [1], [1], [2], [0, 0, 0, 1, 1, 2], [0], [0]>} : vector<2x8x8xbf16>, vector<2x8x128xbf16>, vector<2x8x128xf32> -> vector<2x8x128xf32>
    "tpu.trace_stop"() : () -> ()
    %107 = vector.shape_cast %106 : vector<2x8x128xf32> to vector<16x128xf32>
    %c0_35 = arith.constant 0 : index
    %c128 = arith.constant 128 : index
    %108 = vector.load %arg22[%c0_35, %c128] : memref<16x256xf32, #tpu.memory_space<vmem>>, vector<16x128xf32>
    tpu.vector_store %arg22[%c0_35, %c128], %107 {strides = array<i32>} : memref<16x256xf32, #tpu.memory_space<vmem>>, vector<16x128xf32>,
    %c0_36 = arith.constant 0 : index
    %c0_37 = arith.constant 0 : index
    %109 = vector.load %arg22[%c0_36, %c0_37] : memref<16x256xf32, #tpu.memory_space<vmem>>, vector<16x256xf32>
    %110 = arith.truncf %109 : vector<16x256xf32> to vector<16x256xbf16>
    %c0_38 = arith.constant 0 : index
    %c0_39 = arith.constant 0 : index
    %c0_40 = arith.constant 0 : index
    %111 = vector.load %arg9[%c0_38, %c0_39, %c0_40] : memref<1x256x256xbf16, #tpu.memory_space<vmem>>, vector<1x256x256xbf16>
    %112 = vector.shape_cast %111 : vector<1x256x256xbf16> to vector<256x256xbf16>
    %cst_41 = arith.constant dense<0.000000e+00> : vector<16x256xf32>
    %113 = tpu.matmul %110, %112, %cst_41 {dimension_numbers = #tpu.dot_dimension_numbers<[1], [0], [0], [1], [0, 0, 1, 1], [], []>} : vector<16x256xbf16>, vector<256x256xbf16>, vector<16x256xf32> -> vector<16x256xf32>
    %114 = arith.addf %3, %113 : vector<16x256xf32>
    %c0_42 = arith.constant 0 : index
    %c0_43 = arith.constant 0 : index
    %c0_44 = arith.constant 0 : index
    %115 = vector.load %arg10[%c0_42, %c0_43, %c0_44] : memref<1x1x256xf32, #tpu.memory_space<vmem>>, vector<1x1x256xf32>
    %116 = vector.shape_cast %115 : vector<1x1x256xf32> to vector<1x256xf32>
    %117 = arith.mulf %114, %114 : vector<16x256xf32>
    %cst_45 = arith.constant dense<0.000000e+00> : vector<16xf32>
    %118 = vector.multi_reduction <add>, %117, %cst_45 [1] : vector<16x256xf32> to vector<16xf32>
    %119 = vector.shape_cast %118 : vector<16xf32> to vector<16x1xf32>
    %cst_46 = arith.constant 2.560000e+02 : f32
    %120 = vector.broadcast %cst_46 : f32 to vector<16x1xf32>
    %121 = arith.divf %119, %120 : vector<16x1xf32>
    %cst_47 = arith.constant 9.99999974E-6 : f32
    %122 = vector.broadcast %cst_47 : f32 to vector<16x1xf32>
    %123 = arith.addf %121, %122 : vector<16x1xf32>
    %124 = math.rsqrt %123 : vector<16x1xf32>
    %125 = vector.broadcast %124 : vector<16x1xf32> to vector<16x256xf32>
    %126 = arith.mulf %114, %125 : vector<16x256xf32>
    %127 = vector.broadcast %116 : vector<1x256xf32> to vector<16x256xf32>
    %128 = arith.mulf %126, %127 : vector<16x256xf32>
    %129 = arith.truncf %128 : vector<16x256xf32> to vector<16x256xbf16>
    %c0_48 = arith.constant 0 : index
    %c0_49 = arith.constant 0 : index
    %c0_50 = arith.constant 0 : index
    %130 = vector.load %arg11[%c0_48, %c0_49, %c0_50] : memref<1x256x1024xbf16, #tpu.memory_space<vmem>>, vector<1x256x1024xbf16>
    %131 = vector.shape_cast %130 : vector<1x256x1024xbf16> to vector<256x1024xbf16>
    %cst_51 = arith.constant dense<0.000000e+00> : vector<16x1024xf32>
    %132 = tpu.matmul %129, %131, %cst_51 {dimension_numbers = #tpu.dot_dimension_numbers<[1], [0], [0], [1], [0, 0, 1, 1], [], []>} : vector<16x256xbf16>, vector<256x1024xbf16>, vector<16x1024xf32> -> vector<16x1024xf32>
    %133 = vector.extract_strided_slice %132 {offsets = [0, 0], sizes = [16, 512], strides = [1, 1]} : vector<16x1024xf32> to vector<16x512xf32>
    %134 = arith.negf %133 : vector<16x512xf32>
    %135 = math.exp %134 : vector<16x512xf32>
    %cst_52 = arith.constant 1.000000e+00 : f32
    %136 = vector.broadcast %cst_52 : f32 to vector<16x512xf32>
    %137 = arith.addf %136, %135 : vector<16x512xf32>
    %138 = arith.divf %136, %137 : vector<16x512xf32>
    %139 = arith.mulf %133, %138 : vector<16x512xf32>
    %140 = vector.extract_strided_slice %132 {offsets = [0, 512], sizes = [16, 512], strides = [1, 1]} : vector<16x1024xf32> to vector<16x512xf32>
    %141 = arith.mulf %139, %140 : vector<16x512xf32>
    %142 = arith.truncf %141 : vector<16x512xf32> to vector<16x512xbf16>
    %c0_53 = arith.constant 0 : index
    %c0_54 = arith.constant 0 : index
    %c0_55 = arith.constant 0 : index
    %143 = vector.load %arg12[%c0_53, %c0_54, %c0_55] : memref<1x512x256xbf16, #tpu.memory_space<vmem>>, vector<1x512x256xbf16>
    %144 = vector.shape_cast %143 : vector<1x512x256xbf16> to vector<512x256xbf16>
    %cst_56 = arith.constant dense<0.000000e+00> : vector<16x256xf32>
    %145 = tpu.matmul %142, %144, %cst_56 {dimension_numbers = #tpu.dot_dimension_numbers<[1], [0], [0], [1], [0, 0, 1, 1], [], []>} : vector<16x512xbf16>, vector<512x256xbf16>, vector<16x256xf32> -> vector<16x256xf32>
    %146 = arith.addf %114, %145 : vector<16x256xf32>
    %c0_57 = arith.constant 0 : index
    %c0_58 = arith.constant 0 : index
    %147 = vector.load %arg2[%c0_57, %c0_58] : memref<16x256xf32, #tpu.memory_space<vmem>>, vector<16x256xf32>
    %148 = arith.truncf %146 : vector<16x256xf32> to vector<16x256xbf16>
    %c0_59 = arith.constant 0 : index
    %c0_60 = arith.constant 0 : index
    %c0_61 = arith.constant 0 : index
    %149 = vector.load %arg13[%c0_59, %c0_60, %c0_61] : memref<1x256x256xbf16, #tpu.memory_space<vmem>>, vector<1x256x256xbf16>
    %150 = vector.shape_cast %149 : vector<1x256x256xbf16> to vector<256x256xbf16>
    %cst_62 = arith.constant dense<0.000000e+00> : vector<16x256xf32>
    %151 = tpu.matmul %148, %150, %cst_62 {dimension_numbers = #tpu.dot_dimension_numbers<[1], [0], [0], [1], [0, 0, 1, 1], [], []>} : vector<16x256xbf16>, vector<256x256xbf16>, vector<16x256xf32> -> vector<16x256xf32>
    %c0_63 = arith.constant 0 : index
    %c0_64 = arith.constant 0 : index
    %c0_65 = arith.constant 0 : index
    %152 = vector.load %arg14[%c0_63, %c0_64, %c0_65] : memref<1x1x256xf32, #tpu.memory_space<vmem>>, vector<1x1x256xf32>
    %153 = vector.shape_cast %152 : vector<1x1x256xf32> to vector<1x256xf32>
    %154 = vector.broadcast %153 : vector<1x256xf32> to vector<16x256xf32>
    %155 = arith.addf %151, %154 : vector<16x256xf32>
    %156 = arith.truncf %147 : vector<16x256xf32> to vector<16x256xbf16>
    %c0_66 = arith.constant 0 : index
    %c0_67 = arith.constant 0 : index
    %c0_68 = arith.constant 0 : index
    %157 = vector.load %arg15[%c0_66, %c0_67, %c0_68] : memref<1x256x512xbf16, #tpu.memory_space<vmem>>, vector<1x256x512xbf16>
    %158 = vector.shape_cast %157 : vector<1x256x512xbf16> to vector<256x512xbf16>
    %cst_69 = arith.constant dense<0.000000e+00> : vector<16x512xf32>
    %159 = tpu.matmul %156, %158, %cst_69 {dimension_numbers = #tpu.dot_dimension_numbers<[1], [0], [0], [1], [0, 0, 1, 1], [], []>} : vector<16x256xbf16>, vector<256x512xbf16>, vector<16x512xf32> -> vector<16x512xf32>
    %c0_70 = arith.constant 0 : index
    %c0_71 = arith.constant 0 : index
    %c0_72 = arith.constant 0 : index
    %160 = vector.load %arg16[%c0_70, %c0_71, %c0_72] : memref<1x1x512xf32, #tpu.memory_space<vmem>>, vector<1x1x512xf32>
    %161 = vector.shape_cast %160 : vector<1x1x512xf32> to vector<1x512xf32>
    %162 = vector.broadcast %161 : vector<1x512xf32> to vector<16x512xf32>
    %163 = arith.addf %159, %162 : vector<16x512xf32>
    %164 = vector.extract_strided_slice %155 {offsets = [0, 0], sizes = [16, 128], strides = [1, 1]} : vector<16x256xf32> to vector<16x128xf32>
    %cst_73 = arith.constant 0.0883883461 : f32
    %165 = vector.broadcast %cst_73 : f32 to vector<16x128xf32>
    %166 = arith.mulf %164, %165 : vector<16x128xf32>
    %167 = vector.shape_cast %166 : vector<16x128xf32> to vector<2x8x128xf32>
    %168 = arith.truncf %167 : vector<2x8x128xf32> to vector<2x8x128xbf16>
    %169 = vector.extract_strided_slice %163 {offsets = [0, 0], sizes = [16, 128], strides = [1, 1]} : vector<16x512xf32> to vector<16x128xf32>
    %170 = vector.shape_cast %169 : vector<16x128xf32> to vector<2x8x128xf32>
    %171 = arith.truncf %170 : vector<2x8x128xf32> to vector<2x8x128xbf16>
    %172 = vector.extract_strided_slice %163 {offsets = [0, 256], sizes = [16, 128], strides = [1, 1]} : vector<16x512xf32> to vector<16x128xf32>
    %173 = vector.shape_cast %172 : vector<16x128xf32> to vector<2x8x128xf32>
    %174 = arith.truncf %173 : vector<2x8x128xf32> to vector<2x8x128xbf16>
    "tpu.trace_start"() <{level = 10 : i32, message = "bsd,btd->bst"}> : () -> ()
    %cst_74 = arith.constant dense<0.000000e+00> : vector<2x8x8xf32>
    %175 = tpu.matmul %168, %171, %cst_74 {dimension_numbers = #tpu.dot_dimension_numbers<[2], [2], [1], [1], [0, 0, 0, 1, 1, 1], [0], [0]>} : vector<2x8x128xbf16>, vector<2x8x128xbf16>, vector<2x8x8xf32> -> vector<2x8x8xf32>
    "tpu.trace_stop"() : () -> ()
    %cst_75 = arith.constant dense<0xFF800000> : vector<2x8xf32>
    %176 = vector.multi_reduction <maximumf>, %175, %cst_75 [2] : vector<2x8x8xf32> to vector<2x8xf32>
    %177 = vector.shape_cast %176 : vector<2x8xf32> to vector<2x8x1xf32>
    %178 = vector.broadcast %177 : vector<2x8x1xf32> to vector<2x8x8xf32>
    %179 = arith.subf %175, %178 : vector<2x8x8xf32>
    %180 = math.exp %179 : vector<2x8x8xf32>
    %cst_76 = arith.constant dense<0.000000e+00> : vector<2x8xf32>
    %181 = vector.multi_reduction <add>, %180, %cst_76 [2] : vector<2x8x8xf32> to vector<2x8xf32>
    %182 = vector.shape_cast %181 : vector<2x8xf32> to vector<2x8x1xf32>
    %183 = tpu.reciprocal %182 {approx = true} : vector<2x8x1xf32> -> vector<2x8x1xf32>
    %184 = vector.broadcast %183 : vector<2x8x1xf32> to vector<2x8x8xf32>
    %185 = arith.mulf %180, %184 : vector<2x8x8xf32>
    %186 = arith.truncf %185 : vector<2x8x8xf32> to vector<2x8x8xbf16>
    "tpu.trace_start"() <{level = 10 : i32, message = "bst,btd->bsd"}> : () -> ()
    %cst_77 = arith.constant dense<0.000000e+00> : vector<2x8x128xf32>
    %187 = tpu.matmul %186, %174, %cst_77 {dimension_numbers = #tpu.dot_dimension_numbers<[2], [1], [1], [2], [0, 0, 0, 1, 1, 2], [0], [0]>} : vector<2x8x8xbf16>, vector<2x8x128xbf16>, vector<2x8x128xf32> -> vector<2x8x128xf32>
    "tpu.trace_stop"() : () -> ()
    %188 = vector.shape_cast %187 : vector<2x8x128xf32> to vector<16x128xf32>
    %c0_78 = arith.constant 0 : index
    %c0_79 = arith.constant 0 : index
    %189 = vector.load %arg22[%c0_78, %c0_79] : memref<16x256xf32, #tpu.memory_space<vmem>>, vector<16x128xf32>
    tpu.vector_store %arg22[%c0_78, %c0_79], %188 {strides = array<i32>} : memref<16x256xf32, #tpu.memory_space<vmem>>, vector<16x128xf32>,
    %190 = vector.extract_strided_slice %155 {offsets = [0, 128], sizes = [16, 128], strides = [1, 1]} : vector<16x256xf32> to vector<16x128xf32>
    %cst_80 = arith.constant 0.0883883461 : f32
    %191 = vector.broadcast %cst_80 : f32 to vector<16x128xf32>
    %192 = arith.mulf %190, %191 : vector<16x128xf32>
    %193 = vector.shape_cast %192 : vector<16x128xf32> to vector<2x8x128xf32>
    %194 = arith.truncf %193 : vector<2x8x128xf32> to vector<2x8x128xbf16>
    %195 = vector.extract_strided_slice %163 {offsets = [0, 128], sizes = [16, 128], strides = [1, 1]} : vector<16x512xf32> to vector<16x128xf32>
    %196 = vector.shape_cast %195 : vector<16x128xf32> to vector<2x8x128xf32>
    %197 = arith.truncf %196 : vector<2x8x128xf32> to vector<2x8x128xbf16>
    %198 = vector.extract_strided_slice %163 {offsets = [0, 384], sizes = [16, 128], strides = [1, 1]} : vector<16x512xf32> to vector<16x128xf32>
    %199 = vector.shape_cast %198 : vector<16x128xf32> to vector<2x8x128xf32>
    %200 = arith.truncf %199 : vector<2x8x128xf32> to vector<2x8x128xbf16>
    "tpu.trace_start"() <{level = 10 : i32, message = "bsd,btd->bst"}> : () -> ()
    %cst_81 = arith.constant dense<0.000000e+00> : vector<2x8x8xf32>
    %201 = tpu.matmul %194, %197, %cst_81 {dimension_numbers = #tpu.dot_dimension_numbers<[2], [2], [1], [1], [0, 0, 0, 1, 1, 1], [0], [0]>} : vector<2x8x128xbf16>, vector<2x8x128xbf16>, vector<2x8x8xf32> -> vector<2x8x8xf32>
    "tpu.trace_stop"() : () -> ()
    %cst_82 = arith.constant dense<0xFF800000> : vector<2x8xf32>
    %202 = vector.multi_reduction <maximumf>, %201, %cst_82 [2] : vector<2x8x8xf32> to vector<2x8xf32>
    %203 = vector.shape_cast %202 : vector<2x8xf32> to vector<2x8x1xf32>
    %204 = vector.broadcast %203 : vector<2x8x1xf32> to vector<2x8x8xf32>
    %205 = arith.subf %201, %204 : vector<2x8x8xf32>
    %206 = math.exp %205 : vector<2x8x8xf32>
    %cst_83 = arith.constant dense<0.000000e+00> : vector<2x8xf32>
    %207 = vector.multi_reduction <add>, %206, %cst_83 [2] : vector<2x8x8xf32> to vector<2x8xf32>
    %208 = vector.shape_cast %207 : vector<2x8xf32> to vector<2x8x1xf32>
    %209 = tpu.reciprocal %208 {approx = true} : vector<2x8x1xf32> -> vector<2x8x1xf32>
    %210 = vector.broadcast %209 : vector<2x8x1xf32> to vector<2x8x8xf32>
    %211 = arith.mulf %206, %210 : vector<2x8x8xf32>
    %212 = arith.truncf %211 : vector<2x8x8xf32> to vector<2x8x8xbf16>
    "tpu.trace_start"() <{level = 10 : i32, message = "bst,btd->bsd"}> : () -> ()
    %cst_84 = arith.constant dense<0.000000e+00> : vector<2x8x128xf32>
    %213 = tpu.matmul %212, %200, %cst_84 {dimension_numbers = #tpu.dot_dimension_numbers<[2], [1], [1], [2], [0, 0, 0, 1, 1, 2], [0], [0]>} : vector<2x8x8xbf16>, vector<2x8x128xbf16>, vector<2x8x128xf32> -> vector<2x8x128xf32>
    "tpu.trace_stop"() : () -> ()
    %214 = vector.shape_cast %213 : vector<2x8x128xf32> to vector<16x128xf32>
    %c0_85 = arith.constant 0 : index
    %c128_86 = arith.constant 128 : index
    %215 = vector.load %arg22[%c0_85, %c128_86] : memref<16x256xf32, #tpu.memory_space<vmem>>, vector<16x128xf32>
    tpu.vector_store %arg22[%c0_85, %c128_86], %214 {strides = array<i32>} : memref<16x256xf32, #tpu.memory_space<vmem>>, vector<16x128xf32>,
    %c0_87 = arith.constant 0 : index
    %c0_88 = arith.constant 0 : index
    %216 = vector.load %arg22[%c0_87, %c0_88] : memref<16x256xf32, #tpu.memory_space<vmem>>, vector<16x256xf32>
    %217 = arith.truncf %216 : vector<16x256xf32> to vector<16x256xbf16>
    %c0_89 = arith.constant 0 : index
    %c0_90 = arith.constant 0 : index
    %c0_91 = arith.constant 0 : index
    %218 = vector.load %arg17[%c0_89, %c0_90, %c0_91] : memref<1x256x256xbf16, #tpu.memory_space<vmem>>, vector<1x256x256xbf16>
    %219 = vector.shape_cast %218 : vector<1x256x256xbf16> to vector<256x256xbf16>
    %cst_92 = arith.constant dense<0.000000e+00> : vector<16x256xf32>
    %220 = tpu.matmul %217, %219, %cst_92 {dimension_numbers = #tpu.dot_dimension_numbers<[1], [0], [0], [1], [0, 0, 1, 1], [], []>} : vector<16x256xbf16>, vector<256x256xbf16>, vector<16x256xf32> -> vector<16x256xf32>
    %c0_93 = arith.constant 0 : index
    %c0_94 = arith.constant 0 : index
    %c0_95 = arith.constant 0 : index
    %221 = vector.load %arg18[%c0_93, %c0_94, %c0_95] : memref<1x1x256xf32, #tpu.memory_space<vmem>>, vector<1x1x256xf32>
    %222 = vector.shape_cast %221 : vector<1x1x256xf32> to vector<1x256xf32>
    %223 = vector.broadcast %222 : vector<1x256xf32> to vector<16x256xf32>
    %224 = arith.addf %220, %223 : vector<16x256xf32>
    %225 = arith.addf %146, %224 : vector<16x256xf32>
    %c0_96 = arith.constant 0 : index
    %c0_97 = arith.constant 0 : index
    %c0_98 = arith.constant 0 : index
    %226 = vector.load %arg19[%c0_96, %c0_97, %c0_98] : memref<1x1x256xf32, #tpu.memory_space<vmem>>, vector<1x1x256xf32>
    %227 = vector.shape_cast %226 : vector<1x1x256xf32> to vector<1x256xf32>
    %c0_99 = arith.constant 0 : index
    %c0_100 = arith.constant 0 : index
    %c0_101 = arith.constant 0 : index
    %228 = vector.load %arg20[%c0_99, %c0_100, %c0_101] : memref<1x1x256xf32, #tpu.memory_space<vmem>>, vector<1x1x256xf32>
    %229 = vector.shape_cast %228 : vector<1x1x256xf32> to vector<1x256xf32>
    %cst_102 = arith.constant dense<0.000000e+00> : vector<16xf32>
    %230 = vector.multi_reduction <add>, %225, %cst_102 [1] : vector<16x256xf32> to vector<16xf32>
    %231 = vector.shape_cast %230 : vector<16xf32> to vector<16x1xf32>
    %cst_103 = arith.constant 2.560000e+02 : f32
    %232 = vector.broadcast %cst_103 : f32 to vector<16x1xf32>
    %233 = arith.divf %231, %232 : vector<16x1xf32>
    %234 = vector.broadcast %233 : vector<16x1xf32> to vector<16x256xf32>
    %235 = arith.subf %225, %234 : vector<16x256xf32>
    %236 = arith.mulf %235, %235 : vector<16x256xf32>
    %cst_104 = arith.constant dense<0.000000e+00> : vector<16xf32>
    %237 = vector.multi_reduction <add>, %236, %cst_104 [1] : vector<16x256xf32> to vector<16xf32>
    %238 = vector.shape_cast %237 : vector<16xf32> to vector<16x1xf32>
    %cst_105 = arith.constant 2.560000e+02 : f32
    %239 = vector.broadcast %cst_105 : f32 to vector<16x1xf32>
    %240 = arith.divf %238, %239 : vector<16x1xf32>
    %241 = vector.broadcast %233 : vector<16x1xf32> to vector<16x256xf32>
    %242 = arith.subf %225, %241 : vector<16x256xf32>
    %cst_106 = arith.constant 9.99999974E-6 : f32
    %243 = vector.broadcast %cst_106 : f32 to vector<16x1xf32>
    %244 = arith.addf %240, %243 : vector<16x1xf32>
    %245 = math.rsqrt %244 : vector<16x1xf32>
    %246 = vector.broadcast %245 : vector<16x1xf32> to vector<16x256xf32>
    %247 = arith.mulf %242, %246 : vector<16x256xf32>
    %248 = vector.broadcast %227 : vector<1x256xf32> to vector<16x256xf32>
    %249 = arith.mulf %247, %248 : vector<16x256xf32>
    %250 = vector.broadcast %229 : vector<1x256xf32> to vector<16x256xf32>
    %251 = arith.addf %249, %250 : vector<16x256xf32>
    %c0_107 = arith.constant 0 : index
    %c0_108 = arith.constant 0 : index
    %252 = vector.load %arg21[%c0_107, %c0_108] : memref<16x256xf32, #tpu.memory_space<vmem>>, vector<16x256xf32>
    tpu.vector_store %arg21[%c0_107, %c0_108], %251 {strides = array<i32>} : memref<16x256xf32, #tpu.memory_space<vmem>>, vector<16x256xf32>,
    %c1_i32 = arith.constant 1 : i32
    %253 = arith.cmpi eq, %arg0, %c1_i32 : i32
    %254 = arith.extui %253 : i1 to i32
    %c0_i32_109 = arith.constant 0 : i32
    %255 = arith.cmpi ne, %254, %c0_i32_109 : i32
    scf.if %255 {
      %c0_110 = arith.constant 0 : index
      %c0_111 = arith.constant 0 : index
      %256 = vector.load %arg6[%c0_110, %c0_111] : memref<1x256xf32, #tpu.memory_space<vmem>>, vector<1x256xf32>
      %257 = vector.shape_cast %256 : vector<1x256xf32> to vector<256xf32>
      %258 = arith.mulf %251, %251 : vector<16x256xf32>
      %cst_112 = arith.constant dense<0.000000e+00> : vector<16xf32>
      %259 = vector.multi_reduction <add>, %258, %cst_112 [1] : vector<16x256xf32> to vector<16xf32>
      %260 = vector.shape_cast %259 : vector<16xf32> to vector<16x1xf32>
      %cst_113 = arith.constant 2.560000e+02 : f32
      %261 = vector.broadcast %cst_113 : f32 to vector<16x1xf32>
      %262 = arith.divf %260, %261 : vector<16x1xf32>
      %cst_114 = arith.constant 9.99999974E-6 : f32
      %263 = vector.broadcast %cst_114 : f32 to vector<16x1xf32>
      %264 = arith.addf %262, %263 : vector<16x1xf32>
      %265 = math.rsqrt %264 : vector<16x1xf32>
      %266 = vector.broadcast %265 : vector<16x1xf32> to vector<16x256xf32>
      %267 = arith.mulf %251, %266 : vector<16x256xf32>
      %268 = vector.shape_cast %257 : vector<256xf32> to vector<1x256xf32>
      %269 = vector.broadcast %268 : vector<1x256xf32> to vector<16x256xf32>
      %270 = arith.mulf %267, %269 : vector<16x256xf32>
      %c0_115 = arith.constant 0 : index
      %c0_116 = arith.constant 0 : index
      %271 = vector.load %arg21[%c0_115, %c0_116] : memref<16x256xf32, #tpu.memory_space<vmem>>, vector<16x256xf32>
      tpu.vector_store %arg21[%c0_115, %c0_116], %270 {strides = array<i32>} : memref<16x256xf32, #tpu.memory_space<vmem>>, vector<16x256xf32>,
    } else {
    }
    return
  }
  func.func @transform_0(%arg0: i32) -> (i32, i32) {
    %c0_i32 = arith.constant 0 : i32
    %c0_i32_0 = arith.constant 0 : i32
    %c0_i32_1 = arith.constant 0 : i32
    return %c0_i32, %c0_i32_0 : i32, i32
  }
  func.func @transform_1(%arg0: i32) -> (i32, i32) {
    %c0_i32 = arith.constant 0 : i32
    %c0_i32_0 = arith.constant 0 : i32
    %c0_i32_1 = arith.constant 0 : i32
    return %c0_i32, %c0_i32_0 : i32, i32
  }
  func.func @transform_2(%arg0: i32) -> (i32, i32, i32) {
    %c0_i32 = arith.constant 0 : i32
    %c0_i32_0 = arith.constant 0 : i32
    %c0_i32_1 = arith.constant 0 : i32
    %c0_i32_2 = arith.constant 0 : i32
    return %c0_i32, %c0_i32_0, %c0_i32_1 : i32, i32, i32
  }
  func.func @transform_3(%arg0: i32) -> (i32, i32) {
    %c0_i32 = arith.constant 0 : i32
    %c0_i32_0 = arith.constant 0 : i32
    %c0_i32_1 = arith.constant 0 : i32
    return %c0_i32, %c0_i32_0 : i32, i32
  }
  func.func @transform_4(%arg0: i32) -> (i32, i32) {
    %c0_i32 = arith.constant 0 : i32
    %c0_i32_0 = arith.constant 0 : i32
    %c0_i32_1 = arith.constant 0 : i32
    return %c0_i32, %c0_i32_0 : i32, i32
  }
  func.func @transform_5(%arg0: i32) -> (i32, i32) {
    %c0_i32 = arith.constant 0 : i32
    %c0_i32_0 = arith.constant 0 : i32
    %c0_i32_1 = arith.constant 0 : i32
    return %c0_i32, %c0_i32_0 : i32, i32
  }
  func.func @transform_6(%arg0: i32) -> (i32, i32, i32) {
    %c0_i32 = arith.constant 0 : i32
    %c0_i32_0 = arith.constant 0 : i32
    %c0_i32_1 = arith.constant 0 : i32
    return %arg0, %c0_i32, %c0_i32_0 : i32, i32, i32
  }
  func.func @transform_7(%arg0: i32) -> (i32, i32, i32) {
    %c0_i32 = arith.constant 0 : i32
    %c0_i32_0 = arith.constant 0 : i32
    %c0_i32_1 = arith.constant 0 : i32
    return %arg0, %c0_i32, %c0_i32_0 : i32, i32, i32
  }
  func.func @transform_8(%arg0: i32) -> (i32, i32, i32) {
    %c0_i32 = arith.constant 0 : i32
    %c0_i32_0 = arith.constant 0 : i32
    %c0_i32_1 = arith.constant 0 : i32
    return %arg0, %c0_i32, %c0_i32_0 : i32, i32, i32
  }
  func.func @transform_9(%arg0: i32) -> (i32, i32, i32) {
    %c0_i32 = arith.constant 0 : i32
    %c0_i32_0 = arith.constant 0 : i32
    %c0_i32_1 = arith.constant 0 : i32
    return %arg0, %c0_i32, %c0_i32_0 : i32, i32, i32
  }
  func.func @transform_10(%arg0: i32) -> (i32, i32, i32) {
    %c0_i32 = arith.constant 0 : i32
    %c0_i32_0 = arith.constant 0 : i32
    %c0_i32_1 = arith.constant 0 : i32
    return %arg0, %c0_i32, %c0_i32_0 : i32, i32, i32
  }
  func.func @transform_11(%arg0: i32) -> (i32, i32, i32) {
    %c0_i32 = arith.constant 0 : i32
    %c0_i32_0 = arith.constant 0 : i32
    %c0_i32_1 = arith.constant 0 : i32
    return %arg0, %c0_i32, %c0_i32_0 : i32, i32, i32
  }
  func.func @transform_12(%arg0: i32) -> (i32, i32, i32) {
    %c0_i32 = arith.constant 0 : i32
    %c0_i32_0 = arith.constant 0 : i32
    %c0_i32_1 = arith.constant 0 : i32
    return %arg0, %c0_i32, %c0_i32_0 : i32, i32, i32
  }
  func.func @transform_13(%arg0: i32) -> (i32, i32, i32) {
    %c0_i32 = arith.constant 0 : i32
    %c0_i32_0 = arith.constant 0 : i32
    %c0_i32_1 = arith.constant 0 : i32
    return %arg0, %c0_i32, %c0_i32_0 : i32, i32, i32
  }
  func.func @transform_14(%arg0: i32) -> (i32, i32, i32) {
    %c0_i32 = arith.constant 0 : i32
    %c0_i32_0 = arith.constant 0 : i32
    %c0_i32_1 = arith.constant 0 : i32
    return %arg0, %c0_i32, %c0_i32_0 : i32, i32, i32
  }
  func.func @transform_15(%arg0: i32) -> (i32, i32, i32) {
    %c0_i32 = arith.constant 0 : i32
    %c0_i32_0 = arith.constant 0 : i32
    %c0_i32_1 = arith.constant 0 : i32
    return %arg0, %c0_i32, %c0_i32_0 : i32, i32, i32
  }
  func.func @transform_16(%arg0: i32) -> (i32, i32, i32) {
    %c0_i32 = arith.constant 0 : i32
    %c0_i32_0 = arith.constant 0 : i32
    %c0_i32_1 = arith.constant 0 : i32
    return %arg0, %c0_i32, %c0_i32_0 : i32, i32, i32
  }
  func.func @transform_17(%arg0: i32) -> (i32, i32, i32) {
    %c0_i32 = arith.constant 0 : i32
    %c0_i32_0 = arith.constant 0 : i32
    %c0_i32_1 = arith.constant 0 : i32
    return %arg0, %c0_i32, %c0_i32_0 : i32, i32, i32
  }
  func.func @transform_18(%arg0: i32) -> (i32, i32, i32) {
    %c0_i32 = arith.constant 0 : i32
    %c0_i32_0 = arith.constant 0 : i32
    %c0_i32_1 = arith.constant 0 : i32
    return %arg0, %c0_i32, %c0_i32_0 : i32, i32, i32
  }
  func.func @transform_19(%arg0: i32) -> (i32, i32, i32) {
    %c0_i32 = arith.constant 0 : i32
    %c0_i32_0 = arith.constant 0 : i32
    %c0_i32_1 = arith.constant 0 : i32
    return %arg0, %c0_i32, %c0_i32_0 : i32, i32, i32
  }
  func.func @transform_20(%arg0: i32) -> (i32, i32) {
    %c0_i32 = arith.constant 0 : i32
    %c0_i32_0 = arith.constant 0 : i32
    %c0_i32_1 = arith.constant 0 : i32
    return %c0_i32, %c0_i32_0 : i32, i32
  }
}

module attributes {stable_mosaic.version = 11 : i64} {
  func.func @lm_head_kernel(%arg0: i32, %arg1: i32, %arg2: memref<16x256xf32, #tpu.memory_space<vmem>>, %arg3: memref<256x256xbf16, #tpu.memory_space<vmem>>, %arg4: memref<16x256xf32, #tpu.memory_space<vmem>>) attributes {dimension_semantics = [#tpu.dimension_semantics<parallel>, #tpu.dimension_semantics<parallel>], iteration_bounds = array<i64: 1, 1>, scalar_prefetch = 0 : i64, scratch_operands = 0 : i64, tpu.core_type = #tpu.core_type<tc>, window_params = [{transform_indices = @transform_0, window_bounds = array<i64: 16, 256>}, {transform_indices = @transform_1, window_bounds = array<i64: 256, 256>}, {transform_indices = @transform_2, window_bounds = array<i64: 16, 256>}]} {
    %c0 = arith.constant 0 : index
    %c0_0 = arith.constant 0 : index
    %0 = vector.load %arg2[%c0, %c0_0] : memref<16x256xf32, #tpu.memory_space<vmem>>, vector<16x256xf32>
    %1 = arith.truncf %0 : vector<16x256xf32> to vector<16x256xbf16>
    %c0_1 = arith.constant 0 : index
    %c0_2 = arith.constant 0 : index
    %2 = vector.load %arg3[%c0_1, %c0_2] : memref<256x256xbf16, #tpu.memory_space<vmem>>, vector<256x256xbf16>
    %cst = arith.constant dense<0.000000e+00> : vector<16x256xf32>
    %3 = tpu.matmul %1, %2, %cst {dimension_numbers = #tpu.dot_dimension_numbers<[1], [0], [0], [1], [0, 0, 1, 1], [], []>} : vector<16x256xbf16>, vector<256x256xbf16>, vector<16x256xf32> -> vector<16x256xf32>
    %c0_3 = arith.constant 0 : index
    %c0_4 = arith.constant 0 : index
    %4 = vector.load %arg4[%c0_3, %c0_4] : memref<16x256xf32, #tpu.memory_space<vmem>>, vector<16x256xf32>
    tpu.vector_store %arg4[%c0_3, %c0_4], %3 {strides = array<i32>} : memref<16x256xf32, #tpu.memory_space<vmem>>, vector<16x256xf32>,
    return
  }
  func.func @transform_0(%arg0: i32, %arg1: i32) -> (i32, i32) {
    %c0_i32 = arith.constant 0 : i32
    %c0_i32_0 = arith.constant 0 : i32
    return %arg0, %c0_i32 : i32, i32
  }
  func.func @transform_1(%arg0: i32, %arg1: i32) -> (i32, i32) {
    %c0_i32 = arith.constant 0 : i32
    %c0_i32_0 = arith.constant 0 : i32
    return %c0_i32, %arg1 : i32, i32
  }
  func.func @transform_2(%arg0: i32, %arg1: i32) -> (i32, i32) {
    %c0_i32 = arith.constant 0 : i32
    return %arg0, %arg1 : i32, i32
  }
}

</mosaic_0001>

<llo_original>
// kernel: forward.3
$region0: #{forward.3}
  #allocation0 [shape = 'u32[]', space=smem, size = 0x4, offset = 0x4, fixed_abs, tag = 'smem constant byte address 0x4 - core index']
  #allocation1 [shape = 'u32[144,128]{1,0:T(1,128)}', space=vmem, size = 0x12000, scoped, tag = 'internal scratch']
  %s0 = inlined_call_operand.vmem [shape: f32[16,64], index: 0, kind: input, shape index: {}]
  %s1 = inlined_call_operand.hbm [shape: bf16[64,256], index: 1, kind: input, shape index: {}]
  %s2 = inlined_call_operand.hbm [shape: f32[1,256], index: 2, kind: input, shape index: {}]
  %s3 = inlined_call_operand.vmem [shape: f32[16,256], index: 3, kind: output, shape index: {}]
  %s4 = sld [smem:[#allocation0]]
  $region30: #{forward.3} parent=0
    _
  %s6 = ssub.s32 1, %s4
  %s7 = scalar_select 0, %s6, %s4
  $region1: #{forward.3} parent=0
    #allocation2 [shape = 'u8[32768]{0}', space=vmem, size = 0x8000, scoped, tag = 'input window, operand 1, single buffered']
    #allocation3 [shape = 's32[1]{0}', space=sflag, size = 0x4, scoped, tag = 'scoped memory for forward.3']
    #allocation4 [shape = 'u8[1024]{0}', space=vmem, size = 0x400, scoped, tag = 'input window, operand 2, single buffered']
    #allocation5 [shape = 's32[1]{0}', space=sflag, size = 0x4, scoped, tag = 'scoped memory for forward.3']
    %8 = vsyncpa [#allocation3], 0
    %9 = vsyncpa [#allocation5], 0
    // Predicated region
    $region2: #{forward.3} parent=1 // pred_check
      _
    $region3: #{forward.3} parent=1 // pred_check_branch
      %11 = sbr.rel (0) target = $region5
    $region4: #{forward.3} parent=1 // pred_region
      _
    $region5: #{forward.3} parent=1 // pred_fallthru
      _
    // Predicated region
    $region6: #{forward.3} parent=1 // pred_check
      _
    $region7: #{forward.3} parent=1 // pred_check_branch
      %13 = sbr.rel (0) target = $region9
    $region8: #{forward.3} parent=1 // pred_region
      %s15 = ssub.s32 1024, 1024
      %16 = vsyncadd [#allocation3], %s15
      %s17 = sshll.u32 [#allocation2], 4
      %s18 = int_to_ptr.vmem [resolvable:$true] %s17
      %23 = dma.hbm_to_vmem [thread:$0]  %s1, 1024, %s18, [#allocation3], 128, 128, 8
    $region9: #{forward.3} parent=1 // pred_fallthru
      _
    // Predicated region
    $region10: #{forward.3} parent=1 // pred_check
      _
    $region11: #{forward.3} parent=1 // pred_check_branch
      %25 = sbr.rel (0) target = $region13
    $region12: #{forward.3} parent=1 // pred_region
      %s27 = ssub.s32 32, 32
      %28 = vsyncadd [#allocation5], %s27
      %s30 = sshll.u32 [#allocation4], 4
      %s31 = int_to_ptr.vmem [resolvable:$true] %s30
      %33 = dma.hbm_to_vmem [thread:$0]  %s2, 32, %s31, [#allocation5]
    $region13: #{forward.3} parent=1 // pred_fallthru
      _
    // Predicated region
    $region14: #{forward.3} parent=1 // pred_check
      _
    $region15: #{forward.3} parent=1 // pred_check_branch
      %35 = sbr.rel (0) target = $region17
    $region16: #{forward.3} parent=1 // pred_region
      %36 = dma.done [#allocation3], 1024
    $region17: #{forward.3} parent=1 // pred_fallthru
      _
    // Predicated region
    $region18: #{forward.3} parent=1 // pred_check
      _
    $region19: #{forward.3} parent=1 // pred_check_branch
      %38 = sbr.rel (0) target = $region21
    $region20: #{forward.3} parent=1 // pred_region
      %39 = dma.done [#allocation5], 32
    $region21: #{forward.3} parent=1 // pred_fallthru
      _
    %v41 = vld [vmem:[%s0] sm:$0xff]
    %v42 = vld [vmem:[%s0 + $0x8] sm:$0xff]
    %v43 = vpack.c.bf16 %v42, %v41
    %v44 = vld [vmem:[#allocation2] sm:$0xff]
    %v45 = vld [vmem:[#allocation2 + $0x8] sm:$0xff]
    %v46 = vld [vmem:[#allocation2 + $0x10] sm:$0xff]
    %v47 = vld [vmem:[#allocation2 + $0x18] sm:$0xff]
    %v48 = vld [vmem:[#allocation2 + $0x20] sm:$0xff]
    %v49 = vld [vmem:[#allocation2 + $0x28] sm:$0xff]
    %v50 = vld [vmem:[#allocation2 + $0x30] sm:$0xff]
    %v51 = vld [vmem:[#allocation2 + $0x38] sm:$0xff]
    %v52 = vld [vmem:[#allocation4] sm:$0x3]
    %v54 = vlaneseq
    %v55 = vshrl.u32 %v54, 7
    %v56 = vsub.s32 0, %v55
    %v57 = vrot.slane %v52, %v56
    %v58 = vlaneseq
    %v59 = vshrl.u32 %v58, 7
    %v60 = vsub.s32 1, %v59
    %v61 = vrot.slane %v52, %v60
    %v72 = vunpack.c.l.b16 %v44
    %v73 = vunpack.c.h.b16 %v44
    %v74 = vunpack.c.l.b16 %v45
    %v75 = vunpack.c.h.b16 %v45
    %v76 = vunpack.c.l.b16 %v46
    %v77 = vunpack.c.h.b16 %v46
    %v78 = vunpack.c.l.b16 %v47
    %v79 = vunpack.c.h.b16 %v47
    %v80 = vunpack.c.l.b16 %v48
    %v81 = vunpack.c.h.b16 %v48
    %v82 = vunpack.c.l.b16 %v49
    %v83 = vunpack.c.h.b16 %v49
    %v84 = vunpack.c.l.b16 %v50
    %v85 = vunpack.c.h.b16 %v50
    %v86 = vunpack.c.l.b16 %v51
    %v87 = vunpack.c.h.b16 %v51
    %v88 = vpack.c.b16 %v74, %v72
    %v89 = vpack.c.b16 %v75, %v73
    %v90 = vpack.c.b16 %v78, %v76
    %v91 = vpack.c.b16 %v79, %v77
    %v92 = vpack.c.b16 %v82, %v80
    %v93 = vpack.c.b16 %v83, %v81
    %v94 = vpack.c.b16 %v86, %v84
    %v95 = vpack.c.b16 %v87, %v85
    %vm104 = vcmask 523264
    %v106 = vsel %vm104, %v43, 0
    %108 = vmatprep.subr.bf16.mxu0 0
    %109 = vmatpush1.bf16.msra.mxu0 0
    %110 = vmatprep.subr.bf16.mxu0 0
    %111 = vmatpush1.bf16.msra.mxu0 0
    %112 = vmatprep.subr.bf16.mxu0 0
    %113 = vmatpush1.bf16.msra.mxu0 0
    %114 = vmatprep.subr.bf16.mxu0 0
    %115 = vmatpush1.bf16.msra.mxu0 0
    %116 = vmatprep.subr.bf16.mxu0 %v95
    %117 = vmatpush1.bf16.msra.mxu0 %v94
    %118 = vmatprep.subr.bf16.mxu0 %v93
    %119 = vmatpush1.bf16.msra.mxu0 %v92
    %120 = vmatprep.subr.bf16.mxu0 %v91
    %121 = vmatpush1.bf16.msra.mxu0 %v90
    %122 = vmatprep.subr.bf16.mxu0 %v89
    %123 = vmatpush1.bf16.msra.mxu0 %v88
    %124 = vmatprep.subr.bf16.mxu0 0
    %125 = vmatpush2.bf16.msra.mxu0 0
    %126 = vmatprep.subr.bf16.mxu0 0
    %127 = vmatpush2.bf16.msra.mxu0 0
    %128 = vmatprep.subr.bf16.mxu0 0
    %129 = vmatpush2.bf16.msra.mxu0 0
    %130 = vmatprep.subr.bf16.mxu0 0
    %131 = vmatpush2.bf16.msra.mxu0 0
    %132 = vmatprep.subr.bf16.mxu0 0
    %133 = vmatpush2.bf16.msra.mxu0 0
    %134 = vmatprep.subr.bf16.mxu0 0
    %135 = vmatpush2.bf16.msra.mxu0 0
    %136 = vmatprep.subr.bf16.mxu0 0
    %137 = vmatpush2.bf16.msra.mxu0 0
    %138 = vmatprep.subr.bf16.mxu0 0
    %139 = vmatpush2.bf16.msra.mxu0 0
    %140 = vmatprep.mubr.bf16.mxu0 0
    %141 = vmatmul.mubr.bf16.gmra.mxu0 %v106
    %v142 = vpop.f32.mrf.mxu0
    %v143 = vadd.f32 %v57, %v142
    %v144 = vpop.f32.mrf.mxu0
    %v145 = vadd.f32 %v61, %v144
    %v146 = vpop.f32.mrf.mxu0
    %v147 = vadd.f32 %v57, %v146
    %v148 = vpop.f32.mrf.mxu0
    %v149 = vadd.f32 %v61, %v148
    %150 = vdwg.mxu0
    %151 = vst [vmem:[%s3] sm:$0xff] %v143
    %152 = vst [vmem:[%s3 + $0x8] sm:$0xff] %v145
    %153 = vst [vmem:[%s3 + $0x10] sm:$0xff] %v147
    %154 = vst [vmem:[%s3 + $0x18] sm:$0xff] %v149
    // Predicated region
    $region22: #{forward.3} parent=1 // pred_check
      _
    $region23: #{forward.3} parent=1 // pred_check_branch
      %156 = sbr.rel (0) target = $region25
    $region24: #{forward.3} parent=1 // pred_region
      _
    $region25: #{forward.3} parent=1 // pred_fallthru
      _
    // Predicated region
    $region26: #{forward.3} parent=1 // pred_check
      _
    $region27: #{forward.3} parent=1 // pred_check_branch
      %158 = sbr.rel (0) target = $region29
    $region28: #{forward.3} parent=1 // pred_region
      _
    $region29: #{forward.3} parent=1 // pred_fallthru
      _
    %159 = vsyncpa [#allocation3], 1
    %160 = vsyncpa [#allocation5], 1

// kernel: forward.5
$region0: #{forward.5}
  #allocation0 [shape = 'u32[]', space=smem, size = 0x4, offset = 0x4, fixed_abs, tag = 'smem constant byte address 0x4 - core index']
  #allocation1 [shape = 'u32[144,128]{1,0:T(1,128)}', space=vmem, size = 0x12000, scoped, tag = 'internal scratch']
  %s0 = inlined_call_operand.vmem [shape: f32[16,256], index: 0, kind: input, shape index: {}]
  %s1 = inlined_call_operand.vmem [shape: bf16[256,256], index: 1, kind: input, shape index: {}]
  %s2 = inlined_call_operand.hbm [shape: f32[16,256], index: 2, kind: output, shape index: {}]
  %s3 = sld [smem:[#allocation0]]
  $region18: #{forward.5} parent=0
    _
  %s5 = ssub.s32 1, %s3
  %s6 = scalar_select 0, %s5, %s3
  $region1: #{forward.5} parent=0
    #allocation2 [shape = 'u8[16384]{0}', space=vmem, size = 0x4000, scoped, tag = 'output window, operand 0, single buffered']
    #allocation3 [shape = 's32[1]{0}', space=sflag, size = 0x4, scoped, tag = 'scoped memory for forward.5']
    %7 = vsyncpa [#allocation3], 0
    // Predicated region
    $region2: #{forward.5} parent=1 // pred_check
      _
    $region3: #{forward.5} parent=1 // pred_check_branch
      %9 = sbr.rel (0) target = $region5
    $region4: #{forward.5} parent=1 // pred_region
      _
    $region5: #{forward.5} parent=1 // pred_fallthru
      _
    // Predicated region
    $region6: #{forward.5} parent=1 // pred_check
      _
    $region7: #{forward.5} parent=1 // pred_check_branch
      %11 = sbr.rel (0) target = $region9
    $region8: #{forward.5} parent=1 // pred_region
      _
    $region9: #{forward.5} parent=1 // pred_fallthru
      _
    %v12 = vld [vmem:[%s0] sm:$0xff]
    %v13 = vld [vmem:[%s0 + $0x8] sm:$0xff]
    %v14 = vld [vmem:[%s0 + $0x10] sm:$0xff]
    %v15 = vld [vmem:[%s0 + $0x18] sm:$0xff]
    %v16 = vpack.c.bf16 %v14, %v12
    %v17 = vpack.c.bf16 %v15, %v13
    %v18 = vld [vmem:[%s1] sm:$0xff]
    %v19 = vld [vmem:[%s1 + $0x8] sm:$0xff]
    %v20 = vld [vmem:[%s1 + $0x10] sm:$0xff]
    %v21 = vld [vmem:[%s1 + $0x18] sm:$0xff]
    %v22 = vld [vmem:[%s1 + $0x20] sm:$0xff]
    %v23 = vld [vmem:[%s1 + $0x28] sm:$0xff]
    %v24 = vld [vmem:[%s1 + $0x30] sm:$0xff]
    %v25 = vld [vmem:[%s1 + $0x38] sm:$0xff]
    %v26 = vld [vmem:[%s1 + $0x40] sm:$0xff]
    %v27 = vld [vmem:[%s1 + $0x48] sm:$0xff]
    %v28 = vld [vmem:[%s1 + $0x50] sm:$0xff]
    %v29 = vld [vmem:[%s1 + $0x58] sm:$0xff]
    %v30 = vld [vmem:[%s1 + $0x60] sm:$0xff]
    %v31 = vld [vmem:[%s1 + $0x68] sm:$0xff]
    %v32 = vld [vmem:[%s1 + $0x70] sm:$0xff]
    %v33 = vld [vmem:[%s1 + $0x78] sm:$0xff]
    %v34 = vld [vmem:[%s1 + $0x80] sm:$0xff]
    %v35 = vld [vmem:[%s1 + $0x88] sm:$0xff]
    %v36 = vld [vmem:[%s1 + $0x90] sm:$0xff]
    %v37 = vld [vmem:[%s1 + $0x98] sm:$0xff]
    %v38 = vld [vmem:[%s1 + $0xa0] sm:$0xff]
    %v39 = vld [vmem:[%s1 + $0xa8] sm:$0xff]
    %v40 = vld [vmem:[%s1 + $0xb0] sm:$0xff]
    %v41 = vld [vmem:[%s1 + $0xb8] sm:$0xff]
    %v42 = vld [vmem:[%s1 + $0xc0] sm:$0xff]
    %v43 = vld [vmem:[%s1 + $0xc8] sm:$0xff]
    %v44 = vld [vmem:[%s1 + $0xd0] sm:$0xff]
    %v45 = vld [vmem:[%s1 + $0xd8] sm:$0xff]
    %v46 = vld [vmem:[%s1 + $0xe0] sm:$0xff]
    %v47 = vld [vmem:[%s1 + $0xe8] sm:$0xff]
    %v48 = vld [vmem:[%s1 + $0xf0] sm:$0xff]
    %v49 = vld [vmem:[%s1 + $0xf8] sm:$0xff]
    %v82 = vunpack.c.l.b16 %v18
    %v83 = vunpack.c.h.b16 %v18
    %v84 = vunpack.c.l.b16 %v19
    %v85 = vunpack.c.h.b16 %v19
    %v86 = vunpack.c.l.b16 %v20
    %v87 = vunpack.c.h.b16 %v20
    %v88 = vunpack.c.l.b16 %v21
    %v89 = vunpack.c.h.b16 %v21
    %v90 = vunpack.c.l.b16 %v22
    %v91 = vunpack.c.h.b16 %v22
    %v92 = vunpack.c.l.b16 %v23
    %v93 = vunpack.c.h.b16 %v23
    %v94 = vunpack.c.l.b16 %v24
    %v95 = vunpack.c.h.b16 %v24
    %v96 = vunpack.c.l.b16 %v25
    %v97 = vunpack.c.h.b16 %v25
    %v98 = vunpack.c.l.b16 %v26
    %v99 = vunpack.c.h.b16 %v26
    %v100 = vunpack.c.l.b16 %v27
    %v101 = vunpack.c.h.b16 %v27
    %v102 = vunpack.c.l.b16 %v28
    %v103 = vunpack.c.h.b16 %v28
    %v104 = vunpack.c.l.b16 %v29
    %v105 = vunpack.c.h.b16 %v29
    %v106 = vunpack.c.l.b16 %v30
    %v107 = vunpack.c.h.b16 %v30
    %v108 = vunpack.c.l.b16 %v31
    %v109 = vunpack.c.h.b16 %v31
    %v110 = vunpack.c.l.b16 %v32
    %v111 = vunpack.c.h.b16 %v32
    %v112 = vunpack.c.l.b16 %v33
    %v113 = vunpack.c.h.b16 %v33
    %v114 = vunpack.c.l.b16 %v34
    %v115 = vunpack.c.h.b16 %v34
    %v116 = vunpack.c.l.b16 %v35
    %v117 = vunpack.c.h.b16 %v35
    %v118 = vunpack.c.l.b16 %v36
    %v119 = vunpack.c.h.b16 %v36
    %v120 = vunpack.c.l.b16 %v37
    %v121 = vunpack.c.h.b16 %v37
    %v122 = vunpack.c.l.b16 %v38
    %v123 = vunpack.c.h.b16 %v38
    %v124 = vunpack.c.l.b16 %v39
    %v125 = vunpack.c.h.b16 %v39
    %v126 = vunpack.c.l.b16 %v40
    %v127 = vunpack.c.h.b16 %v40
    %v128 = vunpack.c.l.b16 %v41
    %v129 = vunpack.c.h.b16 %v41
    %v130 = vunpack.c.l.b16 %v42
    %v131 = vunpack.c.h.b16 %v42
    %v132 = vunpack.c.l.b16 %v43
    %v133 = vunpack.c.h.b16 %v43
    %v134 = vunpack.c.l.b16 %v44
    %v135 = vunpack.c.h.b16 %v44
    %v136 = vunpack.c.l.b16 %v45
    %v137 = vunpack.c.h.b16 %v45
    %v138 = vunpack.c.l.b16 %v46
    %v139 = vunpack.c.h.b16 %v46
    %v140 = vunpack.c.l.b16 %v47
    %v141 = vunpack.c.h.b16 %v47
    %v142 = vunpack.c.l.b16 %v48
    %v143 = vunpack.c.h.b16 %v48
    %v144 = vunpack.c.l.b16 %v49
    %v145 = vunpack.c.h.b16 %v49
    %v146 = vpack.c.b16 %v84, %v82
    %v147 = vpack.c.b16 %v85, %v83
    %v148 = vpack.c.b16 %v88, %v86
    %v149 = vpack.c.b16 %v89, %v87
    %v150 = vpack.c.b16 %v92, %v90
    %v151 = vpack.c.b16 %v93, %v91
    %v152 = vpack.c.b16 %v96, %v94
    %v153 = vpack.c.b16 %v97, %v95
    %v154 = vpack.c.b16 %v100, %v98
    %v155 = vpack.c.b16 %v101, %v99
    %v156 = vpack.c.b16 %v104, %v102
    %v157 = vpack.c.b16 %v105, %v103
    %v158 = vpack.c.b16 %v108, %v106
    %v159 = vpack.c.b16 %v109, %v107
    %v160 = vpack.c.b16 %v112, %v110
    %v161 = vpack.c.b16 %v113, %v111
    %v162 = vpack.c.b16 %v116, %v114
    %v163 = vpack.c.b16 %v117, %v115
    %v164 = vpack.c.b16 %v120, %v118
    %v165 = vpack.c.b16 %v121, %v119
    %v166 = vpack.c.b16 %v124, %v122
    %v167 = vpack.c.b16 %v125, %v123
    %v168 = vpack.c.b16 %v128, %v126
    %v169 = vpack.c.b16 %v129, %v127
    %v170 = vpack.c.b16 %v132, %v130
    %v171 = vpack.c.b16 %v133, %v131
    %v172 = vpack.c.b16 %v136, %v134
    %v173 = vpack.c.b16 %v137, %v135
    %v174 = vpack.c.b16 %v140, %v138
    %v175 = vpack.c.b16 %v141, %v139
    %v176 = vpack.c.b16 %v144, %v142
    %v177 = vpack.c.b16 %v145, %v143
    %210 = vmatprep.subr.bf16.mxu0 %v161
    %211 = vmatpush1.bf16.msra.mxu0 %v160
    %212 = vmatprep.subr.bf16.mxu0 %v159
    %213 = vmatpush1.bf16.msra.mxu0 %v158
    %214 = vmatprep.subr.bf16.mxu0 %v157
    %215 = vmatpush1.bf16.msra.mxu0 %v156
    %216 = vmatprep.subr.bf16.mxu0 %v155
    %217 = vmatpush1.bf16.msra.mxu0 %v154
    %218 = vmatprep.subr.bf16.mxu0 %v153
    %219 = vmatpush1.bf16.msra.mxu0 %v152
    %220 = vmatprep.subr.bf16.mxu0 %v151
    %221 = vmatpush1.bf16.msra.mxu0 %v150
    %222 = vmatprep.subr.bf16.mxu0 %v149
    %223 = vmatpush1.bf16.msra.mxu0 %v148
    %224 = vmatprep.subr.bf16.mxu0 %v147
    %225 = vmatpush1.bf16.msra.mxu0 %v146
    %226 = vmatprep.subr.bf16.mxu0 %v177
    %227 = vmatpush2.bf16.msra.mxu0 %v176
    %228 = vmatprep.subr.bf16.mxu0 %v175
    %229 = vmatpush2.bf16.msra.mxu0 %v174
    %230 = vmatprep.subr.bf16.mxu0 %v173
    %231 = vmatpush2.bf16.msra.mxu0 %v172
    %232 = vmatprep.subr.bf16.mxu0 %v171
    %233 = vmatpush2.bf16.msra.mxu0 %v170
    %234 = vmatprep.subr.bf16.mxu0 %v169
    %235 = vmatpush2.bf16.msra.mxu0 %v168
    %236 = vmatprep.subr.bf16.mxu0 %v167
    %237 = vmatpush2.bf16.msra.mxu0 %v166
    %238 = vmatprep.subr.bf16.mxu0 %v165
    %239 = vmatpush2.bf16.msra.mxu0 %v164
    %240 = vmatprep.subr.bf16.mxu0 %v163
    %241 = vmatpush2.bf16.msra.mxu0 %v162
    %242 = vmatprep.mubr.bf16.mxu0 %v17
    %243 = vmatmul.mubr.bf16.gmra.mxu0 %v16
    %v244 = vpop.f32.mrf.mxu0
    %v245 = vadd.f32 0.0, %v244
    %v246 = vpop.f32.mrf.mxu0
    %v247 = vadd.f32 0.0, %v246
    %v248 = vpop.f32.mrf.mxu0
    %v249 = vadd.f32 0.0, %v248
    %v250 = vpop.f32.mrf.mxu0
    %v251 = vadd.f32 0.0, %v250
    %252 = vdwg.mxu0
    %253 = vst [vmem:[#allocation2] sm:$0xff] %v245
    %254 = vst [vmem:[#allocation2 + $0x8] sm:$0xff] %v247
    %255 = vst [vmem:[#allocation2 + $0x10] sm:$0xff] %v249
    %256 = vst [vmem:[#allocation2 + $0x18] sm:$0xff] %v251
    // Predicated region
    $region10: #{forward.5} parent=1 // pred_check
      _
    $region11: #{forward.5} parent=1 // pred_check_branch
      %258 = sbr.rel (0) target = $region13
    $region12: #{forward.5} parent=1 // pred_region
      %s260 = ssub.s32 512, 512
      %261 = vsyncadd [#allocation3], %s260
      %s262 = sshll.u32 [#allocation2], 4
      %s263 = int_to_ptr.vmem [resolvable:$true] %s262
      %268 = dma.vmem_to_hbm [thread:$0]  %s263, 512, %s2, [#allocation3], 256, 256, 16
    $region13: #{forward.5} parent=1 // pred_fallthru
      _
    // Predicated region
    $region14: #{forward.5} parent=1 // pred_check
      _
    $region15: #{forward.5} parent=1 // pred_check_branch
      %270 = sbr.rel (0) target = $region17
    $region16: #{forward.5} parent=1 // pred_region
      %271 = dma.done [#allocation3], 512
    $region17: #{forward.5} parent=1 // pred_fallthru
      _
    %272 = vsyncpa [#allocation3], 1

// kernel: forward.4
$region0: #{forward.4}
  #allocation0 [shape = 'u32[]', space=smem, size = 0x4, offset = 0x4, fixed_abs, tag = 'smem constant byte address 0x4 - core index']
  #allocation1 [shape = 'u32[144,128]{1,0:T(1,128)}', space=vmem, size = 0x12000, scoped, tag = 'internal scratch']
  #allocation2 [shape = 'f32[16,256]{1,0:T(8,128)}', space=vmem, size = 0x4000, scoped, tag = 'scratch operand']
  %s0 = inlined_call_operand.vmem [shape: f32[16,256], index: 0, kind: input, shape index: {}]
  %s1 = inlined_call_operand.vmem [shape: f32[16,256], index: 1, kind: input, shape index: {}]
  %s2 = inlined_call_operand.vmem [shape: f32[2,1,8], index: 2, kind: input, shape index: {}]
  %s3 = inlined_call_operand.vmem [shape: f32[16,256], index: 3, kind: input, shape index: {}]
  %s4 = inlined_call_operand.vmem [shape: f32[16,256], index: 4, kind: input, shape index: {}]
  %s5 = inlined_call_operand.vmem [shape: f32[1,256], index: 5, kind: input, shape index: {}]
  %s6 = inlined_call_operand.vmem [shape: f32[2,1,256], index: 6, kind: input, shape index: {}]
  %s7 = inlined_call_operand.hbm [shape: bf16[2,256,768], index: 7, kind: input, shape index: {}]
  %s8 = inlined_call_operand.vmem [shape: bf16[2,256,256], index: 8, kind: input, shape index: {}]
  %s9 = inlined_call_operand.vmem [shape: f32[2,1,256], index: 9, kind: input, shape index: {}]
  %s10 = inlined_call_operand.hbm [shape: bf16[2,256,1024], index: 10, kind: input, shape index: {}]
  %s11 = inlined_call_operand.hbm [shape: bf16[2,512,256], index: 11, kind: input, shape index: {}]
  %s12 = inlined_call_operand.hbm [shape: bf16[2,256,256], index: 12, kind: input, shape index: {}]
  %s13 = inlined_call_operand.vmem [shape: f32[2,1,256], index: 13, kind: input, shape index: {}]
  %s14 = inlined_call_operand.hbm [shape: bf16[2,256,512], index: 14, kind: input, shape index: {}]
  %s15 = inlined_call_operand.vmem [shape: f32[2,1,512], index: 15, kind: input, shape index: {}]
  %s16 = inlined_call_operand.hbm [shape: bf16[2,256,256], index: 16, kind: input, shape index: {}]
  %s17 = inlined_call_operand.vmem [shape: f32[2,1,256], index: 17, kind: input, shape index: {}]
  %s18 = inlined_call_operand.vmem [shape: f32[2,1,256], index: 18, kind: input, shape index: {}]
  %s19 = inlined_call_operand.vmem [shape: f32[2,1,256], index: 19, kind: input, shape index: {}]
  %s20 = inlined_call_operand.vmem [shape: f32[16,256], index: 20, kind: output, shape index: {}]
  %s21 = sld [smem:[#allocation0]]
  $region145: #{forward.4} parent=0
    _
  %s23 = ssub.s32 1, %s21
  %s24 = scalar_select 0, %s23, %s21
  $region1: #{forward.4} parent=0
    #allocation3 [shape = 'u8[786432]{0}', space=vmem, size = 0xc0000, scoped, tag = 'input window, operand 7']
    #allocation4 [shape = 's32[2]{0}', space=sflag, size = 0x8, scoped, tag = 'scoped memory for forward.4']
    #allocation5 [shape = 'u8[1048576]{0}', space=vmem, size = 0x100000, scoped, tag = 'input window, operand 10']
    #allocation6 [shape = 's32[2]{0}', space=sflag, size = 0x8, scoped, tag = 'scoped memory for forward.4']
    #allocation7 [shape = 'u8[524288]{0}', space=vmem, size = 0x80000, scoped, tag = 'input window, operand 11']
    #allocation8 [shape = 'u8[262144]{0}', space=vmem, size = 0x40000, scoped, tag = 'input window, operand 12']
    #allocation9 [shape = 's32[2]{0}', space=sflag, size = 0x8, scoped, tag = 'scoped memory for forward.4']
    #allocation10 [shape = 'u8[524288]{0}', space=vmem, size = 0x80000, scoped, tag = 'input window, operand 14']
    #allocation11 [shape = 'u8[262144]{0}', space=vmem, size = 0x40000, scoped, tag = 'input window, operand 16']
    #allocation12 [shape = 's32[2]{0}', space=sflag, size = 0x8, scoped, tag = 'scoped memory for forward.4']
    %25 = vsyncpa [#allocation4], 0
    %s26 = scalar_lea.sflag [#allocation4], 1
    %27 = vsyncpa %s26, 0
    %28 = vsyncpa [#allocation6], 0
    %s29 = scalar_lea.sflag [#allocation6], 1
    %30 = vsyncpa %s29, 0
    %31 = vsyncpa [#allocation9], 0
    %s32 = scalar_lea.sflag [#allocation9], 1
    %33 = vsyncpa %s32, 0
    %34 = vsyncpa [#allocation12], 0
    %s35 = scalar_lea.sflag [#allocation12], 1
    %36 = vsyncpa %s35, 0
    loop: start=0, step=1, limit=4
    $region2: #{forward.4} parent=1 // loop_pre_header
      _
    $region3: #{forward.4} parent=1 // loop_header
      %s38 = sphi 0, %s42
      %p39 = scmp.ge.s32.totalorder %s38, 4
      %s46 = sphi 0, %s46
      %s48 = sphi 0, %s46
      %s49 = sphi 0, %s48
      %s63 = sphi 0, %s49
      %s67 = sphi 0, %s67
      %s69 = sphi 0, %s67
      %s70 = sphi 0, %s69
      %s84 = sphi 0, %s70
      %s88 = sphi 0, %s88
      %s90 = sphi 0, %s88
      %s91 = sphi 0, %s90
      %s105 = sphi 0, %s91
      %s109 = sphi 0, %s109
      %s111 = sphi 0, %s109
      %s112 = sphi 0, %s111
      %s126 = sphi 0, %s112
      %s130 = sphi 0, %s130
      %s132 = sphi 0, %s130
      %s133 = sphi 0, %s132
      %s147 = sphi 0, %s133
      %s151 = sphi 0, %s151
      %s153 = sphi 0, %s151
      %s154 = sphi 0, %s153
      %s168 = sphi 0, %s154
      %s174 = sphi 0, %s176
      %s177 = sphi 0, %s174
      %s178 = sphi 0, %s177
      %s194 = sphi 0, %s178
      %s200 = sphi 0, %s202
      %s203 = sphi 0, %s200
      %s204 = sphi 0, %s203
      %s220 = sphi 0, %s204
      %s226 = sphi 0, %s228
      %s229 = sphi 0, %s226
      %s230 = sphi 0, %s229
      %s246 = sphi 0, %s230
      %s252 = sphi 0, %s254
      %s255 = sphi 0, %s252
      %s256 = sphi 0, %s255
      %s272 = sphi 0, %s256
      %s278 = sphi 0, %s280
      %s281 = sphi 0, %s278
      %s282 = sphi 0, %s281
      %s298 = sphi 0, %s282
      %s304 = sphi 0, %s306
      %s307 = sphi 0, %s304
      %s308 = sphi 0, %s307
      %s324 = sphi 0, %s308
      %s330 = sphi 0, %s332
      %s333 = sphi 0, %s330
      %s334 = sphi 0, %s333
      %s350 = sphi 0, %s334
      %s356 = sphi 0, %s358
      %s359 = sphi 0, %s356
      %s360 = sphi 0, %s359
      %s376 = sphi 0, %s360
      %s382 = sphi 0, %s384
      %s385 = sphi 0, %s382
      %s386 = sphi 0, %s385
      %s402 = sphi 0, %s386
      %s408 = sphi 0, %s410
      %s411 = sphi 0, %s408
      %s412 = sphi 0, %s411
      %s428 = sphi 0, %s412
      %s434 = sphi 0, %s436
      %s437 = sphi 0, %s434
      %s438 = sphi 0, %s437
      %s454 = sphi 0, %s438
      %s460 = sphi 0, %s462
      %s463 = sphi 0, %s460
      %s464 = sphi 0, %s463
      %s480 = sphi 0, %s464
      %s486 = sphi 0, %s488
      %s489 = sphi 0, %s486
      %s490 = sphi 0, %s489
      %s506 = sphi 0, %s490
      %s512 = sphi 0, %s514
      %s515 = sphi 0, %s512
      %s516 = sphi 0, %s515
      %s532 = sphi 0, %s516
      %s536 = sphi 0, %s536
      %s538 = sphi 0, %s536
      %s539 = sphi 0, %s538
      %s553 = sphi 0, %s539
    $region4: #{forward.4} parent=1 // loop_header_branch
      %41 = sbr.rel (%p39) target = $region8
    $region5: #{forward.4} parent=1 // loop_body
      %s43 = ssub.s32 %s38, 1
      %s44 = ssub.s32 %s38, 2
      %s45 = sadd.s32 %s38, 1
      %s47 = sadd.s32 %s46, 1
      %p50 = scmp.eq.s32.totalorder %s38, 1
      %p51 = scmp.ne.s32.totalorder %s46, %s48
      %p52 = scmp.eq.s32.totalorder %s38, 0
      %p53 = por %p51, %p52
      %p54 = scmp.ne.s32.totalorder %s46, %s48
      %p55 = scmp.eq.s32.totalorder %s43, 1
      %p56 = por %p54, %p55
      %p57 = scmp.ne.s32.totalorder %s48, %s49
      %p58 = scmp.eq.s32.totalorder %s43, 0
      %p59 = por %p57, %p58
      %p60 = scmp.ne.s32.totalorder %s48, %s49
      %p61 = scmp.eq.s32.totalorder %s44, 1
      %p62 = por %p60, %p61
      %p64 = scmp.ne.s32.totalorder %s49, %s63
      %p65 = scmp.eq.s32.totalorder %s44, 0
      %p66 = por %p64, %p65
      %s68 = sadd.s32 %s67, 1
      %p71 = scmp.eq.s32.totalorder %s38, 1
      %p72 = scmp.ne.s32.totalorder %s67, %s69
      %p73 = scmp.eq.s32.totalorder %s38, 0
      %p74 = por %p72, %p73
      %p75 = scmp.ne.s32.totalorder %s67, %s69
      %p76 = scmp.eq.s32.totalorder %s43, 1
      %p77 = por %p75, %p76
      %p78 = scmp.ne.s32.totalorder %s69, %s70
      %p79 = scmp.eq.s32.totalorder %s43, 0
      %p80 = por %p78, %p79
      %p81 = scmp.ne.s32.totalorder %s69, %s70
      %p82 = scmp.eq.s32.totalorder %s44, 1
      %p83 = por %p81, %p82
      %p85 = scmp.ne.s32.totalorder %s70, %s84
      %p86 = scmp.eq.s32.totalorder %s44, 0
      %p87 = por %p85, %p86
      %s89 = sadd.s32 %s88, 1
      %p92 = scmp.eq.s32.totalorder %s38, 1
      %p93 = scmp.ne.s32.totalorder %s88, %s90
      %p94 = scmp.eq.s32.totalorder %s38, 0
      %p95 = por %p93, %p94
      %p96 = scmp.ne.s32.totalorder %s88, %s90
      %p97 = scmp.eq.s32.totalorder %s43, 1
      %p98 = por %p96, %p97
      %p99 = scmp.ne.s32.totalorder %s90, %s91
      %p100 = scmp.eq.s32.totalorder %s43, 0
      %p101 = por %p99, %p100
      %p102 = scmp.ne.s32.totalorder %s90, %s91
      %p103 = scmp.eq.s32.totalorder %s44, 1
      %p104 = por %p102, %p103
      %p106 = scmp.ne.s32.totalorder %s91, %s105
      %p107 = scmp.eq.s32.totalorder %s44, 0
      %p108 = por %p106, %p107
      %s110 = sadd.s32 %s109, 1
      %p113 = scmp.eq.s32.totalorder %s38, 1
      %p114 = scmp.ne.s32.totalorder %s109, %s111
      %p115 = scmp.eq.s32.totalorder %s38, 0
      %p116 = por %p114, %p115
      %p117 = scmp.ne.s32.totalorder %s109, %s111
      %p118 = scmp.eq.s32.totalorder %s43, 1
      %p119 = por %p117, %p118
      %p120 = scmp.ne.s32.totalorder %s111, %s112
      %p121 = scmp.eq.s32.totalorder %s43, 0
      %p122 = por %p120, %p121
      %p123 = scmp.ne.s32.totalorder %s111, %s112
      %p124 = scmp.eq.s32.totalorder %s44, 1
      %p125 = por %p123, %p124
      %p127 = scmp.ne.s32.totalorder %s112, %s126
      %p128 = scmp.eq.s32.totalorder %s44, 0
      %p129 = por %p127, %p128
      %s131 = sadd.s32 %s130, 1
      %p134 = scmp.eq.s32.totalorder %s38, 1
      %p135 = scmp.ne.s32.totalorder %s130, %s132
      %p136 = scmp.eq.s32.totalorder %s38, 0
      %p137 = por %p135, %p136
      %p138 = scmp.ne.s32.totalorder %s130, %s132
      %p139 = scmp.eq.s32.totalorder %s43, 1
      %p140 = por %p138, %p139
      %p141 = scmp.ne.s32.totalorder %s132, %s133
      %p142 = scmp.eq.s32.totalorder %s43, 0
      %p143 = por %p141, %p142
      %p144 = scmp.ne.s32.totalorder %s132, %s133
      %p145 = scmp.eq.s32.totalorder %s44, 1
      %p146 = por %p144, %p145
      %p148 = scmp.ne.s32.totalorder %s133, %s147
      %p149 = scmp.eq.s32.totalorder %s44, 0
      %p150 = por %p148, %p149
      %s152 = sadd.s32 %s151, 1
      %p155 = scmp.eq.s32.totalorder %s38, 1
      %p156 = scmp.ne.s32.totalorder %s151, %s153
      %p157 = scmp.eq.s32.totalorder %s38, 0
      %p158 = por %p156, %p157
      %p159 = scmp.ne.s32.totalorder %s151, %s153
      %p160 = scmp.eq.s32.totalorder %s43, 1
      %p161 = por %p159, %p160
      %p162 = scmp.ne.s32.totalorder %s153, %s154
      %p163 = scmp.eq.s32.totalorder %s43, 0
      %p164 = por %p162, %p163
      %p165 = scmp.ne.s32.totalorder %s153, %s154
      %p166 = scmp.eq.s32.totalorder %s44, 1
      %p167 = por %p165, %p166
      %p169 = scmp.ne.s32.totalorder %s154, %s168
      %p170 = scmp.eq.s32.totalorder %s44, 0
      %p171 = por %p169, %p170
      %s172 = ssub.s32 %s38, %s45
      %p173 = scmp.eq.s32.totalorder %s172, 0
      %s175 = sadd.s32 %s174, 1
      %s176 = scalar_select %p173, %s174, %s175
      %p179 = pneg %p173
      %p180 = scmp.eq.s32.totalorder %s38, 1
      %p181 = por %p179, %p180
      %p182 = scmp.ne.s32.totalorder %s174, %s177
      %p183 = scmp.eq.s32.totalorder %s38, 0
      %p184 = por %p182, %p183
      %p185 = scmp.ne.s32.totalorder %s174, %s177
      %p186 = scmp.eq.s32.totalorder %s43, 1
      %p187 = por %p185, %p186
      %p188 = scmp.ne.s32.totalorder %s177, %s178
      %p189 = scmp.eq.s32.totalorder %s43, 0
      %p190 = por %p188, %p189
      %p191 = scmp.ne.s32.totalorder %s177, %s178
      %p192 = scmp.eq.s32.totalorder %s44, 1
      %p193 = por %p191, %p192
      %p195 = scmp.ne.s32.totalorder %s178, %s194
      %p196 = scmp.eq.s32.totalorder %s44, 0
      %p197 = por %p195, %p196
      %s198 = ssub.s32 %s38, %s45
      %p199 = scmp.eq.s32.totalorder %s198, 0
      %s201 = sadd.s32 %s200, 1
      %s202 = scalar_select %p199, %s200, %s201
      %p205 = pneg %p199
      %p206 = scmp.eq.s32.totalorder %s38, 1
      %p207 = por %p205, %p206
      %p208 = scmp.ne.s32.totalorder %s200, %s203
      %p209 = scmp.eq.s32.totalorder %s38, 0
      %p210 = por %p208, %p209
      %p211 = scmp.ne.s32.totalorder %s200, %s203
      %p212 = scmp.eq.s32.totalorder %s43, 1
      %p213 = por %p211, %p212
      %p214 = scmp.ne.s32.totalorder %s203, %s204
      %p215 = scmp.eq.s32.totalorder %s43, 0
      %p216 = por %p214, %p215
      %p217 = scmp.ne.s32.totalorder %s203, %s204
      %p218 = scmp.eq.s32.totalorder %s44, 1
      %p219 = por %p217, %p218
      %p221 = scmp.ne.s32.totalorder %s204, %s220
      %p222 = scmp.eq.s32.totalorder %s44, 0
      %p223 = por %p221, %p222
      %s224 = ssub.s32 %s38, %s45
      %p225 = scmp.eq.s32.totalorder %s224, 0
      %s227 = sadd.s32 %s226, 1
      %s228 = scalar_select %p225, %s226, %s227
      %p231 = pneg %p225
      %p232 = scmp.eq.s32.totalorder %s38, 1
      %p233 = por %p231, %p232
      %p234 = scmp.ne.s32.totalorder %s226, %s229
      %p235 = scmp.eq.s32.totalorder %s38, 0
      %p236 = por %p234, %p235
      %p237 = scmp.ne.s32.totalorder %s226, %s229
      %p238 = scmp.eq.s32.totalorder %s43, 1
      %p239 = por %p237, %p238
      %p240 = scmp.ne.s32.totalorder %s229, %s230
      %p241 = scmp.eq.s32.totalorder %s43, 0
      %p242 = por %p240, %p241
      %p243 = scmp.ne.s32.totalorder %s229, %s230
      %p244 = scmp.eq.s32.totalorder %s44, 1
      %p245 = por %p243, %p244
      %p247 = scmp.ne.s32.totalorder %s230, %s246
      %p248 = scmp.eq.s32.totalorder %s44, 0
      %p249 = por %p247, %p248
      %s250 = ssub.s32 %s38, %s45
      %p251 = scmp.eq.s32.totalorder %s250, 0
      %s253 = sadd.s32 %s252, 1
      %s254 = scalar_select %p251, %s252, %s253
      %p257 = pneg %p251
      %p258 = scmp.eq.s32.totalorder %s38, 1
      %p259 = por %p257, %p258
      %p260 = scmp.ne.s32.totalorder %s252, %s255
      %p261 = scmp.eq.s32.totalorder %s38, 0
      %p262 = por %p260, %p261
      %p263 = scmp.ne.s32.totalorder %s252, %s255
      %p264 = scmp.eq.s32.totalorder %s43, 1
      %p265 = por %p263, %p264
      %p266 = scmp.ne.s32.totalorder %s255, %s256
      %p267 = scmp.eq.s32.totalorder %s43, 0
      %p268 = por %p266, %p267
      %p269 = scmp.ne.s32.totalorder %s255, %s256
      %p270 = scmp.eq.s32.totalorder %s44, 1
      %p271 = por %p269, %p270
      %p273 = scmp.ne.s32.totalorder %s256, %s272
      %p274 = scmp.eq.s32.totalorder %s44, 0
      %p275 = por %p273, %p274
      %s276 = ssub.s32 %s38, %s45
      %p277 = scmp.eq.s32.totalorder %s276, 0
      %s279 = sadd.s32 %s278, 1
      %s280 = scalar_select %p277, %s278, %s279
      %p283 = pneg %p277
      %p284 = scmp.eq.s32.totalorder %s38, 1
      %p285 = por %p283, %p284
      %p286 = scmp.ne.s32.totalorder %s278, %s281
      %p287 = scmp.eq.s32.totalorder %s38, 0
      %p288 = por %p286, %p287
      %p289 = scmp.ne.s32.totalorder %s278, %s281
      %p290 = scmp.eq.s32.totalorder %s43, 1
      %p291 = por %p289, %p290
      %p292 = scmp.ne.s32.totalorder %s281, %s282
      %p293 = scmp.eq.s32.totalorder %s43, 0
      %p294 = por %p292, %p293
      %p295 = scmp.ne.s32.totalorder %s281, %s282
      %p296 = scmp.eq.s32.totalorder %s44, 1
      %p297 = por %p295, %p296
      %p299 = scmp.ne.s32.totalorder %s282, %s298
      %p300 = scmp.eq.s32.totalorder %s44, 0
      %p301 = por %p299, %p300
      %s302 = ssub.s32 %s38, %s45
      %p303 = scmp.eq.s32.totalorder %s302, 0
      %s305 = sadd.s32 %s304, 1
      %s306 = scalar_select %p303, %s304, %s305
      %p309 = pneg %p303
      %p310 = scmp.eq.s32.totalorder %s38, 1
      %p311 = por %p309, %p310
      %p312 = scmp.ne.s32.totalorder %s304, %s307
      %p313 = scmp.eq.s32.totalorder %s38, 0
      %p314 = por %p312, %p313
      %p315 = scmp.ne.s32.totalorder %s304, %s307
      %p316 = scmp.eq.s32.totalorder %s43, 1
      %p317 = por %p315, %p316
      %p318 = scmp.ne.s32.totalorder %s307, %s308
      %p319 = scmp.eq.s32.totalorder %s43, 0
      %p320 = por %p318, %p319
      %p321 = scmp.ne.s32.totalorder %s307, %s308
      %p322 = scmp.eq.s32.totalorder %s44, 1
      %p323 = por %p321, %p322
      %p325 = scmp.ne.s32.totalorder %s308, %s324
      %p326 = scmp.eq.s32.totalorder %s44, 0
      %p327 = por %p325, %p326
      %s328 = ssub.s32 %s38, %s45
      %p329 = scmp.eq.s32.totalorder %s328, 0
      %s331 = sadd.s32 %s330, 1
      %s332 = scalar_select %p329, %s330, %s331
      %p335 = pneg %p329
      %p336 = scmp.eq.s32.totalorder %s38, 1
      %p337 = por %p335, %p336
      %p338 = scmp.ne.s32.totalorder %s330, %s333
      %p339 = scmp.eq.s32.totalorder %s38, 0
      %p340 = por %p338, %p339
      %p341 = scmp.ne.s32.totalorder %s330, %s333
      %p342 = scmp.eq.s32.totalorder %s43, 1
      %p343 = por %p341, %p342
      %p344 = scmp.ne.s32.totalorder %s333, %s334
      %p345 = scmp.eq.s32.totalorder %s43, 0
      %p346 = por %p344, %p345
      %p347 = scmp.ne.s32.totalorder %s333, %s334
      %p348 = scmp.eq.s32.totalorder %s44, 1
      %p349 = por %p347, %p348
      %p351 = scmp.ne.s32.totalorder %s334, %s350
      %p352 = scmp.eq.s32.totalorder %s44, 0
      %p353 = por %p351, %p352
      %s354 = ssub.s32 %s38, %s45
      %p355 = scmp.eq.s32.totalorder %s354, 0
      %s357 = sadd.s32 %s356, 1
      %s358 = scalar_select %p355, %s356, %s357
      %p361 = pneg %p355
      %p362 = scmp.eq.s32.totalorder %s38, 1
      %p363 = por %p361, %p362
      %p364 = scmp.ne.s32.totalorder %s356, %s359
      %p365 = scmp.eq.s32.totalorder %s38, 0
      %p366 = por %p364, %p365
      %p367 = scmp.ne.s32.totalorder %s356, %s359
      %p368 = scmp.eq.s32.totalorder %s43, 1
      %p369 = por %p367, %p368
      %p370 = scmp.ne.s32.totalorder %s359, %s360
      %p371 = scmp.eq.s32.totalorder %s43, 0
      %p372 = por %p370, %p371
      %p373 = scmp.ne.s32.totalorder %s359, %s360
      %p374 = scmp.eq.s32.totalorder %s44, 1
      %p375 = por %p373, %p374
      %p377 = scmp.ne.s32.totalorder %s360, %s376
      %p378 = scmp.eq.s32.totalorder %s44, 0
      %p379 = por %p377, %p378
      %s380 = ssub.s32 %s38, %s45
      %p381 = scmp.eq.s32.totalorder %s380, 0
      %s383 = sadd.s32 %s382, 1
      %s384 = scalar_select %p381, %s382, %s383
      %p387 = pneg %p381
      %p388 = scmp.eq.s32.totalorder %s38, 1
      %p389 = por %p387, %p388
      %p390 = scmp.ne.s32.totalorder %s382, %s385
      %p391 = scmp.eq.s32.totalorder %s38, 0
      %p392 = por %p390, %p391
      %p393 = scmp.ne.s32.totalorder %s382, %s385
      %p394 = scmp.eq.s32.totalorder %s43, 1
      %p395 = por %p393, %p394
      %p396 = scmp.ne.s32.totalorder %s385, %s386
      %p397 = scmp.eq.s32.totalorder %s43, 0
      %p398 = por %p396, %p397
      %p399 = scmp.ne.s32.totalorder %s385, %s386
      %p400 = scmp.eq.s32.totalorder %s44, 1
      %p401 = por %p399, %p400
      %p403 = scmp.ne.s32.totalorder %s386, %s402
      %p404 = scmp.eq.s32.totalorder %s44, 0
      %p405 = por %p403, %p404
      %s406 = ssub.s32 %s38, %s45
      %p407 = scmp.eq.s32.totalorder %s406, 0
      %s409 = sadd.s32 %s408, 1
      %s410 = scalar_select %p407, %s408, %s409
      %p413 = pneg %p407
      %p414 = scmp.eq.s32.totalorder %s38, 1
      %p415 = por %p413, %p414
      %p416 = scmp.ne.s32.totalorder %s408, %s411
      %p417 = scmp.eq.s32.totalorder %s38, 0
      %p418 = por %p416, %p417
      %p419 = scmp.ne.s32.totalorder %s408, %s411
      %p420 = scmp.eq.s32.totalorder %s43, 1
      %p421 = por %p419, %p420
      %p422 = scmp.ne.s32.totalorder %s411, %s412
      %p423 = scmp.eq.s32.totalorder %s43, 0
      %p424 = por %p422, %p423
      %p425 = scmp.ne.s32.totalorder %s411, %s412
      %p426 = scmp.eq.s32.totalorder %s44, 1
      %p427 = por %p425, %p426
      %p429 = scmp.ne.s32.totalorder %s412, %s428
      %p430 = scmp.eq.s32.totalorder %s44, 0
      %p431 = por %p429, %p430
      %s432 = ssub.s32 %s38, %s45
      %p433 = scmp.eq.s32.totalorder %s432, 0
      %s435 = sadd.s32 %s434, 1
      %s436 = scalar_select %p433, %s434, %s435
      %p439 = pneg %p433
      %p440 = scmp.eq.s32.totalorder %s38, 1
      %p441 = por %p439, %p440
      %p442 = scmp.ne.s32.totalorder %s434, %s437
      %p443 = scmp.eq.s32.totalorder %s38, 0
      %p444 = por %p442, %p443
      %p445 = scmp.ne.s32.totalorder %s434, %s437
      %p446 = scmp.eq.s32.totalorder %s43, 1
      %p447 = por %p445, %p446
      %p448 = scmp.ne.s32.totalorder %s437, %s438
      %p449 = scmp.eq.s32.totalorder %s43, 0
      %p450 = por %p448, %p449
      %p451 = scmp.ne.s32.totalorder %s437, %s438
      %p452 = scmp.eq.s32.totalorder %s44, 1
      %p453 = por %p451, %p452
      %p455 = scmp.ne.s32.totalorder %s438, %s454
      %p456 = scmp.eq.s32.totalorder %s44, 0
      %p457 = por %p455, %p456
      %s458 = ssub.s32 %s38, %s45
      %p459 = scmp.eq.s32.totalorder %s458, 0
      %s461 = sadd.s32 %s460, 1
      %s462 = scalar_select %p459, %s460, %s461
      %p465 = pneg %p459
      %p466 = scmp.eq.s32.totalorder %s38, 1
      %p467 = por %p465, %p466
      %p468 = scmp.ne.s32.totalorder %s460, %s463
      %p469 = scmp.eq.s32.totalorder %s38, 0
      %p470 = por %p468, %p469
      %p471 = scmp.ne.s32.totalorder %s460, %s463
      %p472 = scmp.eq.s32.totalorder %s43, 1
      %p473 = por %p471, %p472
      %p474 = scmp.ne.s32.totalorder %s463, %s464
      %p475 = scmp.eq.s32.totalorder %s43, 0
      %p476 = por %p474, %p475
      %p477 = scmp.ne.s32.totalorder %s463, %s464
      %p478 = scmp.eq.s32.totalorder %s44, 1
      %p479 = por %p477, %p478
      %p481 = scmp.ne.s32.totalorder %s464, %s480
      %p482 = scmp.eq.s32.totalorder %s44, 0
      %p483 = por %p481, %p482
      %s484 = ssub.s32 %s38, %s45
      %p485 = scmp.eq.s32.totalorder %s484, 0
      %s487 = sadd.s32 %s486, 1
      %s488 = scalar_select %p485, %s486, %s487
      %p491 = pneg %p485
      %p492 = scmp.eq.s32.totalorder %s38, 1
      %p493 = por %p491, %p492
      %p494 = scmp.ne.s32.totalorder %s486, %s489
      %p495 = scmp.eq.s32.totalorder %s38, 0
      %p496 = por %p494, %p495
      %p497 = scmp.ne.s32.totalorder %s486, %s489
      %p498 = scmp.eq.s32.totalorder %s43, 1
      %p499 = por %p497, %p498
      %p500 = scmp.ne.s32.totalorder %s489, %s490
      %p501 = scmp.eq.s32.totalorder %s43, 0
      %p502 = por %p500, %p501
      %p503 = scmp.ne.s32.totalorder %s489, %s490
      %p504 = scmp.eq.s32.totalorder %s44, 1
      %p505 = por %p503, %p504
      %p507 = scmp.ne.s32.totalorder %s490, %s506
      %p508 = scmp.eq.s32.totalorder %s44, 0
      %p509 = por %p507, %p508
      %s510 = ssub.s32 %s38, %s45
      %p511 = scmp.eq.s32.totalorder %s510, 0
      %s513 = sadd.s32 %s512, 1
      %s514 = scalar_select %p511, %s512, %s513
      %p517 = pneg %p511
      %p518 = scmp.eq.s32.totalorder %s38, 1
      %p519 = por %p517, %p518
      %p520 = scmp.ne.s32.totalorder %s512, %s515
      %p521 = scmp.eq.s32.totalorder %s38, 0
      %p522 = por %p520, %p521
      %p523 = scmp.ne.s32.totalorder %s512, %s515
      %p524 = scmp.eq.s32.totalorder %s43, 1
      %p525 = por %p523, %p524
      %p526 = scmp.ne.s32.totalorder %s515, %s516
      %p527 = scmp.eq.s32.totalorder %s43, 0
      %p528 = por %p526, %p527
      %p529 = scmp.ne.s32.totalorder %s515, %s516
      %p530 = scmp.eq.s32.totalorder %s44, 1
      %p531 = por %p529, %p530
      %p533 = scmp.ne.s32.totalorder %s516, %s532
      %p534 = scmp.eq.s32.totalorder %s44, 0
      %p535 = por %p533, %p534
      %s537 = sadd.s32 %s536, 1
      %p540 = scmp.eq.s32.totalorder %s38, 1
      %p541 = scmp.ne.s32.totalorder %s536, %s538
      %p542 = scmp.eq.s32.totalorder %s38, 0
      %p543 = por %p541, %p542
      %p544 = scmp.ne.s32.totalorder %s536, %s538
      %p545 = scmp.eq.s32.totalorder %s43, 1
      %p546 = por %p544, %p545
      %p547 = scmp.ne.s32.totalorder %s538, %s539
      %p548 = scmp.eq.s32.totalorder %s43, 0
      %p549 = por %p547, %p548
      %p550 = scmp.ne.s32.totalorder %s538, %s539
      %p551 = scmp.eq.s32.totalorder %s44, 1
      %p552 = por %p550, %p551
      %p554 = scmp.ne.s32.totalorder %s539, %s553
      %p555 = scmp.eq.s32.totalorder %s44, 0
      %p556 = por %p554, %p555
      %p557 = scmp.le.s32.totalorder 1, %s38
      %p558 = scmp.lt.s32.totalorder %s38, 3
      %p559 = pnand %p557, %p558
      %p560 = pneg %p559
      // Predicated region
      $region9: #{forward.4} parent=5 // pred_check
        _
      $region10: #{forward.4} parent=5 // pred_check_branch
        %562 = sbr.rel (%p559) target = $region12
      $region11: #{forward.4} parent=5 // pred_region
        %s563 = ssub.s32 %s38, 1
        // Predicated region
        $region13: #{forward.4} parent=11 // pred_check
          %p564 = pneg %p59
        $region14: #{forward.4} parent=11 // pred_check_branch
          %566 = sbr.rel (%p564) target = $region16
        $region15: #{forward.4} parent=11 // pred_region
          _
        $region16: #{forward.4} parent=11 // pred_fallthru
          _
        // Predicated region
        $region17: #{forward.4} parent=11 // pred_check
          %p567 = pneg %p80
        $region18: #{forward.4} parent=11 // pred_check_branch
          %569 = sbr.rel (%p567) target = $region20
        $region19: #{forward.4} parent=11 // pred_region
          _
        $region20: #{forward.4} parent=11 // pred_fallthru
          _
        // Predicated region
        $region21: #{forward.4} parent=11 // pred_check
          %p570 = pneg %p101
        $region22: #{forward.4} parent=11 // pred_check_branch
          %572 = sbr.rel (%p570) target = $region24
        $region23: #{forward.4} parent=11 // pred_region
          _
        $region24: #{forward.4} parent=11 // pred_fallthru
          _
        // Predicated region
        $region25: #{forward.4} parent=11 // pred_check
          %p573 = pneg %p122
        $region26: #{forward.4} parent=11 // pred_check_branch
          %575 = sbr.rel (%p573) target = $region28
        $region27: #{forward.4} parent=11 // pred_region
          _
        $region28: #{forward.4} parent=11 // pred_fallthru
          _
        // Predicated region
        $region29: #{forward.4} parent=11 // pred_check
          %p576 = pneg %p143
        $region30: #{forward.4} parent=11 // pred_check_branch
          %578 = sbr.rel (%p576) target = $region32
        $region31: #{forward.4} parent=11 // pred_region
          _
        $region32: #{forward.4} parent=11 // pred_fallthru
          _
        // Predicated region
        $region33: #{forward.4} parent=11 // pred_check
          %p579 = pneg %p164
        $region34: #{forward.4} parent=11 // pred_check_branch
          %581 = sbr.rel (%p579) target = $region36
        $region35: #{forward.4} parent=11 // pred_region
          _
        $region36: #{forward.4} parent=11 // pred_fallthru
          _
      $region12: #{forward.4} parent=5 // pred_fallthru
        _
      %p582 = scmp.lt.s32.totalorder %s38, 2
      // Predicated region
      $region37: #{forward.4} parent=5 // pred_check
        %p583 = pneg %p582
      $region38: #{forward.4} parent=5 // pred_check_branch
        %585 = sbr.rel (%p583) target = $region40
      $region39: #{forward.4} parent=5 // pred_region
        // Predicated region
        $region41: #{forward.4} parent=39 // pred_check
          %p586 = pneg %p184
        $region42: #{forward.4} parent=39 // pred_check_branch
          %588 = sbr.rel (%p586) target = $region44
        $region43: #{forward.4} parent=39 // pred_region
          %p589 = scmp.lt.s32.totalorder %s38, 1
          %s590 = scalar_select %p589, %s38, 1
          %s591 = smul.addr %s590, 2
          %s592 = scalar_lea.vmem %s6, %s591
        $region44: #{forward.4} parent=39 // pred_fallthru
          _
        // Predicated region
        $region45: #{forward.4} parent=39 // pred_check
          %p593 = pneg %p210
        $region46: #{forward.4} parent=39 // pred_check_branch
          %595 = sbr.rel (%p593) target = $region48
        $region47: #{forward.4} parent=39 // pred_region
          %s596 = sand.u32 %s200, 1
          %s597 = scalar_lea.sflag [#allocation4], %s596
          %s598 = sand.u32 %s200, 1
          %s599 = smul.addr %s598, 768
          %s600 = scalar_lea.vmem [#allocation3], %s599
          %s602 = ssub.s32 12288, 12288
          %603 = vsyncadd %s597, %s602
          %s604 = smul.addr %s38, 192
          %s605 = smul.addr %s604, 64
          %s606 = scalar_lea.hbm %s7, %s605
          %s607 = sshll.u32 %s600, 4
          %s608 = int_to_ptr.vmem [resolvable:$true] %s607
          %613 = dma.hbm_to_vmem [thread:$0]  %s606, 12288, %s608, %s597, 384, 384, 24
        $region48: #{forward.4} parent=39 // pred_fallthru
          _
        // Predicated region
        $region49: #{forward.4} parent=39 // pred_check
          %p614 = pneg %p236
        $region50: #{forward.4} parent=39 // pred_check_branch
          %616 = sbr.rel (%p614) target = $region52
        $region51: #{forward.4} parent=39 // pred_region
          %p617 = scmp.lt.s32.totalorder %s38, 1
          %s618 = scalar_select %p617, %s38, 1
          %s619 = smul.addr %s618, 64
          %s620 = smul.addr %s619, 4
          %s621 = scalar_lea.vmem %s8, %s620
        $region52: #{forward.4} parent=39 // pred_fallthru
          _
        // Predicated region
        $region53: #{forward.4} parent=39 // pred_check
          %p622 = pneg %p262
        $region54: #{forward.4} parent=39 // pred_check_branch
          %624 = sbr.rel (%p622) target = $region56
        $region55: #{forward.4} parent=39 // pred_region
          %p625 = scmp.lt.s32.totalorder %s38, 1
          %s626 = scalar_select %p625, %s38, 1
          %s627 = smul.addr %s626, 2
          %s628 = scalar_lea.vmem %s9, %s627
        $region56: #{forward.4} parent=39 // pred_fallthru
          _
        // Predicated region
        $region57: #{forward.4} parent=39 // pred_check
          %p629 = pneg %p288
        $region58: #{forward.4} parent=39 // pred_check_branch
          %631 = sbr.rel (%p629) target = $region60
        $region59: #{forward.4} parent=39 // pred_region
          %s632 = sand.u32 %s38, 1
          %s633 = scalar_lea.sflag [#allocation6], %s632
          %s634 = sand.u32 %s278, 1
          %s635 = smul.addr %s634, 1024
          %s636 = scalar_lea.vmem [#allocation5], %s635
          %s638 = ssub.s32 16384, 16384
          %639 = vsyncadd %s633, %s638
          %s640 = smul.addr %s38, 256
          %s641 = smul.addr %s640, 64
          %s642 = scalar_lea.hbm %s10, %s641
          %s643 = sshll.u32 %s636, 4
          %s644 = int_to_ptr.vmem [resolvable:$true] %s643
          %649 = dma.hbm_to_vmem [thread:$0]  %s642, 16384, %s644, %s633, 512, 512, 32
        $region60: #{forward.4} parent=39 // pred_fallthru
          _
        // Predicated region
        $region61: #{forward.4} parent=39 // pred_check
          %p650 = pneg %p314
        $region62: #{forward.4} parent=39 // pred_check_branch
          %652 = sbr.rel (%p650) target = $region64
        $region63: #{forward.4} parent=39 // pred_region
          %s653 = sand.u32 %s38, 1
          %s654 = scalar_lea.sflag [#allocation6], %s653
          %s655 = sand.u32 %s304, 1
          %s656 = smul.addr %s655, 512
          %s657 = scalar_lea.vmem [#allocation7], %s656
          %s659 = ssub.s32 8192, 8192
          %660 = vsyncadd %s654, %s659
          %s661 = smul.addr %s38, 128
          %s662 = smul.addr %s661, 64
          %s663 = scalar_lea.hbm %s11, %s662
          %s664 = sshll.u32 %s657, 4
          %s665 = int_to_ptr.vmem [resolvable:$true] %s664
          %670 = dma.hbm_to_vmem [thread:$0]  %s663, 8192, %s665, %s654, 128, 128, 8
        $region64: #{forward.4} parent=39 // pred_fallthru
          _
        // Predicated region
        $region65: #{forward.4} parent=39 // pred_check
          %p671 = pneg %p340
        $region66: #{forward.4} parent=39 // pred_check_branch
          %673 = sbr.rel (%p671) target = $region68
        $region67: #{forward.4} parent=39 // pred_region
          %s674 = sand.u32 %s38, 1
          %s675 = scalar_lea.sflag [#allocation9], %s674
          %s676 = sand.u32 %s330, 1
          %s677 = smul.addr %s676, 256
          %s678 = scalar_lea.vmem [#allocation8], %s677
          %s680 = ssub.s32 4096, 4096
          %681 = vsyncadd %s675, %s680
          %s682 = smul.addr %s38, 64
          %s683 = smul.addr %s682, 64
          %s684 = scalar_lea.hbm %s12, %s683
          %s685 = sshll.u32 %s678, 4
          %s686 = int_to_ptr.vmem [resolvable:$true] %s685
          %691 = dma.hbm_to_vmem [thread:$0]  %s684, 4096, %s686, %s675, 128, 128, 8
        $region68: #{forward.4} parent=39 // pred_fallthru
          _
        // Predicated region
        $region69: #{forward.4} parent=39 // pred_check
          %p692 = pneg %p366
        $region70: #{forward.4} parent=39 // pred_check_branch
          %694 = sbr.rel (%p692) target = $region72
        $region71: #{forward.4} parent=39 // pred_region
          %p695 = scmp.lt.s32.totalorder %s38, 1
          %s696 = scalar_select %p695, %s38, 1
          %s697 = smul.addr %s696, 2
          %s698 = scalar_lea.vmem %s13, %s697
        $region72: #{forward.4} parent=39 // pred_fallthru
          _
        // Predicated region
        $region73: #{forward.4} parent=39 // pred_check
          %p699 = pneg %p392
        $region74: #{forward.4} parent=39 // pred_check_branch
          %701 = sbr.rel (%p699) target = $region76
        $region75: #{forward.4} parent=39 // pred_region
          %s702 = sand.u32 %s38, 1
          %s703 = scalar_lea.sflag [#allocation9], %s702
          %s704 = sand.u32 %s382, 1
          %s705 = smul.addr %s704, 512
          %s706 = scalar_lea.vmem [#allocation10], %s705
          %s708 = ssub.s32 8192, 8192
          %709 = vsyncadd %s703, %s708
          %s710 = smul.addr %s38, 128
          %s711 = smul.addr %s710, 64
          %s712 = scalar_lea.hbm %s14, %s711
          %s713 = sshll.u32 %s706, 4
          %s714 = int_to_ptr.vmem [resolvable:$true] %s713
          %719 = dma.hbm_to_vmem [thread:$0]  %s712, 8192, %s714, %s703, 256, 256, 16
        $region76: #{forward.4} parent=39 // pred_fallthru
          _
        // Predicated region
        $region77: #{forward.4} parent=39 // pred_check
          %p720 = pneg %p418
        $region78: #{forward.4} parent=39 // pred_check_branch
          %722 = sbr.rel (%p720) target = $region80
        $region79: #{forward.4} parent=39 // pred_region
          %p723 = scmp.lt.s32.totalorder %s38, 1
          %s724 = scalar_select %p723, %s38, 1
          %s725 = smul.addr %s724, 4
          %s726 = scalar_lea.vmem %s15, %s725
        $region80: #{forward.4} parent=39 // pred_fallthru
          _
        // Predicated region
        $region81: #{forward.4} parent=39 // pred_check
          %p727 = pneg %p444
        $region82: #{forward.4} parent=39 // pred_check_branch
          %729 = sbr.rel (%p727) target = $region84
        $region83: #{forward.4} parent=39 // pred_region
          %s730 = sand.u32 %s434, 1
          %s731 = scalar_lea.sflag [#allocation12], %s730
          %s732 = sand.u32 %s434, 1
          %s733 = smul.addr %s732, 256
          %s734 = scalar_lea.vmem [#allocation11], %s733
          %s736 = ssub.s32 4096, 4096
          %737 = vsyncadd %s731, %s736
          %s738 = smul.addr %s38, 64
          %s739 = smul.addr %s738, 64
          %s740 = scalar_lea.hbm %s16, %s739
          %s741 = sshll.u32 %s734, 4
          %s742 = int_to_ptr.vmem [resolvable:$true] %s741
          %747 = dma.hbm_to_vmem [thread:$0]  %s740, 4096, %s742, %s731, 128, 128, 8
        $region84: #{forward.4} parent=39 // pred_fallthru
          _
        // Predicated region
        $region85: #{forward.4} parent=39 // pred_check
          %p748 = pneg %p470
        $region86: #{forward.4} parent=39 // pred_check_branch
          %750 = sbr.rel (%p748) target = $region88
        $region87: #{forward.4} parent=39 // pred_region
          %p751 = scmp.lt.s32.totalorder %s38, 1
          %s752 = scalar_select %p751, %s38, 1
          %s753 = smul.addr %s752, 2
          %s754 = scalar_lea.vmem %s17, %s753
        $region88: #{forward.4} parent=39 // pred_fallthru
          _
        // Predicated region
        $region89: #{forward.4} parent=39 // pred_check
          %p755 = pneg %p496
        $region90: #{forward.4} parent=39 // pred_check_branch
          %757 = sbr.rel (%p755) target = $region92
        $region91: #{forward.4} parent=39 // pred_region
          %p758 = scmp.lt.s32.totalorder %s38, 1
          %s759 = scalar_select %p758, %s38, 1
          %s760 = smul.addr %s759, 2
          %s761 = scalar_lea.vmem %s18, %s760
        $region92: #{forward.4} parent=39 // pred_fallthru
          _
        // Predicated region
        $region93: #{forward.4} parent=39 // pred_check
          %p762 = pneg %p522
        $region94: #{forward.4} parent=39 // pred_check_branch
          %764 = sbr.rel (%p762) target = $region96
        $region95: #{forward.4} parent=39 // pred_region
          %p765 = scmp.lt.s32.totalorder %s38, 1
          %s766 = scalar_select %p765, %s38, 1
          %s767 = smul.addr %s766, 2
          %s768 = scalar_lea.vmem %s19, %s767
        $region96: #{forward.4} parent=39 // pred_fallthru
          _
      $region40: #{forward.4} parent=5 // pred_fallthru
        _
      %p769 = scmp.le.s32.totalorder 1, %s38
      %p770 = scmp.lt.s32.totalorder %s38, 3
      %p771 = pnand %p769, %p770
      %p772 = pneg %p771
      // Predicated region
      $region97: #{forward.4} parent=5 // pred_check
        _
      $region98: #{forward.4} parent=5 // pred_check_branch
        %774 = sbr.rel (%p771) target = $region100
      $region99: #{forward.4} parent=5 // pred_region
        %s775 = ssub.s32 %s38, 1
        %s776 = sand.u32 %s203, 1
        %s777 = scalar_lea.sflag [#allocation4], %s776
        %s778 = sand.u32 %s203, 1
        %s779 = smul.addr %s778, 768
        %s780 = scalar_lea.vmem [#allocation3], %s779
        // Predicated region
        $region101: #{forward.4} parent=99 // pred_check
          %p781 = pneg %p216
        $region102: #{forward.4} parent=99 // pred_check_branch
          %783 = sbr.rel (%p781) target = $region104
        $region103: #{forward.4} parent=99 // pred_region
          %784 = dma.done %s777, 12288
        $region104: #{forward.4} parent=99 // pred_fallthru
          _
        %s785 = sand.u32 %s43, 1
        %s786 = scalar_lea.sflag [#allocation6], %s785
        %s787 = sand.u32 %s281, 1
        %s788 = smul.addr %s787, 1024
        %s789 = scalar_lea.vmem [#allocation5], %s788
        // Predicated region
        $region105: #{forward.4} parent=99 // pred_check
          %p790 = pneg %p294
        $region106: #{forward.4} parent=99 // pred_check_branch
          %792 = sbr.rel (%p790) target = $region108
        $region107: #{forward.4} parent=99 // pred_region
          %793 = dma.done %s786, 16384
        $region108: #{forward.4} parent=99 // pred_fallthru
          _
        %s794 = sand.u32 %s43, 1
        %s795 = scalar_lea.sflag [#allocation6], %s794
        %s796 = sand.u32 %s307, 1
        %s797 = smul.addr %s796, 512
        %s798 = scalar_lea.vmem [#allocation7], %s797
        // Predicated region
        $region109: #{forward.4} parent=99 // pred_check
          %p799 = pneg %p320
        $region110: #{forward.4} parent=99 // pred_check_branch
          %801 = sbr.rel (%p799) target = $region112
        $region111: #{forward.4} parent=99 // pred_region
          %802 = dma.done %s795, 8192
        $region112: #{forward.4} parent=99 // pred_fallthru
          _
        %s803 = sand.u32 %s43, 1
        %s804 = scalar_lea.sflag [#allocation9], %s803
        %s805 = sand.u32 %s333, 1
        %s806 = smul.addr %s805, 256
        %s807 = scalar_lea.vmem [#allocation8], %s806
        // Predicated region
        $region113: #{forward.4} parent=99 // pred_check
          %p808 = pneg %p346
        $region114: #{forward.4} parent=99 // pred_check_branch
          %810 = sbr.rel (%p808) target = $region116
        $region115: #{forward.4} parent=99 // pred_region
          %811 = dma.done %s804, 4096
        $region116: #{forward.4} parent=99 // pred_fallthru
          _
        %s812 = sand.u32 %s43, 1
        %s813 = scalar_lea.sflag [#allocation9], %s812
        %s814 = sand.u32 %s385, 1
        %s815 = smul.addr %s814, 512
        %s816 = scalar_lea.vmem [#allocation10], %s815
        // Predicated region
        $region117: #{forward.4} parent=99 // pred_check
          %p817 = pneg %p398
        $region118: #{forward.4} parent=99 // pred_check_branch
          %819 = sbr.rel (%p817) target = $region120
        $region119: #{forward.4} parent=99 // pred_region
          %820 = dma.done %s813, 8192
        $region120: #{forward.4} parent=99 // pred_fallthru
          _
        %s821 = sand.u32 %s437, 1
        %s822 = scalar_lea.sflag [#allocation12], %s821
        %s823 = sand.u32 %s437, 1
        %s824 = smul.addr %s823, 256
        %s825 = scalar_lea.vmem [#allocation11], %s824
        // Predicated region
        $region121: #{forward.4} parent=99 // pred_check
          %p826 = pneg %p450
        $region122: #{forward.4} parent=99 // pred_check_branch
          %828 = sbr.rel (%p826) target = $region124
        $region123: #{forward.4} parent=99 // pred_region
          %829 = dma.done %s822, 4096
        $region124: #{forward.4} parent=99 // pred_fallthru
          _
        %p830 = pneg %p59
        %p831 = pneg %p56
        %p832 = pneg %p80
        %p833 = pneg %p77
        %p834 = pneg %p101
        %p835 = pneg %p98
        %p836 = pneg %p122
        %p837 = pneg %p119
        %p838 = pneg %p143
        %p839 = pneg %p140
        %p840 = pneg %p164
        %p841 = pneg %p161
        %p842 = scmp.lt.s32.totalorder %s43, 1
        %s843 = scalar_select %p842, %s43, 1
        %s844 = smul.addr %s843, 2
        %s845 = scalar_lea.vmem %s6, %s844
        %p846 = pneg %p190
        %p847 = pneg %p187
        %s848 = sand.u32 %s203, 1
        %s849 = scalar_lea.sflag [#allocation4], %s848
        %s850 = sand.u32 %s203, 1
        %s851 = smul.addr %s850, 768
        %s852 = scalar_lea.vmem [#allocation3], %s851
        %p853 = pneg %p216
        %p854 = pneg %p213
        %p855 = scmp.lt.s32.totalorder %s43, 1
        %s856 = scalar_select %p855, %s43, 1
        %s857 = smul.addr %s856, 64
        %s858 = smul.addr %s857, 4
        %s859 = scalar_lea.vmem %s8, %s858
        %p860 = pneg %p242
        %p861 = pneg %p239
        %p862 = scmp.lt.s32.totalorder %s43, 1
        %s863 = scalar_select %p862, %s43, 1
        %s864 = smul.addr %s863, 2
        %s865 = scalar_lea.vmem %s9, %s864
        %p866 = pneg %p268
        %p867 = pneg %p265
        %s868 = sand.u32 %s43, 1
        %s869 = scalar_lea.sflag [#allocation6], %s868
        %s870 = sand.u32 %s281, 1
        %s871 = smul.addr %s870, 1024
        %s872 = scalar_lea.vmem [#allocation5], %s871
        %p873 = pneg %p294
        %p874 = pneg %p291
        %s875 = sand.u32 %s43, 1
        %s876 = scalar_lea.sflag [#allocation6], %s875
        %s877 = sand.u32 %s307, 1
        %s878 = smul.addr %s877, 512
        %s879 = scalar_lea.vmem [#allocation7], %s878
        %p880 = pneg %p320
        %p881 = pneg %p317
        %s882 = sand.u32 %s43, 1
        %s883 = scalar_lea.sflag [#allocation9], %s882
        %s884 = sand.u32 %s333, 1
        %s885 = smul.addr %s884, 256
        %s886 = scalar_lea.vmem [#allocation8], %s885
        %p887 = pneg %p346
        %p888 = pneg %p343
        %p889 = scmp.lt.s32.totalorder %s43, 1
        %s890 = scalar_select %p889, %s43, 1
        %s891 = smul.addr %s890, 2
        %s892 = scalar_lea.vmem %s13, %s891
        %p893 = pneg %p372
        %p894 = pneg %p369
        %s895 = sand.u32 %s43, 1
        %s896 = scalar_lea.sflag [#allocation9], %s895
        %s897 = sand.u32 %s385, 1
        %s898 = smul.addr %s897, 512
        %s899 = scalar_lea.vmem [#allocation10], %s898
        %p900 = pneg %p398
        %p901 = pneg %p395
        %p902 = scmp.lt.s32.totalorder %s43, 1
        %s903 = scalar_select %p902, %s43, 1
        %s904 = smul.addr %s903, 4
        %s905 = scalar_lea.vmem %s15, %s904
        %p906 = pneg %p424
        %p907 = pneg %p421
        %s908 = sand.u32 %s437, 1
        %s909 = scalar_lea.sflag [#allocation12], %s908
        %s910 = sand.u32 %s437, 1
        %s911 = smul.addr %s910, 256
        %s912 = scalar_lea.vmem [#allocation11], %s911
        %p913 = pneg %p450
        %p914 = pneg %p447
        %p915 = scmp.lt.s32.totalorder %s43, 1
        %s916 = scalar_select %p915, %s43, 1
        %s917 = smul.addr %s916, 2
        %s918 = scalar_lea.vmem %s17, %s917
        %p919 = pneg %p476
        %p920 = pneg %p473
        %p921 = scmp.lt.s32.totalorder %s43, 1
        %s922 = scalar_select %p921, %s43, 1
        %s923 = smul.addr %s922, 2
        %s924 = scalar_lea.vmem %s18, %s923
        %p925 = pneg %p502
        %p926 = pneg %p499
        %p927 = scmp.lt.s32.totalorder %s43, 1
        %s928 = scalar_select %p927, %s43, 1
        %s929 = smul.addr %s928, 2
        %s930 = scalar_lea.vmem %s19, %s929
        %p931 = pneg %p528
        %p932 = pneg %p525
        %p933 = pneg %p549
        %p934 = pneg %p546
        %p935 = scmp.lt.s32.totalorder %s43, 1
        %s936 = scalar_select %p935, %s43, 1
        %s937 = smul.addr %s936, 2
        %s938 = scalar_lea.vmem %s6, %s937
        %p939 = scmp.lt.s32.totalorder %s43, 1
        %s940 = scalar_select %p939, %s43, 1
        %s941 = smul.addr %s940, 64
        %s942 = smul.addr %s941, 4
        %s943 = scalar_lea.vmem %s8, %s942
        %p944 = scmp.lt.s32.totalorder %s43, 1
        %s945 = scalar_select %p944, %s43, 1
        %s946 = smul.addr %s945, 2
        %s947 = scalar_lea.vmem %s9, %s946
        %p948 = scmp.lt.s32.totalorder %s43, 1
        %s949 = scalar_select %p948, %s43, 1
        %s950 = smul.addr %s949, 2
        %s951 = scalar_lea.vmem %s13, %s950
        %p952 = scmp.lt.s32.totalorder %s43, 1
        %s953 = scalar_select %p952, %s43, 1
        %s954 = smul.addr %s953, 4
        %s955 = scalar_lea.vmem %s15, %s954
        %p956 = scmp.lt.s32.totalorder %s43, 1
        %s957 = scalar_select %p956, %s43, 1
        %s958 = smul.addr %s957, 2
        %s959 = scalar_lea.vmem %s17, %s958
        %p960 = scmp.lt.s32.totalorder %s43, 1
        %s961 = scalar_select %p960, %s43, 1
        %s962 = smul.addr %s961, 2
        %s963 = scalar_lea.vmem %s18, %s962
        %p964 = scmp.lt.s32.totalorder %s43, 1
        %s965 = scalar_select %p964, %s43, 1
        %s966 = smul.addr %s965, 2
        %s967 = scalar_lea.vmem %s19, %s966
        %p969 = scmp.eq.s32.totalorder %s43, 0
        // Predicated region
        $region125: #{forward.4} parent=99 // pred_check
          %p970 = pneg %p969
        $region126: #{forward.4} parent=99 // pred_check_branch
          %972 = sbr.rel (%p970) target = $region128
        $region127: #{forward.4} parent=99 // pred_region
          %v973 = vld [vmem:[%s0] sm:$0xff]
          %v974 = vld [vmem:[%s0 + $0x8] sm:$0xff]
          %v975 = vld [vmem:[%s0 + $0x10] sm:$0xff]
          %v976 = vld [vmem:[%s0 + $0x18] sm:$0xff]
          %977 = vst [vmem:[%s20] sm:$0xff] %v973
          %978 = vst [vmem:[%s20 + $0x8] sm:$0xff] %v974
          %979 = vst [vmem:[%s20 + $0x10] sm:$0xff] %v975
          %980 = vst [vmem:[%s20 + $0x18] sm:$0xff] %v976
        $region128: #{forward.4} parent=99 // pred_fallthru
          _
        %v981 = vld [vmem:[%s20] sm:$0xff]
        %v982 = vld [vmem:[%s20 + $0x8] sm:$0xff]
        %v983 = vld [vmem:[%s20 + $0x10] sm:$0xff]
        %v984 = vld [vmem:[%s20 + $0x18] sm:$0xff]
        %v985 = vld [vmem:[%s3] sm:$0xff]
        %v986 = vld [vmem:[%s3 + $0x8] sm:$0xff]
        %v987 = vld [vmem:[%s3 + $0x10] sm:$0xff]
        %v988 = vld [vmem:[%s3 + $0x18] sm:$0xff]
        %v989 = vld [vmem:[%s4] sm:$0xff]
        %v990 = vld [vmem:[%s4 + $0x8] sm:$0xff]
        %v991 = vld [vmem:[%s4 + $0x10] sm:$0xff]
        %v992 = vld [vmem:[%s4 + $0x18] sm:$0xff]
        %v993 = vld [vmem:[%s938] sm:$0x3]
        %v994 = vmul.f32 %v981, %v981
        %v995 = vmul.f32 %v982, %v982
        %v996 = vmul.f32 %v983, %v983
        %v997 = vmul.f32 %v984, %v984
        %v998 = vadd.f32 %v994, %v995
        %999 = vadd.xlane.f32.xlu0 %v998
        %v1000 = vpop.xlane.xlu0 %999
        %v1001 = vadd.f32 %v996, %v997
        %1002 = vadd.xlane.f32.xlu0 %v1001
        %v1003 = vpop.xlane.xlu0 %1002
        %v1004 = vrcp.pop 256.0
        %v1005 = vmul.f32 %v1000, %v1004
        %v1006 = vmul.f32 %v1003, %v1004
        %v1007 = vadd.f32 %v1005, 1e-05
        %v1008 = vadd.f32 %v1006, 1e-05
        %v1009 = vrsqrt.pop %v1007
        %v1010 = vrsqrt.pop %v1008
        %v1011 = vmul.f32 %v981, %v1009
        %v1012 = vmul.f32 %v982, %v1009
        %v1013 = vmul.f32 %v983, %v1010
        %v1014 = vmul.f32 %v984, %v1010
        %v1016 = vlaneseq
        %v1017 = vshrl.u32 %v1016, 7
        %v1018 = vsub.s32 0, %v1017
        %v1019 = vrot.slane %v993, %v1018
        %v1020 = vlaneseq
        %v1021 = vshrl.u32 %v1020, 7
        %v1022 = vsub.s32 1, %v1021
        %v1023 = vrot.slane %v993, %v1022
        %v1026 = vmul.f32 %v1011, %v1019
        %v1027 = vmul.f32 %v1012, %v1023
        %v1028 = vmul.f32 %v1013, %v1019
        %v1029 = vmul.f32 %v1014, %v1023
        %v1030 = vpack.c.bf16 %v1028, %v1026
        %v1031 = vpack.c.bf16 %v1029, %v1027
        %v1032 = vld [vmem:[%s780] sm:$0xff]
        %v1033 = vld [vmem:[%s780 + $0x8] sm:$0xff]
        %v1034 = vld [vmem:[%s780 + $0x10] sm:$0xff]
        %v1035 = vld [vmem:[%s780 + $0x18] sm:$0xff]
        %v1036 = vld [vmem:[%s780 + $0x20] sm:$0xff]
        %v1037 = vld [vmem:[%s780 + $0x28] sm:$0xff]
        %v1038 = vld [vmem:[%s780 + $0x30] sm:$0xff]
        %v1039 = vld [vmem:[%s780 + $0x38] sm:$0xff]
        %v1040 = vld [vmem:[%s780 + $0x40] sm:$0xff]
        %v1041 = vld [vmem:[%s780 + $0x48] sm:$0xff]
        %v1042 = vld [vmem:[%s780 + $0x50] sm:$0xff]
        %v1043 = vld [vmem:[%s780 + $0x58] sm:$0xff]
        %v1044 = vld [vmem:[%s780 + $0x60] sm:$0xff]
        %v1045 = vld [vmem:[%s780 + $0x68] sm:$0xff]
        %v1046 = vld [vmem:[%s780 + $0x70] sm:$0xff]
        %v1047 = vld [vmem:[%s780 + $0x78] sm:$0xff]
        %v1048 = vld [vmem:[%s780 + $0x80] sm:$0xff]
        %v1049 = vld [vmem:[%s780 + $0x88] sm:$0xff]
        %v1050 = vld [vmem:[%s780 + $0x90] sm:$0xff]
        %v1051 = vld [vmem:[%s780 + $0x98] sm:$0xff]
        %v1052 = vld [vmem:[%s780 + $0xa0] sm:$0xff]
        %v1053 = vld [vmem:[%s780 + $0xa8] sm:$0xff]
        %v1054 = vld [vmem:[%s780 + $0xb0] sm:$0xff]
        %v1055 = vld [vmem:[%s780 + $0xb8] sm:$0xff]
        %v1056 = vld [vmem:[%s780 + $0xc0] sm:$0xff]
        %v1057 = vld [vmem:[%s780 + $0xc8] sm:$0xff]
        %v1058 = vld [vmem:[%s780 + $0xd0] sm:$0xff]
        %v1059 = vld [vmem:[%s780 + $0xd8] sm:$0xff]
        %v1060 = vld [vmem:[%s780 + $0xe0] sm:$0xff]
        %v1061 = vld [vmem:[%s780 + $0xe8] sm:$0xff]
        %v1062 = vld [vmem:[%s780 + $0xf0] sm:$0xff]
        %v1063 = vld [vmem:[%s780 + $0xf8] sm:$0xff]
        %v1064 = vld [vmem:[%s780 + $0x100] sm:$0xff]
        %v1065 = vld [vmem:[%s780 + $0x108] sm:$0xff]
        %v1066 = vld [vmem:[%s780 + $0x110] sm:$0xff]
        %v1067 = vld [vmem:[%s780 + $0x118] sm:$0xff]
        %v1068 = vld [vmem:[%s780 + $0x120] sm:$0xff]
        %v1069 = vld [vmem:[%s780 + $0x128] sm:$0xff]
        %v1070 = vld [vmem:[%s780 + $0x130] sm:$0xff]
        %v1071 = vld [vmem:[%s780 + $0x138] sm:$0xff]
        %v1072 = vld [vmem:[%s780 + $0x140] sm:$0xff]
        %v1073 = vld [vmem:[%s780 + $0x148] sm:$0xff]
        %v1074 = vld [vmem:[%s780 + $0x150] sm:$0xff]
        %v1075 = vld [vmem:[%s780 + $0x158] sm:$0xff]
        %v1076 = vld [vmem:[%s780 + $0x160] sm:$0xff]
        %v1077 = vld [vmem:[%s780 + $0x168] sm:$0xff]
        %v1078 = vld [vmem:[%s780 + $0x170] sm:$0xff]
        %v1079 = vld [vmem:[%s780 + $0x178] sm:$0xff]
        %v1080 = vld [vmem:[%s780 + $0x180] sm:$0xff]
        %v1081 = vld [vmem:[%s780 + $0x188] sm:$0xff]
        %v1082 = vld [vmem:[%s780 + $0x190] sm:$0xff]
        %v1083 = vld [vmem:[%s780 + $0x198] sm:$0xff]
        %v1084 = vld [vmem:[%s780 + $0x1a0] sm:$0xff]
        %v1085 = vld [vmem:[%s780 + $0x1a8] sm:$0xff]
        %v1086 = vld [vmem:[%s780 + $0x1b0] sm:$0xff]
        %v1087 = vld [vmem:[%s780 + $0x1b8] sm:$0xff]
        %v1088 = vld [vmem:[%s780 + $0x1c0] sm:$0xff]
        %v1089 = vld [vmem:[%s780 + $0x1c8] sm:$0xff]
        %v1090 = vld [vmem:[%s780 + $0x1d0] sm:$0xff]
        %v1091 = vld [vmem:[%s780 + $0x1d8] sm:$0xff]
        %v1092 = vld [vmem:[%s780 + $0x1e0] sm:$0xff]
        %v1093 = vld [vmem:[%s780 + $0x1e8] sm:$0xff]
        %v1094 = vld [vmem:[%s780 + $0x1f0] sm:$0xff]
        %v1095 = vld [vmem:[%s780 + $0x1f8] sm:$0xff]
        %v1096 = vld [vmem:[%s780 + $0x200] sm:$0xff]
        %v1097 = vld [vmem:[%s780 + $0x208] sm:$0xff]
        %v1098 = vld [vmem:[%s780 + $0x210] sm:$0xff]
        %v1099 = vld [vmem:[%s780 + $0x218] sm:$0xff]
        %v1100 = vld [vmem:[%s780 + $0x220] sm:$0xff]
        %v1101 = vld [vmem:[%s780 + $0x228] sm:$0xff]
        %v1102 = vld [vmem:[%s780 + $0x230] sm:$0xff]
        %v1103 = vld [vmem:[%s780 + $0x238] sm:$0xff]
        %v1104 = vld [vmem:[%s780 + $0x240] sm:$0xff]
        %v1105 = vld [vmem:[%s780 + $0x248] sm:$0xff]
        %v1106 = vld [vmem:[%s780 + $0x250] sm:$0xff]
        %v1107 = vld [vmem:[%s780 + $0x258] sm:$0xff]
        %v1108 = vld [vmem:[%s780 + $0x260] sm:$0xff]
        %v1109 = vld [vmem:[%s780 + $0x268] sm:$0xff]
        %v1110 = vld [vmem:[%s780 + $0x270] sm:$0xff]
        %v1111 = vld [vmem:[%s780 + $0x278] sm:$0xff]
        %v1112 = vld [vmem:[%s780 + $0x280] sm:$0xff]
        %v1113 = vld [vmem:[%s780 + $0x288] sm:$0xff]
        %v1114 = vld [vmem:[%s780 + $0x290] sm:$0xff]
        %v1115 = vld [vmem:[%s780 + $0x298] sm:$0xff]
        %v1116 = vld [vmem:[%s780 + $0x2a0] sm:$0xff]
        %v1117 = vld [vmem:[%s780 + $0x2a8] sm:$0xff]
        %v1118 = vld [vmem:[%s780 + $0x2b0] sm:$0xff]
        %v1119 = vld [vmem:[%s780 + $0x2b8] sm:$0xff]
        %v1120 = vld [vmem:[%s780 + $0x2c0] sm:$0xff]
        %v1121 = vld [vmem:[%s780 + $0x2c8] sm:$0xff]
        %v1122 = vld [vmem:[%s780 + $0x2d0] sm:$0xff]
        %v1123 = vld [vmem:[%s780 + $0x2d8] sm:$0xff]
        %v1124 = vld [vmem:[%s780 + $0x2e0] sm:$0xff]
        %v1125 = vld [vmem:[%s780 + $0x2e8] sm:$0xff]
        %v1126 = vld [vmem:[%s780 + $0x2f0] sm:$0xff]
        %v1127 = vld [vmem:[%s780 + $0x2f8] sm:$0xff]
        %v1224 = vunpack.c.l.b16 %v1032
        %v1225 = vunpack.c.h.b16 %v1032
        %v1226 = vunpack.c.l.b16 %v1033
        %v1227 = vunpack.c.h.b16 %v1033
        %v1228 = vunpack.c.l.b16 %v1034
        %v1229 = vunpack.c.h.b16 %v1034
        %v1230 = vunpack.c.l.b16 %v1035
        %v1231 = vunpack.c.h.b16 %v1035
        %v1232 = vunpack.c.l.b16 %v1036
        %v1233 = vunpack.c.h.b16 %v1036
        %v1234 = vunpack.c.l.b16 %v1037
        %v1235 = vunpack.c.h.b16 %v1037
        %v1236 = vunpack.c.l.b16 %v1038
        %v1237 = vunpack.c.h.b16 %v1038
        %v1238 = vunpack.c.l.b16 %v1039
        %v1239 = vunpack.c.h.b16 %v1039
        %v1240 = vunpack.c.l.b16 %v1040
        %v1241 = vunpack.c.h.b16 %v1040
        %v1242 = vunpack.c.l.b16 %v1041
        %v1243 = vunpack.c.h.b16 %v1041
        %v1244 = vunpack.c.l.b16 %v1042
        %v1245 = vunpack.c.h.b16 %v1042
        %v1246 = vunpack.c.l.b16 %v1043
        %v1247 = vunpack.c.h.b16 %v1043
        %v1248 = vunpack.c.l.b16 %v1044
        %v1249 = vunpack.c.h.b16 %v1044
        %v1250 = vunpack.c.l.b16 %v1045
        %v1251 = vunpack.c.h.b16 %v1045
        %v1252 = vunpack.c.l.b16 %v1046
        %v1253 = vunpack.c.h.b16 %v1046
        %v1254 = vunpack.c.l.b16 %v1047
        %v1255 = vunpack.c.h.b16 %v1047
        %v1256 = vunpack.c.l.b16 %v1048
        %v1257 = vunpack.c.h.b16 %v1048
        %v1258 = vunpack.c.l.b16 %v1049
        %v1259 = vunpack.c.h.b16 %v1049
        %v1260 = vunpack.c.l.b16 %v1050
        %v1261 = vunpack.c.h.b16 %v1050
        %v1262 = vunpack.c.l.b16 %v1051
        %v1263 = vunpack.c.h.b16 %v1051
        %v1264 = vunpack.c.l.b16 %v1052
        %v1265 = vunpack.c.h.b16 %v1052
        %v1266 = vunpack.c.l.b16 %v1053
        %v1267 = vunpack.c.h.b16 %v1053
        %v1268 = vunpack.c.l.b16 %v1054
        %v1269 = vunpack.c.h.b16 %v1054
        %v1270 = vunpack.c.l.b16 %v1055
        %v1271 = vunpack.c.h.b16 %v1055
        %v1272 = vunpack.c.l.b16 %v1056
        %v1273 = vunpack.c.h.b16 %v1056
        %v1274 = vunpack.c.l.b16 %v1057
        %v1275 = vunpack.c.h.b16 %v1057
        %v1276 = vunpack.c.l.b16 %v1058
        %v1277 = vunpack.c.h.b16 %v1058
        %v1278 = vunpack.c.l.b16 %v1059
        %v1279 = vunpack.c.h.b16 %v1059
        %v1280 = vunpack.c.l.b16 %v1060
        %v1281 = vunpack.c.h.b16 %v1060
        %v1282 = vunpack.c.l.b16 %v1061
        %v1283 = vunpack.c.h.b16 %v1061
        %v1284 = vunpack.c.l.b16 %v1062
        %v1285 = vunpack.c.h.b16 %v1062
        %v1286 = vunpack.c.l.b16 %v1063
        %v1287 = vunpack.c.h.b16 %v1063
        %v1288 = vunpack.c.l.b16 %v1064
        %v1289 = vunpack.c.h.b16 %v1064
        %v1290 = vunpack.c.l.b16 %v1065
        %v1291 = vunpack.c.h.b16 %v1065
        %v1292 = vunpack.c.l.b16 %v1066
        %v1293 = vunpack.c.h.b16 %v1066
        %v1294 = vunpack.c.l.b16 %v1067
        %v1295 = vunpack.c.h.b16 %v1067
        %v1296 = vunpack.c.l.b16 %v1068
        %v1297 = vunpack.c.h.b16 %v1068
        %v1298 = vunpack.c.l.b16 %v1069
        %v1299 = vunpack.c.h.b16 %v1069
        %v1300 = vunpack.c.l.b16 %v1070
        %v1301 = vunpack.c.h.b16 %v1070
        %v1302 = vunpack.c.l.b16 %v1071
        %v1303 = vunpack.c.h.b16 %v1071
        %v1304 = vunpack.c.l.b16 %v1072
        %v1305 = vunpack.c.h.b16 %v1072
        %v1306 = vunpack.c.l.b16 %v1073
        %v1307 = vunpack.c.h.b16 %v1073
        %v1308 = vunpack.c.l.b16 %v1074
        %v1309 = vunpack.c.h.b16 %v1074
        %v1310 = vunpack.c.l.b16 %v1075
        %v1311 = vunpack.c.h.b16 %v1075
        %v1312 = vunpack.c.l.b16 %v1076
        %v1313 = vunpack.c.h.b16 %v1076
        %v1314 = vunpack.c.l.b16 %v1077
        %v1315 = vunpack.c.h.b16 %v1077
        %v1316 = vunpack.c.l.b16 %v1078
        %v1317 = vunpack.c.h.b16 %v1078
        %v1318 = vunpack.c.l.b16 %v1079
        %v1319 = vunpack.c.h.b16 %v1079
        %v1320 = vunpack.c.l.b16 %v1080
        %v1321 = vunpack.c.h.b16 %v1080
        %v1322 = vunpack.c.l.b16 %v1081
        %v1323 = vunpack.c.h.b16 %v1081
        %v1324 = vunpack.c.l.b16 %v1082
        %v1325 = vunpack.c.h.b16 %v1082
        %v1326 = vunpack.c.l.b16 %v1083
        %v1327 = vunpack.c.h.b16 %v1083
        %v1328 = vunpack.c.l.b16 %v1084
        %v1329 = vunpack.c.h.b16 %v1084
        %v1330 = vunpack.c.l.b16 %v1085
        %v1331 = vunpack.c.h.b16 %v1085
        %v1332 = vunpack.c.l.b16 %v1086
        %v1333 = vunpack.c.h.b16 %v1086
        %v1334 = vunpack.c.l.b16 %v1087
        %v1335 = vunpack.c.h.b16 %v1087
        %v1336 = vunpack.c.l.b16 %v1088
        %v1337 = vunpack.c.h.b16 %v1088
        %v1338 = vunpack.c.l.b16 %v1089
        %v1339 = vunpack.c.h.b16 %v1089
        %v1340 = vunpack.c.l.b16 %v1090
        %v1341 = vunpack.c.h.b16 %v1090
        %v1342 = vunpack.c.l.b16 %v1091
        %v1343 = vunpack.c.h.b16 %v1091
        %v1344 = vunpack.c.l.b16 %v1092
        %v1345 = vunpack.c.h.b16 %v1092
        %v1346 = vunpack.c.l.b16 %v1093
        %v1347 = vunpack.c.h.b16 %v1093
        %v1348 = vunpack.c.l.b16 %v1094
        %v1349 = vunpack.c.h.b16 %v1094
        %v1350 = vunpack.c.l.b16 %v1095
        %v1351 = vunpack.c.h.b16 %v1095
        %v1352 = vunpack.c.l.b16 %v1096
        %v1353 = vunpack.c.h.b16 %v1096
        %v1354 = vunpack.c.l.b16 %v1097
        %v1355 = vunpack.c.h.b16 %v1097
        %v1356 = vunpack.c.l.b16 %v1098
        %v1357 = vunpack.c.h.b16 %v1098
        %v1358 = vunpack.c.l.b16 %v1099
        %v1359 = vunpack.c.h.b16 %v1099
        %v1360 = vunpack.c.l.b16 %v1100
        %v1361 = vunpack.c.h.b16 %v1100
        %v1362 = vunpack.c.l.b16 %v1101
        %v1363 = vunpack.c.h.b16 %v1101
        %v1364 = vunpack.c.l.b16 %v1102
        %v1365 = vunpack.c.h.b16 %v1102
        %v1366 = vunpack.c.l.b16 %v1103
        %v1367 = vunpack.c.h.b16 %v1103
        %v1368 = vunpack.c.l.b16 %v1104
        %v1369 = vunpack.c.h.b16 %v1104
        %v1370 = vunpack.c.l.b16 %v1105
        %v1371 = vunpack.c.h.b16 %v1105
        %v1372 = vunpack.c.l.b16 %v1106
        %v1373 = vunpack.c.h.b16 %v1106
        %v1374 = vunpack.c.l.b16 %v1107
        %v1375 = vunpack.c.h.b16 %v1107
        %v1376 = vunpack.c.l.b16 %v1108
        %v1377 = vunpack.c.h.b16 %v1108
        %v1378 = vunpack.c.l.b16 %v1109
        %v1379 = vunpack.c.h.b16 %v1109
        %v1380 = vunpack.c.l.b16 %v1110
        %v1381 = vunpack.c.h.b16 %v1110
        %v1382 = vunpack.c.l.b16 %v1111
        %v1383 = vunpack.c.h.b16 %v1111
        %v1384 = vunpack.c.l.b16 %v1112
        %v1385 = vunpack.c.h.b16 %v1112
        %v1386 = vunpack.c.l.b16 %v1113
        %v1387 = vunpack.c.h.b16 %v1113
        %v1388 = vunpack.c.l.b16 %v1114
        %v1389 = vunpack.c.h.b16 %v1114
        %v1390 = vunpack.c.l.b16 %v1115
        %v1391 = vunpack.c.h.b16 %v1115
        %v1392 = vunpack.c.l.b16 %v1116
        %v1393 = vunpack.c.h.b16 %v1116
        %v1394 = vunpack.c.l.b16 %v1117
        %v1395 = vunpack.c.h.b16 %v1117
        %v1396 = vunpack.c.l.b16 %v1118
        %v1397 = vunpack.c.h.b16 %v1118
        %v1398 = vunpack.c.l.b16 %v1119
        %v1399 = vunpack.c.h.b16 %v1119
        %v1400 = vunpack.c.l.b16 %v1120
        %v1401 = vunpack.c.h.b16 %v1120
        %v1402 = vunpack.c.l.b16 %v1121
        %v1403 = vunpack.c.h.b16 %v1121
        %v1404 = vunpack.c.l.b16 %v1122
        %v1405 = vunpack.c.h.b16 %v1122
        %v1406 = vunpack.c.l.b16 %v1123
        %v1407 = vunpack.c.h.b16 %v1123
        %v1408 = vunpack.c.l.b16 %v1124
        %v1409 = vunpack.c.h.b16 %v1124
        %v1410 = vunpack.c.l.b16 %v1125
        %v1411 = vunpack.c.h.b16 %v1125
        %v1412 = vunpack.c.l.b16 %v1126
        %v1413 = vunpack.c.h.b16 %v1126
        %v1414 = vunpack.c.l.b16 %v1127
        %v1415 = vunpack.c.h.b16 %v1127
        %v1416 = vpack.c.b16 %v1230, %v1224
        %v1417 = vpack.c.b16 %v1231, %v1225
        %v1418 = vpack.c.b16 %v1232, %v1226
        %v1419 = vpack.c.b16 %v1233, %v1227
        %v1420 = vpack.c.b16 %v1234, %v1228
        %v1421 = vpack.c.b16 %v1235, %v1229
        %v1422 = vpack.c.b16 %v1242, %v1236
        %v1423 = vpack.c.b16 %v1243, %v1237
        %v1424 = vpack.c.b16 %v1244, %v1238
        %v1425 = vpack.c.b16 %v1245, %v1239
        %v1426 = vpack.c.b16 %v1246, %v1240
        %v1427 = vpack.c.b16 %v1247, %v1241
        %v1428 = vpack.c.b16 %v1254, %v1248
        %v1429 = vpack.c.b16 %v1255, %v1249
        %v1430 = vpack.c.b16 %v1256, %v1250
        %v1431 = vpack.c.b16 %v1257, %v1251
        %v1432 = vpack.c.b16 %v1258, %v1252
        %v1433 = vpack.c.b16 %v1259, %v1253
        %v1434 = vpack.c.b16 %v1266, %v1260
        %v1435 = vpack.c.b16 %v1267, %v1261
        %v1436 = vpack.c.b16 %v1268, %v1262
        %v1437 = vpack.c.b16 %v1269, %v1263
        %v1438 = vpack.c.b16 %v1270, %v1264
        %v1439 = vpack.c.b16 %v1271, %v1265
        %v1440 = vpack.c.b16 %v1278, %v1272
        %v1441 = vpack.c.b16 %v1279, %v1273
        %v1442 = vpack.c.b16 %v1280, %v1274
        %v1443 = vpack.c.b16 %v1281, %v1275
        %v1444 = vpack.c.b16 %v1282, %v1276
        %v1445 = vpack.c.b16 %v1283, %v1277
        %v1446 = vpack.c.b16 %v1290, %v1284
        %v1447 = vpack.c.b16 %v1291, %v1285
        %v1448 = vpack.c.b16 %v1292, %v1286
        %v1449 = vpack.c.b16 %v1293, %v1287
        %v1450 = vpack.c.b16 %v1294, %v1288
        %v1451 = vpack.c.b16 %v1295, %v1289
        %v1452 = vpack.c.b16 %v1302, %v1296
        %v1453 = vpack.c.b16 %v1303, %v1297
        %v1454 = vpack.c.b16 %v1304, %v1298
        %v1455 = vpack.c.b16 %v1305, %v1299
        %v1456 = vpack.c.b16 %v1306, %v1300
        %v1457 = vpack.c.b16 %v1307, %v1301
        %v1458 = vpack.c.b16 %v1314, %v1308
        %v1459 = vpack.c.b16 %v1315, %v1309
        %v1460 = vpack.c.b16 %v1316, %v1310
        %v1461 = vpack.c.b16 %v1317, %v1311
        %v1462 = vpack.c.b16 %v1318, %v1312
        %v1463 = vpack.c.b16 %v1319, %v1313
        %v1464 = vpack.c.b16 %v1326, %v1320
        %v1465 = vpack.c.b16 %v1327, %v1321
        %v1466 = vpack.c.b16 %v1328, %v1322
        %v1467 = vpack.c.b16 %v1329, %v1323
        %v1468 = vpack.c.b16 %v1330, %v1324
        %v1469 = vpack.c.b16 %v1331, %v1325
        %v1470 = vpack.c.b16 %v1338, %v1332
        %v1471 = vpack.c.b16 %v1339, %v1333
        %v1472 = vpack.c.b16 %v1340, %v1334
        %v1473 = vpack.c.b16 %v1341, %v1335
        %v1474 = vpack.c.b16 %v1342, %v1336
        %v1475 = vpack.c.b16 %v1343, %v1337
        %v1476 = vpack.c.b16 %v1350, %v1344
        %v1477 = vpack.c.b16 %v1351, %v1345
        %v1478 = vpack.c.b16 %v1352, %v1346
        %v1479 = vpack.c.b16 %v1353, %v1347
        %v1480 = vpack.c.b16 %v1354, %v1348
        %v1481 = vpack.c.b16 %v1355, %v1349
        %v1482 = vpack.c.b16 %v1362, %v1356
        %v1483 = vpack.c.b16 %v1363, %v1357
        %v1484 = vpack.c.b16 %v1364, %v1358
        %v1485 = vpack.c.b16 %v1365, %v1359
        %v1486 = vpack.c.b16 %v1366, %v1360
        %v1487 = vpack.c.b16 %v1367, %v1361
        %v1488 = vpack.c.b16 %v1374, %v1368
        %v1489 = vpack.c.b16 %v1375, %v1369
        %v1490 = vpack.c.b16 %v1376, %v1370
        %v1491 = vpack.c.b16 %v1377, %v1371
        %v1492 = vpack.c.b16 %v1378, %v1372
        %v1493 = vpack.c.b16 %v1379, %v1373
        %v1494 = vpack.c.b16 %v1386, %v1380
        %v1495 = vpack.c.b16 %v1387, %v1381
        %v1496 = vpack.c.b16 %v1388, %v1382
        %v1497 = vpack.c.b16 %v1389, %v1383
        %v1498 = vpack.c.b16 %v1390, %v1384
        %v1499 = vpack.c.b16 %v1391, %v1385
        %v1500 = vpack.c.b16 %v1398, %v1392
        %v1501 = vpack.c.b16 %v1399, %v1393
        %v1502 = vpack.c.b16 %v1400, %v1394
        %v1503 = vpack.c.b16 %v1401, %v1395
        %v1504 = vpack.c.b16 %v1402, %v1396
        %v1505 = vpack.c.b16 %v1403, %v1397
        %v1506 = vpack.c.b16 %v1410, %v1404
        %v1507 = vpack.c.b16 %v1411, %v1405
        %v1508 = vpack.c.b16 %v1412, %v1406
        %v1509 = vpack.c.b16 %v1413, %v1407
        %v1510 = vpack.c.b16 %v1414, %v1408
        %v1511 = vpack.c.b16 %v1415, %v1409
        %1608 = vmatprep.subr.bf16.mxu0 %v1459
        %1609 = vmatpush1.bf16.msra.mxu0 %v1458
        %1610 = vmatprep.subr.bf16.mxu0 %v1453
        %1611 = vmatpush1.bf16.msra.mxu0 %v1452
        %1612 = vmatprep.subr.bf16.mxu0 %v1447
        %1613 = vmatpush1.bf16.msra.mxu0 %v1446
        %1614 = vmatprep.subr.bf16.mxu0 %v1441
        %1615 = vmatpush1.bf16.msra.mxu0 %v1440
        %1616 = vmatprep.subr.bf16.mxu0 %v1435
        %1617 = vmatpush1.bf16.msra.mxu0 %v1434
        %1618 = vmatprep.subr.bf16.mxu0 %v1429
        %1619 = vmatpush1.bf16.msra.mxu0 %v1428
        %1620 = vmatprep.subr.bf16.mxu0 %v1423
        %1621 = vmatpush1.bf16.msra.mxu0 %v1422
        %1622 = vmatprep.subr.bf16.mxu0 %v1417
        %1623 = vmatpush1.bf16.msra.mxu0 %v1416
        %1624 = vmatprep.subr.bf16.mxu0 %v1507
        %1625 = vmatpush2.bf16.msra.mxu0 %v1506
        %1626 = vmatprep.subr.bf16.mxu0 %v1501
        %1627 = vmatpush2.bf16.msra.mxu0 %v1500
        %1628 = vmatprep.subr.bf16.mxu0 %v1495
        %1629 = vmatpush2.bf16.msra.mxu0 %v1494
        %1630 = vmatprep.subr.bf16.mxu0 %v1489
        %1631 = vmatpush2.bf16.msra.mxu0 %v1488
        %1632 = vmatprep.subr.bf16.mxu0 %v1483
        %1633 = vmatpush2.bf16.msra.mxu0 %v1482
        %1634 = vmatprep.subr.bf16.mxu0 %v1477
        %1635 = vmatpush2.bf16.msra.mxu0 %v1476
        %1636 = vmatprep.subr.bf16.mxu0 %v1471
        %1637 = vmatpush2.bf16.msra.mxu0 %v1470
        %1638 = vmatprep.subr.bf16.mxu0 %v1465
        %1639 = vmatpush2.bf16.msra.mxu0 %v1464
        %1640 = vmatprep.mubr.bf16.mxu0 %v1031
        %1641 = vmatmul.mubr.bf16.gmra.mxu0 %v1030
        %v1642 = vpop.f32.mrf.mxu0
        %v1643 = vadd.f32 0.0, %v1642
        %v1644 = vpop.f32.mrf.mxu0
        %v1645 = vadd.f32 0.0, %v1644
        %v1646 = vpop.f32.mrf.mxu0
        %v1647 = vadd.f32 0.0, %v1646
        %v1648 = vpop.f32.mrf.mxu0
        %v1649 = vadd.f32 0.0, %v1648
        %1650 = vdwg.mxu0
        %1651 = vmatprep.subr.bf16.mxu0 %v1461
        %1652 = vmatpush1.bf16.msra.mxu0 %v1460
        %1653 = vmatprep.subr.bf16.mxu0 %v1455
        %1654 = vmatpush1.bf16.msra.mxu0 %v1454
        %1655 = vmatprep.subr.bf16.mxu0 %v1449
        %1656 = vmatpush1.bf16.msra.mxu0 %v1448
        %1657 = vmatprep.subr.bf16.mxu0 %v1443
        %1658 = vmatpush1.bf16.msra.mxu0 %v1442
        %1659 = vmatprep.subr.bf16.mxu0 %v1437
        %1660 = vmatpush1.bf16.msra.mxu0 %v1436
        %1661 = vmatprep.subr.bf16.mxu0 %v1431
        %1662 = vmatpush1.bf16.msra.mxu0 %v1430
        %1663 = vmatprep.subr.bf16.mxu0 %v1425
        %1664 = vmatpush1.bf16.msra.mxu0 %v1424
        %1665 = vmatprep.subr.bf16.mxu0 %v1419
        %1666 = vmatpush1.bf16.msra.mxu0 %v1418
        %1667 = vmatprep.subr.bf16.mxu0 %v1509
        %1668 = vmatpush2.bf16.msra.mxu0 %v1508
        %1669 = vmatprep.subr.bf16.mxu0 %v1503
        %1670 = vmatpush2.bf16.msra.mxu0 %v1502
        %1671 = vmatprep.subr.bf16.mxu0 %v1497
        %1672 = vmatpush2.bf16.msra.mxu0 %v1496
        %1673 = vmatprep.subr.bf16.mxu0 %v1491
        %1674 = vmatpush2.bf16.msra.mxu0 %v1490
        %1675 = vmatprep.subr.bf16.mxu0 %v1485
        %1676 = vmatpush2.bf16.msra.mxu0 %v1484
        %1677 = vmatprep.subr.bf16.mxu0 %v1479
        %1678 = vmatpush2.bf16.msra.mxu0 %v1478
        %1679 = vmatprep.subr.bf16.mxu0 %v1473
        %1680 = vmatpush2.bf16.msra.mxu0 %v1472
        %1681 = vmatprep.subr.bf16.mxu0 %v1467
        %1682 = vmatpush2.bf16.msra.mxu0 %v1466
        %1683 = vmatprep.mubr.bf16.mxu0 %v1031
        %1684 = vmatmul.mubr.bf16.gmra.mxu0 %v1030
        %v1685 = vpop.f32.mrf.mxu0
        %v1686 = vadd.f32 0.0, %v1685
        %v1687 = vpop.f32.mrf.mxu0
        %v1688 = vadd.f32 0.0, %v1687
        %v1689 = vpop.f32.mrf.mxu0
        %v1690 = vadd.f32 0.0, %v1689
        %v1691 = vpop.f32.mrf.mxu0
        %v1692 = vadd.f32 0.0, %v1691
        %1693 = vdwg.mxu0
        %1694 = vmatprep.subr.bf16.mxu0 %v1463
        %1695 = vmatpush1.bf16.msra.mxu0 %v1462
        %1696 = vmatprep.subr.bf16.mxu0 %v1457
        %1697 = vmatpush1.bf16.msra.mxu0 %v1456
        %1698 = vmatprep.subr.bf16.mxu0 %v1451
        %1699 = vmatpush1.bf16.msra.mxu0 %v1450
        %1700 = vmatprep.subr.bf16.mxu0 %v1445
        %1701 = vmatpush1.bf16.msra.mxu0 %v1444
        %1702 = vmatprep.subr.bf16.mxu0 %v1439
        %1703 = vmatpush1.bf16.msra.mxu0 %v1438
        %1704 = vmatprep.subr.bf16.mxu0 %v1433
        %1705 = vmatpush1.bf16.msra.mxu0 %v1432
        %1706 = vmatprep.subr.bf16.mxu0 %v1427
        %1707 = vmatpush1.bf16.msra.mxu0 %v1426
        %1708 = vmatprep.subr.bf16.mxu0 %v1421
        %1709 = vmatpush1.bf16.msra.mxu0 %v1420
        %1710 = vmatprep.subr.bf16.mxu0 %v1511
        %1711 = vmatpush2.bf16.msra.mxu0 %v1510
        %1712 = vmatprep.subr.bf16.mxu0 %v1505
        %1713 = vmatpush2.bf16.msra.mxu0 %v1504
        %1714 = vmatprep.subr.bf16.mxu0 %v1499
        %1715 = vmatpush2.bf16.msra.mxu0 %v1498
        %1716 = vmatprep.subr.bf16.mxu0 %v1493
        %1717 = vmatpush2.bf16.msra.mxu0 %v1492
        %1718 = vmatprep.subr.bf16.mxu0 %v1487
        %1719 = vmatpush2.bf16.msra.mxu0 %v1486
        %1720 = vmatprep.subr.bf16.mxu0 %v1481
        %1721 = vmatpush2.bf16.msra.mxu0 %v1480
        %1722 = vmatprep.subr.bf16.mxu0 %v1475
        %1723 = vmatpush2.bf16.msra.mxu0 %v1474
        %1724 = vmatprep.subr.bf16.mxu0 %v1469
        %1725 = vmatpush2.bf16.msra.mxu0 %v1468
        %1726 = vmatprep.mubr.bf16.mxu0 %v1031
        %1727 = vmatmul.mubr.bf16.gmra.mxu0 %v1030
        %v1728 = vpop.f32.mrf.mxu0
        %v1729 = vadd.f32 0.0, %v1728
        %v1730 = vpop.f32.mrf.mxu0
        %v1731 = vadd.f32 0.0, %v1730
        %v1732 = vpop.f32.mrf.mxu0
        %v1733 = vadd.f32 0.0, %v1732
        %v1734 = vpop.f32.mrf.mxu0
        %v1735 = vadd.f32 0.0, %v1734
        %1736 = vdwg.mxu0
        %v1737 = vlaneseq
        %v1738 = vshrl.u32 %v1737, 7
        %v1739 = vlaneseq
        %v1740 = vand.u32 %v1739, 127
        %vm1741 = vcmp.le.s32.totalorder %v1740, %v1738
        %v1742 = vsel %vm1741, 0.0, -1e+09
        %v1743 = vld [vmem:[%s2] sm:$0x1]
        %v1744 = vld [vmem:[%s2 + $0x1] sm:$0x1]
        %v1747 = vlaneseq
        %v1748 = vshrl.u32 %v1747, 7
        %v1749 = vsub.s32 0, %v1748
        %v1750 = vrot.slane %v1743, %v1749
        %v1751 = vlaneseq
        %v1752 = vshrl.u32 %v1751, 7
        %v1753 = vsub.s32 0, %v1752
        %v1754 = vrot.slane %v1744, %v1753
        %v1757 = vadd.f32 %v1742, %v1750
        %v1758 = vadd.f32 %v1742, %v1754
        %v1759 = vmul.f32 %v1643, %v985
        %v1760 = vmul.f32 %v1647, %v987
        %1761 = vrot.lane.b32.xlu0 %v1643, 64
        %v1762 = vpop.permute.xlu0 %1761
        %1763 = vrot.lane.b32.xlu0 %v1647, 64
        %v1764 = vpop.permute.xlu0 %1763
        %v1765 = vmul.f32 %v1762, %v989
        %v1766 = vmul.f32 %v1764, %v991
        %v1767 = vadd.f32 %v1759, %v1765
        %v1768 = vadd.f32 %v1760, %v1766
        %v1769 = vmul.f32 %v1767, 0.088388346
        %v1770 = vmul.f32 %v1768, 0.088388346
        %v1771 = vmul.f32 %v1686, %v985
        %v1772 = vmul.f32 %v1690, %v987
        %1773 = vrot.lane.b32.xlu0 %v1686, 64
        %v1774 = vpop.permute.xlu0 %1773
        %1775 = vrot.lane.b32.xlu0 %v1690, 64
        %v1776 = vpop.permute.xlu0 %1775
        %v1777 = vmul.f32 %v1774, %v989
        %v1778 = vmul.f32 %v1776, %v991
        %v1779 = vadd.f32 %v1771, %v1777
        %v1780 = vadd.f32 %v1772, %v1778
        %v1781 = vpack.c.bf16 %v1769, %v1769
        %v1782 = vpack.c.bf16 %v1770, %v1770
        %v1783 = vpack.c.bf16 %v1779, %v1779
        %v1784 = vpack.c.bf16 %v1780, %v1780
        %1785 = vmatprep.subr.bf16.mxu0 0
        %1786 = vmatpush1.bf16.xpose.msra.mxu0 0
        %1787 = vmatprep.subr.bf16.mxu0 0
        %1788 = vmatpush1.bf16.xpose.msra.mxu0 0
        %1789 = vmatprep.subr.bf16.mxu0 0
        %1790 = vmatpush1.bf16.xpose.msra.mxu0 0
        %1791 = vmatprep.subr.bf16.mxu0 0
        %1792 = vmatpush1.bf16.xpose.msra.mxu0 0
        %1793 = vmatprep.subr.bf16.mxu0 0
        %1794 = vmatpush1.bf16.xpose.msra.mxu0 0
        %1795 = vmatprep.subr.bf16.mxu0 0
        %1796 = vmatpush1.bf16.xpose.msra.mxu0 0
        %1797 = vmatprep.subr.bf16.mxu0 0
        %1798 = vmatpush1.bf16.xpose.msra.mxu0 0
        %1799 = vmatprep.subr.bf16.mxu0 0
        %1800 = vmatpush1.bf16.xpose.msra.mxu0 %v1783
        %1801 = vmatprep.subr.bf16.mxu0 0
        %1802 = vmatpush2.bf16.xpose.msra.mxu0 0
        %1803 = vmatprep.subr.bf16.mxu0 0
        %1804 = vmatpush2.bf16.xpose.msra.mxu0 0
        %1805 = vmatprep.subr.bf16.mxu0 0
        %1806 = vmatpush2.bf16.xpose.msra.mxu0 0
        %1807 = vmatprep.subr.bf16.mxu0 0
        %1808 = vmatpush2.bf16.xpose.msra.mxu0 0
        %1809 = vmatprep.subr.bf16.mxu0 0
        %1810 = vmatpush2.bf16.xpose.msra.mxu0 0
        %1811 = vmatprep.subr.bf16.mxu0 0
        %1812 = vmatpush2.bf16.xpose.msra.mxu0 0
        %1813 = vmatprep.subr.bf16.mxu0 0
        %1814 = vmatpush2.bf16.xpose.msra.mxu0 0
        %1815 = vmatprep.subr.bf16.mxu0 0
        %1816 = vmatpush2.bf16.xpose.msra.mxu0 0
        %1817 = vmatprep.mubr.bf16.mxu0 0
        %1818 = vmatmul.mubr.bf16.gmra.mxu0 %v1781
        %v1819 = vpop.f32.mrf.mxu0
        %v1820 = vadd.f32 %v1757, %v1819
        %v1821 = vpop.f32.mrf.mxu0
        %v1822 = vpop.f32.mrf.mxu0
        %v1823 = vpop.f32.mrf.mxu0
        %1824 = vdwg.mxu0
        %1825 = vmatprep.subr.bf16.mxu0 0
        %1826 = vmatpush1.bf16.xpose.msra.mxu0 0
        %1827 = vmatprep.subr.bf16.mxu0 0
        %1828 = vmatpush1.bf16.xpose.msra.mxu0 0
        %1829 = vmatprep.subr.bf16.mxu0 0
        %1830 = vmatpush1.bf16.xpose.msra.mxu0 0
        %1831 = vmatprep.subr.bf16.mxu0 0
        %1832 = vmatpush1.bf16.xpose.msra.mxu0 0
        %1833 = vmatprep.subr.bf16.mxu0 0
        %1834 = vmatpush1.bf16.xpose.msra.mxu0 0
        %1835 = vmatprep.subr.bf16.mxu0 0
        %1836 = vmatpush1.bf16.xpose.msra.mxu0 0
        %1837 = vmatprep.subr.bf16.mxu0 0
        %1838 = vmatpush1.bf16.xpose.msra.mxu0 0
        %1839 = vmatprep.subr.bf16.mxu0 0
        %1840 = vmatpush1.bf16.xpose.msra.mxu0 %v1784
        %1841 = vmatprep.subr.bf16.mxu0 0
        %1842 = vmatpush2.bf16.xpose.msra.mxu0 0
        %1843 = vmatprep.subr.bf16.mxu0 0
        %1844 = vmatpush2.bf16.xpose.msra.mxu0 0
        %1845 = vmatprep.subr.bf16.mxu0 0
        %1846 = vmatpush2.bf16.xpose.msra.mxu0 0
        %1847 = vmatprep.subr.bf16.mxu0 0
        %1848 = vmatpush2.bf16.xpose.msra.mxu0 0
        %1849 = vmatprep.subr.bf16.mxu0 0
        %1850 = vmatpush2.bf16.xpose.msra.mxu0 0
        %1851 = vmatprep.subr.bf16.mxu0 0
        %1852 = vmatpush2.bf16.xpose.msra.mxu0 0
        %1853 = vmatprep.subr.bf16.mxu0 0
        %1854 = vmatpush2.bf16.xpose.msra.mxu0 0
        %1855 = vmatprep.subr.bf16.mxu0 0
        %1856 = vmatpush2.bf16.xpose.msra.mxu0 0
        %1857 = vmatprep.mubr.bf16.mxu0 0
        %1858 = vmatmul.mubr.bf16.gmra.mxu0 %v1782
        %v1859 = vpop.f32.mrf.mxu0
        %v1860 = vadd.f32 %v1758, %v1859
        %v1861 = vpop.f32.mrf.mxu0
        %v1862 = vpop.f32.mrf.mxu0
        %v1863 = vpop.f32.mrf.mxu0
        %1864 = vdwg.mxu0
        %vm1865 = vcmask 64512
        %v1866 = vsel %vm1865, %v1820, -inf
        %1867 = vmax.xlane.f32.xlu0 %v1866
        %v1868 = vpop.xlane.xlu0 %1867
        %v1869 = vsel %vm1865, %v1860, -inf
        %1870 = vmax.xlane.f32.xlu0 %v1869
        %v1871 = vpop.xlane.xlu0 %1870
        %v1872 = vsub.f32 %v1820, %v1868
        %v1873 = vsub.f32 %v1860, %v1871
        %v1874 = vmul.f32 %v1872, 1.442695
        %v1875 = vpow.pop %v1874
        %v1876 = vmul.f32 %v1873, 1.442695
        %v1877 = vpow.pop %v1876
        %v1878 = vsel %vm1865, %v1875, 0.0
        %1879 = vadd.xlane.f32.xlu0 %v1878
        %v1880 = vpop.xlane.xlu0 %1879
        %v1881 = vsel %vm1865, %v1877, 0.0
        %1882 = vadd.xlane.f32.xlu0 %v1881
        %v1883 = vpop.xlane.xlu0 %1882
        %v1884 = vrcp.pop %v1880
        %v1885 = vrcp.pop %v1883
        %v1886 = vmul.f32 %v1875, %v1884
        %v1887 = vmul.f32 %v1877, %v1885
        %v1888 = vpack.c.bf16 %v1886, %v1886
        %v1889 = vpack.c.bf16 %v1887, %v1887
        %v1890 = vpack.c.bf16 %v1729, %v1729
        %v1891 = vpack.c.bf16 %v1733, %v1733
        %v1893 = vsel %vm1865, %v1888, 0
        %vm1895 = vcmask 1043456
        %v1897 = vsel %vm1895, %v1890, 0
        %1899 = vmatprep.subr.bf16.mxu0 0
        %1900 = vmatpush1.bf16.msra.mxu0 0
        %1901 = vmatprep.subr.bf16.mxu0 0
        %1902 = vmatpush1.bf16.msra.mxu0 0
        %1903 = vmatprep.subr.bf16.mxu0 0
        %1904 = vmatpush1.bf16.msra.mxu0 0
        %1905 = vmatprep.subr.bf16.mxu0 0
        %1906 = vmatpush1.bf16.msra.mxu0 0
        %1907 = vmatprep.subr.bf16.mxu0 0
        %1908 = vmatpush1.bf16.msra.mxu0 0
        %1909 = vmatprep.subr.bf16.mxu0 0
        %1910 = vmatpush1.bf16.msra.mxu0 0
        %1911 = vmatprep.subr.bf16.mxu0 0
        %1912 = vmatpush1.bf16.msra.mxu0 0
        %1913 = vmatprep.subr.bf16.mxu0 0
        %1914 = vmatpush1.bf16.msra.mxu0 %v1897
        %1915 = vmatprep.subr.bf16.mxu0 0
        %1916 = vmatpush2.bf16.msra.mxu0 0
        %1917 = vmatprep.subr.bf16.mxu0 0
        %1918 = vmatpush2.bf16.msra.mxu0 0
        %1919 = vmatprep.subr.bf16.mxu0 0
        %1920 = vmatpush2.bf16.msra.mxu0 0
        %1921 = vmatprep.subr.bf16.mxu0 0
        %1922 = vmatpush2.bf16.msra.mxu0 0
        %1923 = vmatprep.subr.bf16.mxu0 0
        %1924 = vmatpush2.bf16.msra.mxu0 0
        %1925 = vmatprep.subr.bf16.mxu0 0
        %1926 = vmatpush2.bf16.msra.mxu0 0
        %1927 = vmatprep.subr.bf16.mxu0 0
        %1928 = vmatpush2.bf16.msra.mxu0 0
        %1929 = vmatprep.subr.bf16.mxu0 0
        %1930 = vmatpush2.bf16.msra.mxu0 0
        %1931 = vmatprep.mubr.bf16.mxu0 0
        %1932 = vmatmul.mubr.bf16.gmra.mxu0 %v1893
        %v1933 = vpop.f32.mrf.mxu0
        %v1934 = vadd.f32 0.0, %v1933
        %v1935 = vpop.f32.mrf.mxu0
        %v1936 = vpop.f32.mrf.mxu0
        %v1937 = vpop.f32.mrf.mxu0
        %1938 = vdwg.mxu0
        %v1940 = vsel %vm1865, %v1889, 0
        %v1943 = vsel %vm1895, %v1891, 0
        %1945 = vmatprep.subr.bf16.mxu0 0
        %1946 = vmatpush1.bf16.msra.mxu0 0
        %1947 = vmatprep.subr.bf16.mxu0 0
        %1948 = vmatpush1.bf16.msra.mxu0 0
        %1949 = vmatprep.subr.bf16.mxu0 0
        %1950 = vmatpush1.bf16.msra.mxu0 0
        %1951 = vmatprep.subr.bf16.mxu0 0
        %1952 = vmatpush1.bf16.msra.mxu0 0
        %1953 = vmatprep.subr.bf16.mxu0 0
        %1954 = vmatpush1.bf16.msra.mxu0 0
        %1955 = vmatprep.subr.bf16.mxu0 0
        %1956 = vmatpush1.bf16.msra.mxu0 0
        %1957 = vmatprep.subr.bf16.mxu0 0
        %1958 = vmatpush1.bf16.msra.mxu0 0
        %1959 = vmatprep.subr.bf16.mxu0 0
        %1960 = vmatpush1.bf16.msra.mxu0 %v1943
        %1961 = vmatprep.subr.bf16.mxu0 0
        %1962 = vmatpush2.bf16.msra.mxu0 0
        %1963 = vmatprep.subr.bf16.mxu0 0
        %1964 = vmatpush2.bf16.msra.mxu0 0
        %1965 = vmatprep.subr.bf16.mxu0 0
        %1966 = vmatpush2.bf16.msra.mxu0 0
        %1967 = vmatprep.subr.bf16.mxu0 0
        %1968 = vmatpush2.bf16.msra.mxu0 0
        %1969 = vmatprep.subr.bf16.mxu0 0
        %1970 = vmatpush2.bf16.msra.mxu0 0
        %1971 = vmatprep.subr.bf16.mxu0 0
        %1972 = vmatpush2.bf16.msra.mxu0 0
        %1973 = vmatprep.subr.bf16.mxu0 0
        %1974 = vmatpush2.bf16.msra.mxu0 0
        %1975 = vmatprep.subr.bf16.mxu0 0
        %1976 = vmatpush2.bf16.msra.mxu0 0
        %1977 = vmatprep.mubr.bf16.mxu0 0
        %1978 = vmatmul.mubr.bf16.gmra.mxu0 %v1940
        %v1979 = vpop.f32.mrf.mxu0
        %v1980 = vadd.f32 0.0, %v1979
        %v1981 = vpop.f32.mrf.mxu0
        %v1982 = vpop.f32.mrf.mxu0
        %v1983 = vpop.f32.mrf.mxu0
        %1984 = vdwg.mxu0
        %1985 = vst [vmem:[#allocation2] sm:$0xff] %v1934
        %1986 = vst [vmem:[#allocation2 + $0x10] sm:$0xff] %v1980
        %v1987 = vmul.f32 %v1645, %v986
        %v1988 = vmul.f32 %v1649, %v988
        %1989 = vrot.lane.b32.xlu0 %v1645, 64
        %v1990 = vpop.permute.xlu0 %1989
        %1991 = vrot.lane.b32.xlu0 %v1649, 64
        %v1992 = vpop.permute.xlu0 %1991
        %v1993 = vmul.f32 %v1990, %v990
        %v1994 = vmul.f32 %v1992, %v992
        %v1995 = vadd.f32 %v1987, %v1993
        %v1996 = vadd.f32 %v1988, %v1994
        %v1997 = vmul.f32 %v1995, 0.088388346
        %v1998 = vmul.f32 %v1996, 0.088388346
        %v1999 = vmul.f32 %v1688, %v986
        %v2000 = vmul.f32 %v1692, %v988
        %2001 = vrot.lane.b32.xlu0 %v1688, 64
        %v2002 = vpop.permute.xlu0 %2001
        %2003 = vrot.lane.b32.xlu0 %v1692, 64
        %v2004 = vpop.permute.xlu0 %2003
        %v2005 = vmul.f32 %v2002, %v990
        %v2006 = vmul.f32 %v2004, %v992
        %v2007 = vadd.f32 %v1999, %v2005
        %v2008 = vadd.f32 %v2000, %v2006
        %v2009 = vpack.c.bf16 %v1997, %v1997
        %v2010 = vpack.c.bf16 %v1998, %v1998
        %v2011 = vpack.c.bf16 %v2007, %v2007
        %v2012 = vpack.c.bf16 %v2008, %v2008
        %2013 = vmatprep.subr.bf16.mxu0 0
        %2014 = vmatpush1.bf16.xpose.msra.mxu0 0
        %2015 = vmatprep.subr.bf16.mxu0 0
        %2016 = vmatpush1.bf16.xpose.msra.mxu0 0
        %2017 = vmatprep.subr.bf16.mxu0 0
        %2018 = vmatpush1.bf16.xpose.msra.mxu0 0
        %2019 = vmatprep.subr.bf16.mxu0 0
        %2020 = vmatpush1.bf16.xpose.msra.mxu0 0
        %2021 = vmatprep.subr.bf16.mxu0 0
        %2022 = vmatpush1.bf16.xpose.msra.mxu0 0
        %2023 = vmatprep.subr.bf16.mxu0 0
        %2024 = vmatpush1.bf16.xpose.msra.mxu0 0
        %2025 = vmatprep.subr.bf16.mxu0 0
        %2026 = vmatpush1.bf16.xpose.msra.mxu0 0
        %2027 = vmatprep.subr.bf16.mxu0 0
        %2028 = vmatpush1.bf16.xpose.msra.mxu0 %v2011
        %2029 = vmatprep.subr.bf16.mxu0 0
        %2030 = vmatpush2.bf16.xpose.msra.mxu0 0
        %2031 = vmatprep.subr.bf16.mxu0 0
        %2032 = vmatpush2.bf16.xpose.msra.mxu0 0
        %2033 = vmatprep.subr.bf16.mxu0 0
        %2034 = vmatpush2.bf16.xpose.msra.mxu0 0
        %2035 = vmatprep.subr.bf16.mxu0 0
        %2036 = vmatpush2.bf16.xpose.msra.mxu0 0
        %2037 = vmatprep.subr.bf16.mxu0 0
        %2038 = vmatpush2.bf16.xpose.msra.mxu0 0
        %2039 = vmatprep.subr.bf16.mxu0 0
        %2040 = vmatpush2.bf16.xpose.msra.mxu0 0
        %2041 = vmatprep.subr.bf16.mxu0 0
        %2042 = vmatpush2.bf16.xpose.msra.mxu0 0
        %2043 = vmatprep.subr.bf16.mxu0 0
        %2044 = vmatpush2.bf16.xpose.msra.mxu0 0
        %2045 = vmatprep.mubr.bf16.mxu0 0
        %2046 = vmatmul.mubr.bf16.gmra.mxu0 %v2009
        %v2047 = vpop.f32.mrf.mxu0
        %v2048 = vadd.f32 %v1757, %v2047
        %v2049 = vpop.f32.mrf.mxu0
        %v2050 = vpop.f32.mrf.mxu0
        %v2051 = vpop.f32.mrf.mxu0
        %2052 = vdwg.mxu0
        %2053 = vmatprep.subr.bf16.mxu0 0
        %2054 = vmatpush1.bf16.xpose.msra.mxu0 0
        %2055 = vmatprep.subr.bf16.mxu0 0
        %2056 = vmatpush1.bf16.xpose.msra.mxu0 0
        %2057 = vmatprep.subr.bf16.mxu0 0
        %2058 = vmatpush1.bf16.xpose.msra.mxu0 0
        %2059 = vmatprep.subr.bf16.mxu0 0
        %2060 = vmatpush1.bf16.xpose.msra.mxu0 0
        %2061 = vmatprep.subr.bf16.mxu0 0
        %2062 = vmatpush1.bf16.xpose.msra.mxu0 0
        %2063 = vmatprep.subr.bf16.mxu0 0
        %2064 = vmatpush1.bf16.xpose.msra.mxu0 0
        %2065 = vmatprep.subr.bf16.mxu0 0
        %2066 = vmatpush1.bf16.xpose.msra.mxu0 0
        %2067 = vmatprep.subr.bf16.mxu0 0
        %2068 = vmatpush1.bf16.xpose.msra.mxu0 %v2012
        %2069 = vmatprep.subr.bf16.mxu0 0
        %2070 = vmatpush2.bf16.xpose.msra.mxu0 0
        %2071 = vmatprep.subr.bf16.mxu0 0
        %2072 = vmatpush2.bf16.xpose.msra.mxu0 0
        %2073 = vmatprep.subr.bf16.mxu0 0
        %2074 = vmatpush2.bf16.xpose.msra.mxu0 0
        %2075 = vmatprep.subr.bf16.mxu0 0
        %2076 = vmatpush2.bf16.xpose.msra.mxu0 0
        %2077 = vmatprep.subr.bf16.mxu0 0
        %2078 = vmatpush2.bf16.xpose.msra.mxu0 0
        %2079 = vmatprep.subr.bf16.mxu0 0
        %2080 = vmatpush2.bf16.xpose.msra.mxu0 0
        %2081 = vmatprep.subr.bf16.mxu0 0
        %2082 = vmatpush2.bf16.xpose.msra.mxu0 0
        %2083 = vmatprep.subr.bf16.mxu0 0
        %2084 = vmatpush2.bf16.xpose.msra.mxu0 0
        %2085 = vmatprep.mubr.bf16.mxu0 0
        %2086 = vmatmul.mubr.bf16.gmra.mxu0 %v2010
        %v2087 = vpop.f32.mrf.mxu0
        %v2088 = vadd.f32 %v1758, %v2087
        %v2089 = vpop.f32.mrf.mxu0
        %v2090 = vpop.f32.mrf.mxu0
        %v2091 = vpop.f32.mrf.mxu0
        %2092 = vdwg.mxu0
        %v2093 = vsel %vm1865, %v2048, -inf
        %2094 = vmax.xlane.f32.xlu0 %v2093
        %v2095 = vpop.xlane.xlu0 %2094
        %v2096 = vsel %vm1865, %v2088, -inf
        %2097 = vmax.xlane.f32.xlu0 %v2096
        %v2098 = vpop.xlane.xlu0 %2097
        %v2099 = vsub.f32 %v2048, %v2095
        %v2100 = vsub.f32 %v2088, %v2098
        %v2101 = vmul.f32 %v2099, 1.442695
        %v2102 = vpow.pop %v2101
        %v2103 = vmul.f32 %v2100, 1.442695
        %v2104 = vpow.pop %v2103
        %v2105 = vsel %vm1865, %v2102, 0.0
        %2106 = vadd.xlane.f32.xlu0 %v2105
        %v2107 = vpop.xlane.xlu0 %2106
        %v2108 = vsel %vm1865, %v2104, 0.0
        %2109 = vadd.xlane.f32.xlu0 %v2108
        %v2110 = vpop.xlane.xlu0 %2109
        %v2111 = vrcp.pop %v2107
        %v2112 = vrcp.pop %v2110
        %v2113 = vmul.f32 %v2102, %v2111
        %v2114 = vmul.f32 %v2104, %v2112
        %v2115 = vpack.c.bf16 %v2113, %v2113
        %v2116 = vpack.c.bf16 %v2114, %v2114
        %v2117 = vpack.c.bf16 %v1731, %v1731
        %v2118 = vpack.c.bf16 %v1735, %v1735
        %v2120 = vsel %vm1865, %v2115, 0
        %v2123 = vsel %vm1895, %v2117, 0
        %2125 = vmatprep.subr.bf16.mxu0 0
        %2126 = vmatpush1.bf16.msra.mxu0 0
        %2127 = vmatprep.subr.bf16.mxu0 0
        %2128 = vmatpush1.bf16.msra.mxu0 0
        %2129 = vmatprep.subr.bf16.mxu0 0
        %2130 = vmatpush1.bf16.msra.mxu0 0
        %2131 = vmatprep.subr.bf16.mxu0 0
        %2132 = vmatpush1.bf16.msra.mxu0 0
        %2133 = vmatprep.subr.bf16.mxu0 0
        %2134 = vmatpush1.bf16.msra.mxu0 0
        %2135 = vmatprep.subr.bf16.mxu0 0
        %2136 = vmatpush1.bf16.msra.mxu0 0
        %2137 = vmatprep.subr.bf16.mxu0 0
        %2138 = vmatpush1.bf16.msra.mxu0 0
        %2139 = vmatprep.subr.bf16.mxu0 0
        %2140 = vmatpush1.bf16.msra.mxu0 %v2123
        %2141 = vmatprep.subr.bf16.mxu0 0
        %2142 = vmatpush2.bf16.msra.mxu0 0
        %2143 = vmatprep.subr.bf16.mxu0 0
        %2144 = vmatpush2.bf16.msra.mxu0 0
        %2145 = vmatprep.subr.bf16.mxu0 0
        %2146 = vmatpush2.bf16.msra.mxu0 0
        %2147 = vmatprep.subr.bf16.mxu0 0
        %2148 = vmatpush2.bf16.msra.mxu0 0
        %2149 = vmatprep.subr.bf16.mxu0 0
        %2150 = vmatpush2.bf16.msra.mxu0 0
        %2151 = vmatprep.subr.bf16.mxu0 0
        %2152 = vmatpush2.bf16.msra.mxu0 0
        %2153 = vmatprep.subr.bf16.mxu0 0
        %2154 = vmatpush2.bf16.msra.mxu0 0
        %2155 = vmatprep.subr.bf16.mxu0 0
        %2156 = vmatpush2.bf16.msra.mxu0 0
        %2157 = vmatprep.mubr.bf16.mxu0 0
        %2158 = vmatmul.mubr.bf16.gmra.mxu0 %v2120
        %v2159 = vpop.f32.mrf.mxu0
        %v2160 = vadd.f32 0.0, %v2159
        %v2161 = vpop.f32.mrf.mxu0
        %v2162 = vpop.f32.mrf.mxu0
        %v2163 = vpop.f32.mrf.mxu0
        %2164 = vdwg.mxu0
        %v2166 = vsel %vm1865, %v2116, 0
        %v2169 = vsel %vm1895, %v2118, 0
        %2171 = vmatprep.subr.bf16.mxu0 0
        %2172 = vmatpush1.bf16.msra.mxu0 0
        %2173 = vmatprep.subr.bf16.mxu0 0
        %2174 = vmatpush1.bf16.msra.mxu0 0
        %2175 = vmatprep.subr.bf16.mxu0 0
        %2176 = vmatpush1.bf16.msra.mxu0 0
        %2177 = vmatprep.subr.bf16.mxu0 0
        %2178 = vmatpush1.bf16.msra.mxu0 0
        %2179 = vmatprep.subr.bf16.mxu0 0
        %2180 = vmatpush1.bf16.msra.mxu0 0
        %2181 = vmatprep.subr.bf16.mxu0 0
        %2182 = vmatpush1.bf16.msra.mxu0 0
        %2183 = vmatprep.subr.bf16.mxu0 0
        %2184 = vmatpush1.bf16.msra.mxu0 0
        %2185 = vmatprep.subr.bf16.mxu0 0
        %2186 = vmatpush1.bf16.msra.mxu0 %v2169
        %2187 = vmatprep.subr.bf16.mxu0 0
        %2188 = vmatpush2.bf16.msra.mxu0 0
        %2189 = vmatprep.subr.bf16.mxu0 0
        %2190 = vmatpush2.bf16.msra.mxu0 0
        %2191 = vmatprep.subr.bf16.mxu0 0
        %2192 = vmatpush2.bf16.msra.mxu0 0
        %2193 = vmatprep.subr.bf16.mxu0 0
        %2194 = vmatpush2.bf16.msra.mxu0 0
        %2195 = vmatprep.subr.bf16.mxu0 0
        %2196 = vmatpush2.bf16.msra.mxu0 0
        %2197 = vmatprep.subr.bf16.mxu0 0
        %2198 = vmatpush2.bf16.msra.mxu0 0
        %2199 = vmatprep.subr.bf16.mxu0 0
        %2200 = vmatpush2.bf16.msra.mxu0 0
        %2201 = vmatprep.subr.bf16.mxu0 0
        %2202 = vmatpush2.bf16.msra.mxu0 0
        %2203 = vmatprep.mubr.bf16.mxu0 0
        %2204 = vmatmul.mubr.bf16.gmra.mxu0 %v2166
        %v2205 = vpop.f32.mrf.mxu0
        %v2206 = vadd.f32 0.0, %v2205
        %v2207 = vpop.f32.mrf.mxu0
        %v2208 = vpop.f32.mrf.mxu0
        %v2209 = vpop.f32.mrf.mxu0
        %2210 = vdwg.mxu0
        %2211 = vst [vmem:[#allocation2 + $0x8] sm:$0xff] %v2160
        %2212 = vst [vmem:[#allocation2 + $0x18] sm:$0xff] %v2206
        %v2213 = vld [vmem:[#allocation2] sm:$0xff]
        %v2214 = vld [vmem:[#allocation2 + $0x8] sm:$0xff]
        %v2215 = vld [vmem:[#allocation2 + $0x10] sm:$0xff]
        %v2216 = vld [vmem:[#allocation2 + $0x18] sm:$0xff]
        %v2217 = vpack.c.bf16 %v2215, %v2213
        %v2218 = vpack.c.bf16 %v2216, %v2214
        %v2219 = vld [vmem:[%s943] sm:$0xff]
        %v2220 = vld [vmem:[%s943 + $0x8] sm:$0xff]
        %v2221 = vld [vmem:[%s943 + $0x10] sm:$0xff]
        %v2222 = vld [vmem:[%s943 + $0x18] sm:$0xff]
        %v2223 = vld [vmem:[%s943 + $0x20] sm:$0xff]
        %v2224 = vld [vmem:[%s943 + $0x28] sm:$0xff]
        %v2225 = vld [vmem:[%s943 + $0x30] sm:$0xff]
        %v2226 = vld [vmem:[%s943 + $0x38] sm:$0xff]
        %v2227 = vld [vmem:[%s943 + $0x40] sm:$0xff]
        %v2228 = vld [vmem:[%s943 + $0x48] sm:$0xff]
        %v2229 = vld [vmem:[%s943 + $0x50] sm:$0xff]
        %v2230 = vld [vmem:[%s943 + $0x58] sm:$0xff]
        %v2231 = vld [vmem:[%s943 + $0x60] sm:$0xff]
        %v2232 = vld [vmem:[%s943 + $0x68] sm:$0xff]
        %v2233 = vld [vmem:[%s943 + $0x70] sm:$0xff]
        %v2234 = vld [vmem:[%s943 + $0x78] sm:$0xff]
        %v2235 = vld [vmem:[%s943 + $0x80] sm:$0xff]
        %v2236 = vld [vmem:[%s943 + $0x88] sm:$0xff]
        %v2237 = vld [vmem:[%s943 + $0x90] sm:$0xff]
        %v2238 = vld [vmem:[%s943 + $0x98] sm:$0xff]
        %v2239 = vld [vmem:[%s943 + $0xa0] sm:$0xff]
        %v2240 = vld [vmem:[%s943 + $0xa8] sm:$0xff]
        %v2241 = vld [vmem:[%s943 + $0xb0] sm:$0xff]
        %v2242 = vld [vmem:[%s943 + $0xb8] sm:$0xff]
        %v2243 = vld [vmem:[%s943 + $0xc0] sm:$0xff]
        %v2244 = vld [vmem:[%s943 + $0xc8] sm:$0xff]
        %v2245 = vld [vmem:[%s943 + $0xd0] sm:$0xff]
        %v2246 = vld [vmem:[%s943 + $0xd8] sm:$0xff]
        %v2247 = vld [vmem:[%s943 + $0xe0] sm:$0xff]
        %v2248 = vld [vmem:[%s943 + $0xe8] sm:$0xff]
        %v2249 = vld [vmem:[%s943 + $0xf0] sm:$0xff]
        %v2250 = vld [vmem:[%s943 + $0xf8] sm:$0xff]
        %v2283 = vunpack.c.l.b16 %v2219
        %v2284 = vunpack.c.h.b16 %v2219
        %v2285 = vunpack.c.l.b16 %v2220
        %v2286 = vunpack.c.h.b16 %v2220
        %v2287 = vunpack.c.l.b16 %v2221
        %v2288 = vunpack.c.h.b16 %v2221
        %v2289 = vunpack.c.l.b16 %v2222
        %v2290 = vunpack.c.h.b16 %v2222
        %v2291 = vunpack.c.l.b16 %v2223
        %v2292 = vunpack.c.h.b16 %v2223
        %v2293 = vunpack.c.l.b16 %v2224
        %v2294 = vunpack.c.h.b16 %v2224
        %v2295 = vunpack.c.l.b16 %v2225
        %v2296 = vunpack.c.h.b16 %v2225
        %v2297 = vunpack.c.l.b16 %v2226
        %v2298 = vunpack.c.h.b16 %v2226
        %v2299 = vunpack.c.l.b16 %v2227
        %v2300 = vunpack.c.h.b16 %v2227
        %v2301 = vunpack.c.l.b16 %v2228
        %v2302 = vunpack.c.h.b16 %v2228
        %v2303 = vunpack.c.l.b16 %v2229
        %v2304 = vunpack.c.h.b16 %v2229
        %v2305 = vunpack.c.l.b16 %v2230
        %v2306 = vunpack.c.h.b16 %v2230
        %v2307 = vunpack.c.l.b16 %v2231
        %v2308 = vunpack.c.h.b16 %v2231
        %v2309 = vunpack.c.l.b16 %v2232
        %v2310 = vunpack.c.h.b16 %v2232
        %v2311 = vunpack.c.l.b16 %v2233
        %v2312 = vunpack.c.h.b16 %v2233
        %v2313 = vunpack.c.l.b16 %v2234
        %v2314 = vunpack.c.h.b16 %v2234
        %v2315 = vunpack.c.l.b16 %v2235
        %v2316 = vunpack.c.h.b16 %v2235
        %v2317 = vunpack.c.l.b16 %v2236
        %v2318 = vunpack.c.h.b16 %v2236
        %v2319 = vunpack.c.l.b16 %v2237
        %v2320 = vunpack.c.h.b16 %v2237
        %v2321 = vunpack.c.l.b16 %v2238
        %v2322 = vunpack.c.h.b16 %v2238
        %v2323 = vunpack.c.l.b16 %v2239
        %v2324 = vunpack.c.h.b16 %v2239
        %v2325 = vunpack.c.l.b16 %v2240
        %v2326 = vunpack.c.h.b16 %v2240
        %v2327 = vunpack.c.l.b16 %v2241
        %v2328 = vunpack.c.h.b16 %v2241
        %v2329 = vunpack.c.l.b16 %v2242
        %v2330 = vunpack.c.h.b16 %v2242
        %v2331 = vunpack.c.l.b16 %v2243
        %v2332 = vunpack.c.h.b16 %v2243
        %v2333 = vunpack.c.l.b16 %v2244
        %v2334 = vunpack.c.h.b16 %v2244
        %v2335 = vunpack.c.l.b16 %v2245
        %v2336 = vunpack.c.h.b16 %v2245
        %v2337 = vunpack.c.l.b16 %v2246
        %v2338 = vunpack.c.h.b16 %v2246
        %v2339 = vunpack.c.l.b16 %v2247
        %v2340 = vunpack.c.h.b16 %v2247
        %v2341 = vunpack.c.l.b16 %v2248
        %v2342 = vunpack.c.h.b16 %v2248
        %v2343 = vunpack.c.l.b16 %v2249
        %v2344 = vunpack.c.h.b16 %v2249
        %v2345 = vunpack.c.l.b16 %v2250
        %v2346 = vunpack.c.h.b16 %v2250
        %v2347 = vpack.c.b16 %v2285, %v2283
        %v2348 = vpack.c.b16 %v2286, %v2284
        %v2349 = vpack.c.b16 %v2289, %v2287
        %v2350 = vpack.c.b16 %v2290, %v2288
        %v2351 = vpack.c.b16 %v2293, %v2291
        %v2352 = vpack.c.b16 %v2294, %v2292
        %v2353 = vpack.c.b16 %v2297, %v2295
        %v2354 = vpack.c.b16 %v2298, %v2296
        %v2355 = vpack.c.b16 %v2301, %v2299
        %v2356 = vpack.c.b16 %v2302, %v2300
        %v2357 = vpack.c.b16 %v2305, %v2303
        %v2358 = vpack.c.b16 %v2306, %v2304
        %v2359 = vpack.c.b16 %v2309, %v2307
        %v2360 = vpack.c.b16 %v2310, %v2308
        %v2361 = vpack.c.b16 %v2313, %v2311
        %v2362 = vpack.c.b16 %v2314, %v2312
        %v2363 = vpack.c.b16 %v2317, %v2315
        %v2364 = vpack.c.b16 %v2318, %v2316
        %v2365 = vpack.c.b16 %v2321, %v2319
        %v2366 = vpack.c.b16 %v2322, %v2320
        %v2367 = vpack.c.b16 %v2325, %v2323
        %v2368 = vpack.c.b16 %v2326, %v2324
        %v2369 = vpack.c.b16 %v2329, %v2327
        %v2370 = vpack.c.b16 %v2330, %v2328
        %v2371 = vpack.c.b16 %v2333, %v2331
        %v2372 = vpack.c.b16 %v2334, %v2332
        %v2373 = vpack.c.b16 %v2337, %v2335
        %v2374 = vpack.c.b16 %v2338, %v2336
        %v2375 = vpack.c.b16 %v2341, %v2339
        %v2376 = vpack.c.b16 %v2342, %v2340
        %v2377 = vpack.c.b16 %v2345, %v2343
        %v2378 = vpack.c.b16 %v2346, %v2344
        %2411 = vmatprep.subr.bf16.mxu0 %v2362
        %2412 = vmatpush1.bf16.msra.mxu0 %v2361
        %2413 = vmatprep.subr.bf16.mxu0 %v2360
        %2414 = vmatpush1.bf16.msra.mxu0 %v2359
        %2415 = vmatprep.subr.bf16.mxu0 %v2358
        %2416 = vmatpush1.bf16.msra.mxu0 %v2357
        %2417 = vmatprep.subr.bf16.mxu0 %v2356
        %2418 = vmatpush1.bf16.msra.mxu0 %v2355
        %2419 = vmatprep.subr.bf16.mxu0 %v2354
        %2420 = vmatpush1.bf16.msra.mxu0 %v2353
        %2421 = vmatprep.subr.bf16.mxu0 %v2352
        %2422 = vmatpush1.bf16.msra.mxu0 %v2351
        %2423 = vmatprep.subr.bf16.mxu0 %v2350
        %2424 = vmatpush1.bf16.msra.mxu0 %v2349
        %2425 = vmatprep.subr.bf16.mxu0 %v2348
        %2426 = vmatpush1.bf16.msra.mxu0 %v2347
        %2427 = vmatprep.subr.bf16.mxu0 %v2378
        %2428 = vmatpush2.bf16.msra.mxu0 %v2377
        %2429 = vmatprep.subr.bf16.mxu0 %v2376
        %2430 = vmatpush2.bf16.msra.mxu0 %v2375
        %2431 = vmatprep.subr.bf16.mxu0 %v2374
        %2432 = vmatpush2.bf16.msra.mxu0 %v2373
        %2433 = vmatprep.subr.bf16.mxu0 %v2372
        %2434 = vmatpush2.bf16.msra.mxu0 %v2371
        %2435 = vmatprep.subr.bf16.mxu0 %v2370
        %2436 = vmatpush2.bf16.msra.mxu0 %v2369
        %2437 = vmatprep.subr.bf16.mxu0 %v2368
        %2438 = vmatpush2.bf16.msra.mxu0 %v2367
        %2439 = vmatprep.subr.bf16.mxu0 %v2366
        %2440 = vmatpush2.bf16.msra.mxu0 %v2365
        %2441 = vmatprep.subr.bf16.mxu0 %v2364
        %2442 = vmatpush2.bf16.msra.mxu0 %v2363
        %2443 = vmatprep.mubr.bf16.mxu0 %v2218
        %2444 = vmatmul.mubr.bf16.gmra.mxu0 %v2217
        %v2445 = vpop.f32.mrf.mxu0
        %v2446 = vadd.f32 0.0, %v2445
        %v2447 = vpop.f32.mrf.mxu0
        %v2448 = vadd.f32 0.0, %v2447
        %v2449 = vpop.f32.mrf.mxu0
        %v2450 = vadd.f32 0.0, %v2449
        %v2451 = vpop.f32.mrf.mxu0
        %v2452 = vadd.f32 0.0, %v2451
        %2453 = vdwg.mxu0
        %v2454 = vadd.f32 %v981, %v2446
        %v2455 = vadd.f32 %v982, %v2448
        %v2456 = vadd.f32 %v983, %v2450
        %v2457 = vadd.f32 %v984, %v2452
        %v2458 = vld [vmem:[%s947] sm:$0x3]
        %v2459 = vmul.f32 %v2454, %v2454
        %v2460 = vmul.f32 %v2455, %v2455
        %v2461 = vmul.f32 %v2456, %v2456
        %v2462 = vmul.f32 %v2457, %v2457
        %v2463 = vadd.f32 %v2459, %v2460
        %2464 = vadd.xlane.f32.xlu0 %v2463
        %v2465 = vpop.xlane.xlu0 %2464
        %v2466 = vadd.f32 %v2461, %v2462
        %2467 = vadd.xlane.f32.xlu0 %v2466
        %v2468 = vpop.xlane.xlu0 %2467
        %v2469 = vmul.f32 %v2465, %v1004
        %v2470 = vmul.f32 %v2468, %v1004
        %v2471 = vadd.f32 %v2469, 1e-05
        %v2472 = vadd.f32 %v2470, 1e-05
        %v2473 = vrsqrt.pop %v2471
        %v2474 = vrsqrt.pop %v2472
        %v2475 = vmul.f32 %v2454, %v2473
        %v2476 = vmul.f32 %v2455, %v2473
        %v2477 = vmul.f32 %v2456, %v2474
        %v2478 = vmul.f32 %v2457, %v2474
        %v2480 = vlaneseq
        %v2481 = vshrl.u32 %v2480, 7
        %v2482 = vsub.s32 0, %v2481
        %v2483 = vrot.slane %v2458, %v2482
        %v2484 = vlaneseq
        %v2485 = vshrl.u32 %v2484, 7
        %v2486 = vsub.s32 1, %v2485
        %v2487 = vrot.slane %v2458, %v2486
        %v2490 = vmul.f32 %v2475, %v2483
        %v2491 = vmul.f32 %v2476, %v2487
        %v2492 = vmul.f32 %v2477, %v2483
        %v2493 = vmul.f32 %v2478, %v2487
        %v2494 = vpack.c.bf16 %v2492, %v2490
        %v2495 = vpack.c.bf16 %v2493, %v2491
        %v2496 = vld [vmem:[%s789] sm:$0xff]
        %v2497 = vld [vmem:[%s789 + $0x8] sm:$0xff]
        %v2498 = vld [vmem:[%s789 + $0x10] sm:$0xff]
        %v2499 = vld [vmem:[%s789 + $0x18] sm:$0xff]
        %v2500 = vld [vmem:[%s789 + $0x20] sm:$0xff]
        %v2501 = vld [vmem:[%s789 + $0x28] sm:$0xff]
        %v2502 = vld [vmem:[%s789 + $0x30] sm:$0xff]
        %v2503 = vld [vmem:[%s789 + $0x38] sm:$0xff]
        %v2504 = vld [vmem:[%s789 + $0x40] sm:$0xff]
        %v2505 = vld [vmem:[%s789 + $0x48] sm:$0xff]
        %v2506 = vld [vmem:[%s789 + $0x50] sm:$0xff]
        %v2507 = vld [vmem:[%s789 + $0x58] sm:$0xff]
        %v2508 = vld [vmem:[%s789 + $0x60] sm:$0xff]
        %v2509 = vld [vmem:[%s789 + $0x68] sm:$0xff]
        %v2510 = vld [vmem:[%s789 + $0x70] sm:$0xff]
        %v2511 = vld [vmem:[%s789 + $0x78] sm:$0xff]
        %v2512 = vld [vmem:[%s789 + $0x80] sm:$0xff]
        %v2513 = vld [vmem:[%s789 + $0x88] sm:$0xff]
        %v2514 = vld [vmem:[%s789 + $0x90] sm:$0xff]
        %v2515 = vld [vmem:[%s789 + $0x98] sm:$0xff]
        %v2516 = vld [vmem:[%s789 + $0xa0] sm:$0xff]
        %v2517 = vld [vmem:[%s789 + $0xa8] sm:$0xff]
        %v2518 = vld [vmem:[%s789 + $0xb0] sm:$0xff]
        %v2519 = vld [vmem:[%s789 + $0xb8] sm:$0xff]
        %v2520 = vld [vmem:[%s789 + $0xc0] sm:$0xff]
        %v2521 = vld [vmem:[%s789 + $0xc8] sm:$0xff]
        %v2522 = vld [vmem:[%s789 + $0xd0] sm:$0xff]
        %v2523 = vld [vmem:[%s789 + $0xd8] sm:$0xff]
        %v2524 = vld [vmem:[%s789 + $0xe0] sm:$0xff]
        %v2525 = vld [vmem:[%s789 + $0xe8] sm:$0xff]
        %v2526 = vld [vmem:[%s789 + $0xf0] sm:$0xff]
        %v2527 = vld [vmem:[%s789 + $0xf8] sm:$0xff]
        %v2528 = vld [vmem:[%s789 + $0x100] sm:$0xff]
        %v2529 = vld [vmem:[%s789 + $0x108] sm:$0xff]
        %v2530 = vld [vmem:[%s789 + $0x110] sm:$0xff]
        %v2531 = vld [vmem:[%s789 + $0x118] sm:$0xff]
        %v2532 = vld [vmem:[%s789 + $0x120] sm:$0xff]
        %v2533 = vld [vmem:[%s789 + $0x128] sm:$0xff]
        %v2534 = vld [vmem:[%s789 + $0x130] sm:$0xff]
        %v2535 = vld [vmem:[%s789 + $0x138] sm:$0xff]
        %v2536 = vld [vmem:[%s789 + $0x140] sm:$0xff]
        %v2537 = vld [vmem:[%s789 + $0x148] sm:$0xff]
        %v2538 = vld [vmem:[%s789 + $0x150] sm:$0xff]
        %v2539 = vld [vmem:[%s789 + $0x158] sm:$0xff]
        %v2540 = vld [vmem:[%s789 + $0x160] sm:$0xff]
        %v2541 = vld [vmem:[%s789 + $0x168] sm:$0xff]
        %v2542 = vld [vmem:[%s789 + $0x170] sm:$0xff]
        %v2543 = vld [vmem:[%s789 + $0x178] sm:$0xff]
        %v2544 = vld [vmem:[%s789 + $0x180] sm:$0xff]
        %v2545 = vld [vmem:[%s789 + $0x188] sm:$0xff]
        %v2546 = vld [vmem:[%s789 + $0x190] sm:$0xff]
        %v2547 = vld [vmem:[%s789 + $0x198] sm:$0xff]
        %v2548 = vld [vmem:[%s789 + $0x1a0] sm:$0xff]
        %v2549 = vld [vmem:[%s789 + $0x1a8] sm:$0xff]
        %v2550 = vld [vmem:[%s789 + $0x1b0] sm:$0xff]
        %v2551 = vld [vmem:[%s789 + $0x1b8] sm:$0xff]
        %v2552 = vld [vmem:[%s789 + $0x1c0] sm:$0xff]
        %v2553 = vld [vmem:[%s789 + $0x1c8] sm:$0xff]
        %v2554 = vld [vmem:[%s789 + $0x1d0] sm:$0xff]
        %v2555 = vld [vmem:[%s789 + $0x1d8] sm:$0xff]
        %v2556 = vld [vmem:[%s789 + $0x1e0] sm:$0xff]
        %v2557 = vld [vmem:[%s789 + $0x1e8] sm:$0xff]
        %v2558 = vld [vmem:[%s789 + $0x1f0] sm:$0xff]
        %v2559 = vld [vmem:[%s789 + $0x1f8] sm:$0xff]
        %v2560 = vld [vmem:[%s789 + $0x200] sm:$0xff]
        %v2561 = vld [vmem:[%s789 + $0x208] sm:$0xff]
        %v2562 = vld [vmem:[%s789 + $0x210] sm:$0xff]
        %v2563 = vld [vmem:[%s789 + $0x218] sm:$0xff]
        %v2564 = vld [vmem:[%s789 + $0x220] sm:$0xff]
        %v2565 = vld [vmem:[%s789 + $0x228] sm:$0xff]
        %v2566 = vld [vmem:[%s789 + $0x230] sm:$0xff]
        %v2567 = vld [vmem:[%s789 + $0x238] sm:$0xff]
        %v2568 = vld [vmem:[%s789 + $0x240] sm:$0xff]
        %v2569 = vld [vmem:[%s789 + $0x248] sm:$0xff]
        %v2570 = vld [vmem:[%s789 + $0x250] sm:$0xff]
        %v2571 = vld [vmem:[%s789 + $0x258] sm:$0xff]
        %v2572 = vld [vmem:[%s789 + $0x260] sm:$0xff]
        %v2573 = vld [vmem:[%s789 + $0x268] sm:$0xff]
        %v2574 = vld [vmem:[%s789 + $0x270] sm:$0xff]
        %v2575 = vld [vmem:[%s789 + $0x278] sm:$0xff]
        %v2576 = vld [vmem:[%s789 + $0x280] sm:$0xff]
        %v2577 = vld [vmem:[%s789 + $0x288] sm:$0xff]
        %v2578 = vld [vmem:[%s789 + $0x290] sm:$0xff]
        %v2579 = vld [vmem:[%s789 + $0x298] sm:$0xff]
        %v2580 = vld [vmem:[%s789 + $0x2a0] sm:$0xff]
        %v2581 = vld [vmem:[%s789 + $0x2a8] sm:$0xff]
        %v2582 = vld [vmem:[%s789 + $0x2b0] sm:$0xff]
        %v2583 = vld [vmem:[%s789 + $0x2b8] sm:$0xff]
        %v2584 = vld [vmem:[%s789 + $0x2c0] sm:$0xff]
        %v2585 = vld [vmem:[%s789 + $0x2c8] sm:$0xff]
        %v2586 = vld [vmem:[%s789 + $0x2d0] sm:$0xff]
        %v2587 = vld [vmem:[%s789 + $0x2d8] sm:$0xff]
        %v2588 = vld [vmem:[%s789 + $0x2e0] sm:$0xff]
        %v2589 = vld [vmem:[%s789 + $0x2e8] sm:$0xff]
        %v2590 = vld [vmem:[%s789 + $0x2f0] sm:$0xff]
        %v2591 = vld [vmem:[%s789 + $0x2f8] sm:$0xff]
        %v2592 = vld [vmem:[%s789 + $0x300] sm:$0xff]
        %v2593 = vld [vmem:[%s789 + $0x308] sm:$0xff]
        %v2594 = vld [vmem:[%s789 + $0x310] sm:$0xff]
        %v2595 = vld [vmem:[%s789 + $0x318] sm:$0xff]
        %v2596 = vld [vmem:[%s789 + $0x320] sm:$0xff]
        %v2597 = vld [vmem:[%s789 + $0x328] sm:$0xff]
        %v2598 = vld [vmem:[%s789 + $0x330] sm:$0xff]
        %v2599 = vld [vmem:[%s789 + $0x338] sm:$0xff]
        %v2600 = vld [vmem:[%s789 + $0x340] sm:$0xff]
        %v2601 = vld [vmem:[%s789 + $0x348] sm:$0xff]
        %v2602 = vld [vmem:[%s789 + $0x350] sm:$0xff]
        %v2603 = vld [vmem:[%s789 + $0x358] sm:$0xff]
        %v2604 = vld [vmem:[%s789 + $0x360] sm:$0xff]
        %v2605 = vld [vmem:[%s789 + $0x368] sm:$0xff]
        %v2606 = vld [vmem:[%s789 + $0x370] sm:$0xff]
        %v2607 = vld [vmem:[%s789 + $0x378] sm:$0xff]
        %v2608 = vld [vmem:[%s789 + $0x380] sm:$0xff]
        %v2609 = vld [vmem:[%s789 + $0x388] sm:$0xff]
        %v2610 = vld [vmem:[%s789 + $0x390] sm:$0xff]
        %v2611 = vld [vmem:[%s789 + $0x398] sm:$0xff]
        %v2612 = vld [vmem:[%s789 + $0x3a0] sm:$0xff]
        %v2613 = vld [vmem:[%s789 + $0x3a8] sm:$0xff]
        %v2614 = vld [vmem:[%s789 + $0x3b0] sm:$0xff]
        %v2615 = vld [vmem:[%s789 + $0x3b8] sm:$0xff]
        %v2616 = vld [vmem:[%s789 + $0x3c0] sm:$0xff]
        %v2617 = vld [vmem:[%s789 + $0x3c8] sm:$0xff]
        %v2618 = vld [vmem:[%s789 + $0x3d0] sm:$0xff]
        %v2619 = vld [vmem:[%s789 + $0x3d8] sm:$0xff]
        %v2620 = vld [vmem:[%s789 + $0x3e0] sm:$0xff]
        %v2621 = vld [vmem:[%s789 + $0x3e8] sm:$0xff]
        %v2622 = vld [vmem:[%s789 + $0x3f0] sm:$0xff]
        %v2623 = vld [vmem:[%s789 + $0x3f8] sm:$0xff]
        %v2752 = vunpack.c.l.b16 %v2496
        %v2753 = vunpack.c.h.b16 %v2496
        %v2754 = vunpack.c.l.b16 %v2497
        %v2755 = vunpack.c.h.b16 %v2497
        %v2756 = vunpack.c.l.b16 %v2498
        %v2757 = vunpack.c.h.b16 %v2498
        %v2758 = vunpack.c.l.b16 %v2499
        %v2759 = vunpack.c.h.b16 %v2499
        %v2760 = vunpack.c.l.b16 %v2500
        %v2761 = vunpack.c.h.b16 %v2500
        %v2762 = vunpack.c.l.b16 %v2501
        %v2763 = vunpack.c.h.b16 %v2501
        %v2764 = vunpack.c.l.b16 %v2502
        %v2765 = vunpack.c.h.b16 %v2502
        %v2766 = vunpack.c.l.b16 %v2503
        %v2767 = vunpack.c.h.b16 %v2503
        %v2768 = vunpack.c.l.b16 %v2504
        %v2769 = vunpack.c.h.b16 %v2504
        %v2770 = vunpack.c.l.b16 %v2505
        %v2771 = vunpack.c.h.b16 %v2505
        %v2772 = vunpack.c.l.b16 %v2506
        %v2773 = vunpack.c.h.b16 %v2506
        %v2774 = vunpack.c.l.b16 %v2507
        %v2775 = vunpack.c.h.b16 %v2507
        %v2776 = vunpack.c.l.b16 %v2508
        %v2777 = vunpack.c.h.b16 %v2508
        %v2778 = vunpack.c.l.b16 %v2509
        %v2779 = vunpack.c.h.b16 %v2509
        %v2780 = vunpack.c.l.b16 %v2510
        %v2781 = vunpack.c.h.b16 %v2510
        %v2782 = vunpack.c.l.b16 %v2511
        %v2783 = vunpack.c.h.b16 %v2511
        %v2784 = vunpack.c.l.b16 %v2512
        %v2785 = vunpack.c.h.b16 %v2512
        %v2786 = vunpack.c.l.b16 %v2513
        %v2787 = vunpack.c.h.b16 %v2513
        %v2788 = vunpack.c.l.b16 %v2514
        %v2789 = vunpack.c.h.b16 %v2514
        %v2790 = vunpack.c.l.b16 %v2515
        %v2791 = vunpack.c.h.b16 %v2515
        %v2792 = vunpack.c.l.b16 %v2516
        %v2793 = vunpack.c.h.b16 %v2516
        %v2794 = vunpack.c.l.b16 %v2517
        %v2795 = vunpack.c.h.b16 %v2517
        %v2796 = vunpack.c.l.b16 %v2518
        %v2797 = vunpack.c.h.b16 %v2518
        %v2798 = vunpack.c.l.b16 %v2519
        %v2799 = vunpack.c.h.b16 %v2519
        %v2800 = vunpack.c.l.b16 %v2520
        %v2801 = vunpack.c.h.b16 %v2520
        %v2802 = vunpack.c.l.b16 %v2521
        %v2803 = vunpack.c.h.b16 %v2521
        %v2804 = vunpack.c.l.b16 %v2522
        %v2805 = vunpack.c.h.b16 %v2522
        %v2806 = vunpack.c.l.b16 %v2523
        %v2807 = vunpack.c.h.b16 %v2523
        %v2808 = vunpack.c.l.b16 %v2524
        %v2809 = vunpack.c.h.b16 %v2524
        %v2810 = vunpack.c.l.b16 %v2525
        %v2811 = vunpack.c.h.b16 %v2525
        %v2812 = vunpack.c.l.b16 %v2526
        %v2813 = vunpack.c.h.b16 %v2526
        %v2814 = vunpack.c.l.b16 %v2527
        %v2815 = vunpack.c.h.b16 %v2527
        %v2816 = vunpack.c.l.b16 %v2528
        %v2817 = vunpack.c.h.b16 %v2528
        %v2818 = vunpack.c.l.b16 %v2529
        %v2819 = vunpack.c.h.b16 %v2529
        %v2820 = vunpack.c.l.b16 %v2530
        %v2821 = vunpack.c.h.b16 %v2530
        %v2822 = vunpack.c.l.b16 %v2531
        %v2823 = vunpack.c.h.b16 %v2531
        %v2824 = vunpack.c.l.b16 %v2532
        %v2825 = vunpack.c.h.b16 %v2532
        %v2826 = vunpack.c.l.b16 %v2533
        %v2827 = vunpack.c.h.b16 %v2533
        %v2828 = vunpack.c.l.b16 %v2534
        %v2829 = vunpack.c.h.b16 %v2534
        %v2830 = vunpack.c.l.b16 %v2535
        %v2831 = vunpack.c.h.b16 %v2535
        %v2832 = vunpack.c.l.b16 %v2536
        %v2833 = vunpack.c.h.b16 %v2536
        %v2834 = vunpack.c.l.b16 %v2537
        %v2835 = vunpack.c.h.b16 %v2537
        %v2836 = vunpack.c.l.b16 %v2538
        %v2837 = vunpack.c.h.b16 %v2538
        %v2838 = vunpack.c.l.b16 %v2539
        %v2839 = vunpack.c.h.b16 %v2539
        %v2840 = vunpack.c.l.b16 %v2540
        %v2841 = vunpack.c.h.b16 %v2540
        %v2842 = vunpack.c.l.b16 %v2541
        %v2843 = vunpack.c.h.b16 %v2541
        %v2844 = vunpack.c.l.b16 %v2542
        %v2845 = vunpack.c.h.b16 %v2542
        %v2846 = vunpack.c.l.b16 %v2543
        %v2847 = vunpack.c.h.b16 %v2543
        %v2848 = vunpack.c.l.b16 %v2544
        %v2849 = vunpack.c.h.b16 %v2544
        %v2850 = vunpack.c.l.b16 %v2545
        %v2851 = vunpack.c.h.b16 %v2545
        %v2852 = vunpack.c.l.b16 %v2546
        %v2853 = vunpack.c.h.b16 %v2546
        %v2854 = vunpack.c.l.b16 %v2547
        %v2855 = vunpack.c.h.b16 %v2547
        %v2856 = vunpack.c.l.b16 %v2548
        %v2857 = vunpack.c.h.b16 %v2548
        %v2858 = vunpack.c.l.b16 %v2549
        %v2859 = vunpack.c.h.b16 %v2549
        %v2860 = vunpack.c.l.b16 %v2550
        %v2861 = vunpack.c.h.b16 %v2550
        %v2862 = vunpack.c.l.b16 %v2551
        %v2863 = vunpack.c.h.b16 %v2551
        %v2864 = vunpack.c.l.b16 %v2552
        %v2865 = vunpack.c.h.b16 %v2552
        %v2866 = vunpack.c.l.b16 %v2553
        %v2867 = vunpack.c.h.b16 %v2553
        %v2868 = vunpack.c.l.b16 %v2554
        %v2869 = vunpack.c.h.b16 %v2554
        %v2870 = vunpack.c.l.b16 %v2555
        %v2871 = vunpack.c.h.b16 %v2555
        %v2872 = vunpack.c.l.b16 %v2556
        %v2873 = vunpack.c.h.b16 %v2556
        %v2874 = vunpack.c.l.b16 %v2557
        %v2875 = vunpack.c.h.b16 %v2557
        %v2876 = vunpack.c.l.b16 %v2558
        %v2877 = vunpack.c.h.b16 %v2558
        %v2878 = vunpack.c.l.b16 %v2559
        %v2879 = vunpack.c.h.b16 %v2559
        %v2880 = vunpack.c.l.b16 %v2560
        %v2881 = vunpack.c.h.b16 %v2560
        %v2882 = vunpack.c.l.b16 %v2561
        %v2883 = vunpack.c.h.b16 %v2561
        %v2884 = vunpack.c.l.b16 %v2562
        %v2885 = vunpack.c.h.b16 %v2562
        %v2886 = vunpack.c.l.b16 %v2563
        %v2887 = vunpack.c.h.b16 %v2563
        %v2888 = vunpack.c.l.b16 %v2564
        %v2889 = vunpack.c.h.b16 %v2564
        %v2890 = vunpack.c.l.b16 %v2565
        %v2891 = vunpack.c.h.b16 %v2565
        %v2892 = vunpack.c.l.b16 %v2566
        %v2893 = vunpack.c.h.b16 %v2566
        %v2894 = vunpack.c.l.b16 %v2567
        %v2895 = vunpack.c.h.b16 %v2567
        %v2896 = vunpack.c.l.b16 %v2568
        %v2897 = vunpack.c.h.b16 %v2568
        %v2898 = vunpack.c.l.b16 %v2569
        %v2899 = vunpack.c.h.b16 %v2569
        %v2900 = vunpack.c.l.b16 %v2570
        %v2901 = vunpack.c.h.b16 %v2570
        %v2902 = vunpack.c.l.b16 %v2571
        %v2903 = vunpack.c.h.b16 %v2571
        %v2904 = vunpack.c.l.b16 %v2572
        %v2905 = vunpack.c.h.b16 %v2572
        %v2906 = vunpack.c.l.b16 %v2573
        %v2907 = vunpack.c.h.b16 %v2573
        %v2908 = vunpack.c.l.b16 %v2574
        %v2909 = vunpack.c.h.b16 %v2574
        %v2910 = vunpack.c.l.b16 %v2575
        %v2911 = vunpack.c.h.b16 %v2575
        %v2912 = vunpack.c.l.b16 %v2576
        %v2913 = vunpack.c.h.b16 %v2576
        %v2914 = vunpack.c.l.b16 %v2577
        %v2915 = vunpack.c.h.b16 %v2577
        %v2916 = vunpack.c.l.b16 %v2578
        %v2917 = vunpack.c.h.b16 %v2578
        %v2918 = vunpack.c.l.b16 %v2579
        %v2919 = vunpack.c.h.b16 %v2579
        %v2920 = vunpack.c.l.b16 %v2580
        %v2921 = vunpack.c.h.b16 %v2580
        %v2922 = vunpack.c.l.b16 %v2581
        %v2923 = vunpack.c.h.b16 %v2581
        %v2924 = vunpack.c.l.b16 %v2582
        %v2925 = vunpack.c.h.b16 %v2582
        %v2926 = vunpack.c.l.b16 %v2583
        %v2927 = vunpack.c.h.b16 %v2583
        %v2928 = vunpack.c.l.b16 %v2584
        %v2929 = vunpack.c.h.b16 %v2584
        %v2930 = vunpack.c.l.b16 %v2585
        %v2931 = vunpack.c.h.b16 %v2585
        %v2932 = vunpack.c.l.b16 %v2586
        %v2933 = vunpack.c.h.b16 %v2586
        %v2934 = vunpack.c.l.b16 %v2587
        %v2935 = vunpack.c.h.b16 %v2587
        %v2936 = vunpack.c.l.b16 %v2588
        %v2937 = vunpack.c.h.b16 %v2588
        %v2938 = vunpack.c.l.b16 %v2589
        %v2939 = vunpack.c.h.b16 %v2589
        %v2940 = vunpack.c.l.b16 %v2590
        %v2941 = vunpack.c.h.b16 %v2590
        %v2942 = vunpack.c.l.b16 %v2591
        %v2943 = vunpack.c.h.b16 %v2591
        %v2944 = vunpack.c.l.b16 %v2592
        %v2945 = vunpack.c.h.b16 %v2592
        %v2946 = vunpack.c.l.b16 %v2593
        %v2947 = vunpack.c.h.b16 %v2593
        %v2948 = vunpack.c.l.b16 %v2594
        %v2949 = vunpack.c.h.b16 %v2594
        %v2950 = vunpack.c.l.b16 %v2595
        %v2951 = vunpack.c.h.b16 %v2595
        %v2952 = vunpack.c.l.b16 %v2596
        %v2953 = vunpack.c.h.b16 %v2596
        %v2954 = vunpack.c.l.b16 %v2597
        %v2955 = vunpack.c.h.b16 %v2597
        %v2956 = vunpack.c.l.b16 %v2598
        %v2957 = vunpack.c.h.b16 %v2598
        %v2958 = vunpack.c.l.b16 %v2599
        %v2959 = vunpack.c.h.b16 %v2599
        %v2960 = vunpack.c.l.b16 %v2600
        %v2961 = vunpack.c.h.b16 %v2600
        %v2962 = vunpack.c.l.b16 %v2601
        %v2963 = vunpack.c.h.b16 %v2601
        %v2964 = vunpack.c.l.b16 %v2602
        %v2965 = vunpack.c.h.b16 %v2602
        %v2966 = vunpack.c.l.b16 %v2603
        %v2967 = vunpack.c.h.b16 %v2603
        %v2968 = vunpack.c.l.b16 %v2604
        %v2969 = vunpack.c.h.b16 %v2604
        %v2970 = vunpack.c.l.b16 %v2605
        %v2971 = vunpack.c.h.b16 %v2605
        %v2972 = vunpack.c.l.b16 %v2606
        %v2973 = vunpack.c.h.b16 %v2606
        %v2974 = vunpack.c.l.b16 %v2607
        %v2975 = vunpack.c.h.b16 %v2607
        %v2976 = vunpack.c.l.b16 %v2608
        %v2977 = vunpack.c.h.b16 %v2608
        %v2978 = vunpack.c.l.b16 %v2609
        %v2979 = vunpack.c.h.b16 %v2609
        %v2980 = vunpack.c.l.b16 %v2610
        %v2981 = vunpack.c.h.b16 %v2610
        %v2982 = vunpack.c.l.b16 %v2611
        %v2983 = vunpack.c.h.b16 %v2611
        %v2984 = vunpack.c.l.b16 %v2612
        %v2985 = vunpack.c.h.b16 %v2612
        %v2986 = vunpack.c.l.b16 %v2613
        %v2987 = vunpack.c.h.b16 %v2613
        %v2988 = vunpack.c.l.b16 %v2614
        %v2989 = vunpack.c.h.b16 %v2614
        %v2990 = vunpack.c.l.b16 %v2615
        %v2991 = vunpack.c.h.b16 %v2615
        %v2992 = vunpack.c.l.b16 %v2616
        %v2993 = vunpack.c.h.b16 %v2616
        %v2994 = vunpack.c.l.b16 %v2617
        %v2995 = vunpack.c.h.b16 %v2617
        %v2996 = vunpack.c.l.b16 %v2618
        %v2997 = vunpack.c.h.b16 %v2618
        %v2998 = vunpack.c.l.b16 %v2619
        %v2999 = vunpack.c.h.b16 %v2619
        %v3000 = vunpack.c.l.b16 %v2620
        %v3001 = vunpack.c.h.b16 %v2620
        %v3002 = vunpack.c.l.b16 %v2621
        %v3003 = vunpack.c.h.b16 %v2621
        %v3004 = vunpack.c.l.b16 %v2622
        %v3005 = vunpack.c.h.b16 %v2622
        %v3006 = vunpack.c.l.b16 %v2623
        %v3007 = vunpack.c.h.b16 %v2623
        %v3008 = vpack.c.b16 %v2760, %v2752
        %v3009 = vpack.c.b16 %v2761, %v2753
        %v3010 = vpack.c.b16 %v2762, %v2754
        %v3011 = vpack.c.b16 %v2763, %v2755
        %v3012 = vpack.c.b16 %v2764, %v2756
        %v3013 = vpack.c.b16 %v2765, %v2757
        %v3014 = vpack.c.b16 %v2766, %v2758
        %v3015 = vpack.c.b16 %v2767, %v2759
        %v3016 = vpack.c.b16 %v2776, %v2768
        %v3017 = vpack.c.b16 %v2777, %v2769
        %v3018 = vpack.c.b16 %v2778, %v2770
        %v3019 = vpack.c.b16 %v2779, %v2771
        %v3020 = vpack.c.b16 %v2780, %v2772
        %v3021 = vpack.c.b16 %v2781, %v2773
        %v3022 = vpack.c.b16 %v2782, %v2774
        %v3023 = vpack.c.b16 %v2783, %v2775
        %v3024 = vpack.c.b16 %v2792, %v2784
        %v3025 = vpack.c.b16 %v2793, %v2785
        %v3026 = vpack.c.b16 %v2794, %v2786
        %v3027 = vpack.c.b16 %v2795, %v2787
        %v3028 = vpack.c.b16 %v2796, %v2788
        %v3029 = vpack.c.b16 %v2797, %v2789
        %v3030 = vpack.c.b16 %v2798, %v2790
        %v3031 = vpack.c.b16 %v2799, %v2791
        %v3032 = vpack.c.b16 %v2808, %v2800
        %v3033 = vpack.c.b16 %v2809, %v2801
        %v3034 = vpack.c.b16 %v2810, %v2802
        %v3035 = vpack.c.b16 %v2811, %v2803
        %v3036 = vpack.c.b16 %v2812, %v2804
        %v3037 = vpack.c.b16 %v2813, %v2805
        %v3038 = vpack.c.b16 %v2814, %v2806
        %v3039 = vpack.c.b16 %v2815, %v2807
        %v3040 = vpack.c.b16 %v2824, %v2816
        %v3041 = vpack.c.b16 %v2825, %v2817
        %v3042 = vpack.c.b16 %v2826, %v2818
        %v3043 = vpack.c.b16 %v2827, %v2819
        %v3044 = vpack.c.b16 %v2828, %v2820
        %v3045 = vpack.c.b16 %v2829, %v2821
        %v3046 = vpack.c.b16 %v2830, %v2822
        %v3047 = vpack.c.b16 %v2831, %v2823
        %v3048 = vpack.c.b16 %v2840, %v2832
        %v3049 = vpack.c.b16 %v2841, %v2833
        %v3050 = vpack.c.b16 %v2842, %v2834
        %v3051 = vpack.c.b16 %v2843, %v2835
        %v3052 = vpack.c.b16 %v2844, %v2836
        %v3053 = vpack.c.b16 %v2845, %v2837
        %v3054 = vpack.c.b16 %v2846, %v2838
        %v3055 = vpack.c.b16 %v2847, %v2839
        %v3056 = vpack.c.b16 %v2856, %v2848
        %v3057 = vpack.c.b16 %v2857, %v2849
        %v3058 = vpack.c.b16 %v2858, %v2850
        %v3059 = vpack.c.b16 %v2859, %v2851
        %v3060 = vpack.c.b16 %v2860, %v2852
        %v3061 = vpack.c.b16 %v2861, %v2853
        %v3062 = vpack.c.b16 %v2862, %v2854
        %v3063 = vpack.c.b16 %v2863, %v2855
        %v3064 = vpack.c.b16 %v2872, %v2864
        %v3065 = vpack.c.b16 %v2873, %v2865
        %v3066 = vpack.c.b16 %v2874, %v2866
        %v3067 = vpack.c.b16 %v2875, %v2867
        %v3068 = vpack.c.b16 %v2876, %v2868
        %v3069 = vpack.c.b16 %v2877, %v2869
        %v3070 = vpack.c.b16 %v2878, %v2870
        %v3071 = vpack.c.b16 %v2879, %v2871
        %v3072 = vpack.c.b16 %v2888, %v2880
        %v3073 = vpack.c.b16 %v2889, %v2881
        %v3074 = vpack.c.b16 %v2890, %v2882
        %v3075 = vpack.c.b16 %v2891, %v2883
        %v3076 = vpack.c.b16 %v2892, %v2884
        %v3077 = vpack.c.b16 %v2893, %v2885
        %v3078 = vpack.c.b16 %v2894, %v2886
        %v3079 = vpack.c.b16 %v2895, %v2887
        %v3080 = vpack.c.b16 %v2904, %v2896
        %v3081 = vpack.c.b16 %v2905, %v2897
        %v3082 = vpack.c.b16 %v2906, %v2898
        %v3083 = vpack.c.b16 %v2907, %v2899
        %v3084 = vpack.c.b16 %v2908, %v2900
        %v3085 = vpack.c.b16 %v2909, %v2901
        %v3086 = vpack.c.b16 %v2910, %v2902
        %v3087 = vpack.c.b16 %v2911, %v2903
        %v3088 = vpack.c.b16 %v2920, %v2912
        %v3089 = vpack.c.b16 %v2921, %v2913
        %v3090 = vpack.c.b16 %v2922, %v2914
        %v3091 = vpack.c.b16 %v2923, %v2915
        %v3092 = vpack.c.b16 %v2924, %v2916
        %v3093 = vpack.c.b16 %v2925, %v2917
        %v3094 = vpack.c.b16 %v2926, %v2918
        %v3095 = vpack.c.b16 %v2927, %v2919
        %v3096 = vpack.c.b16 %v2936, %v2928
        %v3097 = vpack.c.b16 %v2937, %v2929
        %v3098 = vpack.c.b16 %v2938, %v2930
        %v3099 = vpack.c.b16 %v2939, %v2931
        %v3100 = vpack.c.b16 %v2940, %v2932
        %v3101 = vpack.c.b16 %v2941, %v2933
        %v3102 = vpack.c.b16 %v2942, %v2934
        %v3103 = vpack.c.b16 %v2943, %v2935
        %v3104 = vpack.c.b16 %v2952, %v2944
        %v3105 = vpack.c.b16 %v2953, %v2945
        %v3106 = vpack.c.b16 %v2954, %v2946
        %v3107 = vpack.c.b16 %v2955, %v2947
        %v3108 = vpack.c.b16 %v2956, %v2948
        %v3109 = vpack.c.b16 %v2957, %v2949
        %v3110 = vpack.c.b16 %v2958, %v2950
        %v3111 = vpack.c.b16 %v2959, %v2951
        %v3112 = vpack.c.b16 %v2968, %v2960
        %v3113 = vpack.c.b16 %v2969, %v2961
        %v3114 = vpack.c.b16 %v2970, %v2962
        %v3115 = vpack.c.b16 %v2971, %v2963
        %v3116 = vpack.c.b16 %v2972, %v2964
        %v3117 = vpack.c.b16 %v2973, %v2965
        %v3118 = vpack.c.b16 %v2974, %v2966
        %v3119 = vpack.c.b16 %v2975, %v2967
        %v3120 = vpack.c.b16 %v2984, %v2976
        %v3121 = vpack.c.b16 %v2985, %v2977
        %v3122 = vpack.c.b16 %v2986, %v2978
        %v3123 = vpack.c.b16 %v2987, %v2979
        %v3124 = vpack.c.b16 %v2988, %v2980
        %v3125 = vpack.c.b16 %v2989, %v2981
        %v3126 = vpack.c.b16 %v2990, %v2982
        %v3127 = vpack.c.b16 %v2991, %v2983
        %v3128 = vpack.c.b16 %v3000, %v2992
        %v3129 = vpack.c.b16 %v3001, %v2993
        %v3130 = vpack.c.b16 %v3002, %v2994
        %v3131 = vpack.c.b16 %v3003, %v2995
        %v3132 = vpack.c.b16 %v3004, %v2996
        %v3133 = vpack.c.b16 %v3005, %v2997
        %v3134 = vpack.c.b16 %v3006, %v2998
        %v3135 = vpack.c.b16 %v3007, %v2999
        %3264 = vmatprep.subr.bf16.mxu0 %v3065
        %3265 = vmatpush1.bf16.msra.mxu0 %v3064
        %3266 = vmatprep.subr.bf16.mxu0 %v3057
        %3267 = vmatpush1.bf16.msra.mxu0 %v3056
        %3268 = vmatprep.subr.bf16.mxu0 %v3049
        %3269 = vmatpush1.bf16.msra.mxu0 %v3048
        %3270 = vmatprep.subr.bf16.mxu0 %v3041
        %3271 = vmatpush1.bf16.msra.mxu0 %v3040
        %3272 = vmatprep.subr.bf16.mxu0 %v3033
        %3273 = vmatpush1.bf16.msra.mxu0 %v3032
        %3274 = vmatprep.subr.bf16.mxu0 %v3025
        %3275 = vmatpush1.bf16.msra.mxu0 %v3024
        %3276 = vmatprep.subr.bf16.mxu0 %v3017
        %3277 = vmatpush1.bf16.msra.mxu0 %v3016
        %3278 = vmatprep.subr.bf16.mxu0 %v3009
        %3279 = vmatpush1.bf16.msra.mxu0 %v3008
        %3280 = vmatprep.subr.bf16.mxu0 %v3129
        %3281 = vmatpush2.bf16.msra.mxu0 %v3128
        %3282 = vmatprep.subr.bf16.mxu0 %v3121
        %3283 = vmatpush2.bf16.msra.mxu0 %v3120
        %3284 = vmatprep.subr.bf16.mxu0 %v3113
        %3285 = vmatpush2.bf16.msra.mxu0 %v3112
        %3286 = vmatprep.subr.bf16.mxu0 %v3105
        %3287 = vmatpush2.bf16.msra.mxu0 %v3104
        %3288 = vmatprep.subr.bf16.mxu0 %v3097
        %3289 = vmatpush2.bf16.msra.mxu0 %v3096
        %3290 = vmatprep.subr.bf16.mxu0 %v3089
        %3291 = vmatpush2.bf16.msra.mxu0 %v3088
        %3292 = vmatprep.subr.bf16.mxu0 %v3081
        %3293 = vmatpush2.bf16.msra.mxu0 %v3080
        %3294 = vmatprep.subr.bf16.mxu0 %v3073
        %3295 = vmatpush2.bf16.msra.mxu0 %v3072
        %3296 = vmatprep.mubr.bf16.mxu0 %v2495
        %3297 = vmatmul.mubr.bf16.gmra.mxu0 %v2494
        %v3298 = vpop.f32.mrf.mxu0
        %v3299 = vadd.f32 0.0, %v3298
        %v3300 = vpop.f32.mrf.mxu0
        %v3301 = vadd.f32 0.0, %v3300
        %v3302 = vpop.f32.mrf.mxu0
        %v3303 = vadd.f32 0.0, %v3302
        %v3304 = vpop.f32.mrf.mxu0
        %v3305 = vadd.f32 0.0, %v3304
        %3306 = vdwg.mxu0
        %3307 = vmatprep.subr.bf16.mxu0 %v3067
        %3308 = vmatpush1.bf16.msra.mxu0 %v3066
        %3309 = vmatprep.subr.bf16.mxu0 %v3059
        %3310 = vmatpush1.bf16.msra.mxu0 %v3058
        %3311 = vmatprep.subr.bf16.mxu0 %v3051
        %3312 = vmatpush1.bf16.msra.mxu0 %v3050
        %3313 = vmatprep.subr.bf16.mxu0 %v3043
        %3314 = vmatpush1.bf16.msra.mxu0 %v3042
        %3315 = vmatprep.subr.bf16.mxu0 %v3035
        %3316 = vmatpush1.bf16.msra.mxu0 %v3034
        %3317 = vmatprep.subr.bf16.mxu0 %v3027
        %3318 = vmatpush1.bf16.msra.mxu0 %v3026
        %3319 = vmatprep.subr.bf16.mxu0 %v3019
        %3320 = vmatpush1.bf16.msra.mxu0 %v3018
        %3321 = vmatprep.subr.bf16.mxu0 %v3011
        %3322 = vmatpush1.bf16.msra.mxu0 %v3010
        %3323 = vmatprep.subr.bf16.mxu0 %v3131
        %3324 = vmatpush2.bf16.msra.mxu0 %v3130
        %3325 = vmatprep.subr.bf16.mxu0 %v3123
        %3326 = vmatpush2.bf16.msra.mxu0 %v3122
        %3327 = vmatprep.subr.bf16.mxu0 %v3115
        %3328 = vmatpush2.bf16.msra.mxu0 %v3114
        %3329 = vmatprep.subr.bf16.mxu0 %v3107
        %3330 = vmatpush2.bf16.msra.mxu0 %v3106
        %3331 = vmatprep.subr.bf16.mxu0 %v3099
        %3332 = vmatpush2.bf16.msra.mxu0 %v3098
        %3333 = vmatprep.subr.bf16.mxu0 %v3091
        %3334 = vmatpush2.bf16.msra.mxu0 %v3090
        %3335 = vmatprep.subr.bf16.mxu0 %v3083
        %3336 = vmatpush2.bf16.msra.mxu0 %v3082
        %3337 = vmatprep.subr.bf16.mxu0 %v3075
        %3338 = vmatpush2.bf16.msra.mxu0 %v3074
        %3339 = vmatprep.mubr.bf16.mxu0 %v2495
        %3340 = vmatmul.mubr.bf16.gmra.mxu0 %v2494
        %v3341 = vpop.f32.mrf.mxu0
        %v3342 = vadd.f32 0.0, %v3341
        %v3343 = vpop.f32.mrf.mxu0
        %v3344 = vadd.f32 0.0, %v3343
        %v3345 = vpop.f32.mrf.mxu0
        %v3346 = vadd.f32 0.0, %v3345
        %v3347 = vpop.f32.mrf.mxu0
        %v3348 = vadd.f32 0.0, %v3347
        %3349 = vdwg.mxu0
        %3350 = vmatprep.subr.bf16.mxu0 %v3069
        %3351 = vmatpush1.bf16.msra.mxu0 %v3068
        %3352 = vmatprep.subr.bf16.mxu0 %v3061
        %3353 = vmatpush1.bf16.msra.mxu0 %v3060
        %3354 = vmatprep.subr.bf16.mxu0 %v3053
        %3355 = vmatpush1.bf16.msra.mxu0 %v3052
        %3356 = vmatprep.subr.bf16.mxu0 %v3045
        %3357 = vmatpush1.bf16.msra.mxu0 %v3044
        %3358 = vmatprep.subr.bf16.mxu0 %v3037
        %3359 = vmatpush1.bf16.msra.mxu0 %v3036
        %3360 = vmatprep.subr.bf16.mxu0 %v3029
        %3361 = vmatpush1.bf16.msra.mxu0 %v3028
        %3362 = vmatprep.subr.bf16.mxu0 %v3021
        %3363 = vmatpush1.bf16.msra.mxu0 %v3020
        %3364 = vmatprep.subr.bf16.mxu0 %v3013
        %3365 = vmatpush1.bf16.msra.mxu0 %v3012
        %3366 = vmatprep.subr.bf16.mxu0 %v3133
        %3367 = vmatpush2.bf16.msra.mxu0 %v3132
        %3368 = vmatprep.subr.bf16.mxu0 %v3125
        %3369 = vmatpush2.bf16.msra.mxu0 %v3124
        %3370 = vmatprep.subr.bf16.mxu0 %v3117
        %3371 = vmatpush2.bf16.msra.mxu0 %v3116
        %3372 = vmatprep.subr.bf16.mxu0 %v3109
        %3373 = vmatpush2.bf16.msra.mxu0 %v3108
        %3374 = vmatprep.subr.bf16.mxu0 %v3101
        %3375 = vmatpush2.bf16.msra.mxu0 %v3100
        %3376 = vmatprep.subr.bf16.mxu0 %v3093
        %3377 = vmatpush2.bf16.msra.mxu0 %v3092
        %3378 = vmatprep.subr.bf16.mxu0 %v3085
        %3379 = vmatpush2.bf16.msra.mxu0 %v3084
        %3380 = vmatprep.subr.bf16.mxu0 %v3077
        %3381 = vmatpush2.bf16.msra.mxu0 %v3076
        %3382 = vmatprep.mubr.bf16.mxu0 %v2495
        %3383 = vmatmul.mubr.bf16.gmra.mxu0 %v2494
        %v3384 = vpop.f32.mrf.mxu0
        %v3385 = vadd.f32 0.0, %v3384
        %v3386 = vpop.f32.mrf.mxu0
        %v3387 = vadd.f32 0.0, %v3386
        %v3388 = vpop.f32.mrf.mxu0
        %v3389 = vadd.f32 0.0, %v3388
        %v3390 = vpop.f32.mrf.mxu0
        %v3391 = vadd.f32 0.0, %v3390
        %3392 = vdwg.mxu0
        %3393 = vmatprep.subr.bf16.mxu0 %v3071
        %3394 = vmatpush1.bf16.msra.mxu0 %v3070
        %3395 = vmatprep.subr.bf16.mxu0 %v3063
        %3396 = vmatpush1.bf16.msra.mxu0 %v3062
        %3397 = vmatprep.subr.bf16.mxu0 %v3055
        %3398 = vmatpush1.bf16.msra.mxu0 %v3054
        %3399 = vmatprep.subr.bf16.mxu0 %v3047
        %3400 = vmatpush1.bf16.msra.mxu0 %v3046
        %3401 = vmatprep.subr.bf16.mxu0 %v3039
        %3402 = vmatpush1.bf16.msra.mxu0 %v3038
        %3403 = vmatprep.subr.bf16.mxu0 %v3031
        %3404 = vmatpush1.bf16.msra.mxu0 %v3030
        %3405 = vmatprep.subr.bf16.mxu0 %v3023
        %3406 = vmatpush1.bf16.msra.mxu0 %v3022
        %3407 = vmatprep.subr.bf16.mxu0 %v3015
        %3408 = vmatpush1.bf16.msra.mxu0 %v3014
        %3409 = vmatprep.subr.bf16.mxu0 %v3135
        %3410 = vmatpush2.bf16.msra.mxu0 %v3134
        %3411 = vmatprep.subr.bf16.mxu0 %v3127
        %3412 = vmatpush2.bf16.msra.mxu0 %v3126
        %3413 = vmatprep.subr.bf16.mxu0 %v3119
        %3414 = vmatpush2.bf16.msra.mxu0 %v3118
        %3415 = vmatprep.subr.bf16.mxu0 %v3111
        %3416 = vmatpush2.bf16.msra.mxu0 %v3110
        %3417 = vmatprep.subr.bf16.mxu0 %v3103
        %3418 = vmatpush2.bf16.msra.mxu0 %v3102
        %3419 = vmatprep.subr.bf16.mxu0 %v3095
        %3420 = vmatpush2.bf16.msra.mxu0 %v3094
        %3421 = vmatprep.subr.bf16.mxu0 %v3087
        %3422 = vmatpush2.bf16.msra.mxu0 %v3086
        %3423 = vmatprep.subr.bf16.mxu0 %v3079
        %3424 = vmatpush2.bf16.msra.mxu0 %v3078
        %3425 = vmatprep.mubr.bf16.mxu0 %v2495
        %3426 = vmatmul.mubr.bf16.gmra.mxu0 %v2494
        %v3427 = vpop.f32.mrf.mxu0
        %v3428 = vadd.f32 0.0, %v3427
        %v3429 = vpop.f32.mrf.mxu0
        %v3430 = vadd.f32 0.0, %v3429
        %v3431 = vpop.f32.mrf.mxu0
        %v3432 = vadd.f32 0.0, %v3431
        %v3433 = vpop.f32.mrf.mxu0
        %v3434 = vadd.f32 0.0, %v3433
        %3435 = vdwg.mxu0
        %v3436 = vxor.u32 %v3299, 2147483648
        %v3437 = vxor.u32 %v3301, 2147483648
        %v3438 = vxor.u32 %v3342, 2147483648
        %v3439 = vxor.u32 %v3344, 2147483648
        %v3440 = vxor.u32 %v3303, 2147483648
        %v3441 = vxor.u32 %v3305, 2147483648
        %v3442 = vxor.u32 %v3346, 2147483648
        %v3443 = vxor.u32 %v3348, 2147483648
        %v3444 = vmul.f32 %v3436, 1.442695
        %v3445 = vpow.pop %v3444
        %v3446 = vmul.f32 %v3437, 1.442695
        %v3447 = vpow.pop %v3446
        %v3448 = vmul.f32 %v3438, 1.442695
        %v3449 = vpow.pop %v3448
        %v3450 = vmul.f32 %v3439, 1.442695
        %v3451 = vpow.pop %v3450
        %v3452 = vmul.f32 %v3440, 1.442695
        %v3453 = vpow.pop %v3452
        %v3454 = vmul.f32 %v3441, 1.442695
        %v3455 = vpow.pop %v3454
        %v3456 = vmul.f32 %v3442, 1.442695
        %v3457 = vpow.pop %v3456
        %v3458 = vmul.f32 %v3443, 1.442695
        %v3459 = vpow.pop %v3458
        %v3460 = vadd.f32 %v3445, 1.0
        %v3461 = vadd.f32 %v3447, 1.0
        %v3462 = vadd.f32 %v3449, 1.0
        %v3463 = vadd.f32 %v3451, 1.0
        %v3464 = vadd.f32 %v3453, 1.0
        %v3465 = vadd.f32 %v3455, 1.0
        %v3466 = vadd.f32 %v3457, 1.0
        %v3467 = vadd.f32 %v3459, 1.0
        %v3468 = vrcp.pop %v3460
        %v3469 = vmul.f32 1.0, %v3468
        %v3470 = vrcp.pop %v3461
        %v3471 = vmul.f32 1.0, %v3470
        %v3472 = vrcp.pop %v3462
        %v3473 = vmul.f32 1.0, %v3472
        %v3474 = vrcp.pop %v3463
        %v3475 = vmul.f32 1.0, %v3474
        %v3476 = vrcp.pop %v3464
        %v3477 = vmul.f32 1.0, %v3476
        %v3478 = vrcp.pop %v3465
        %v3479 = vmul.f32 1.0, %v3478
        %v3480 = vrcp.pop %v3466
        %v3481 = vmul.f32 1.0, %v3480
        %v3482 = vrcp.pop %v3467
        %v3483 = vmul.f32 1.0, %v3482
        %v3484 = vmul.f32 %v3299, %v3469
        %v3485 = vmul.f32 %v3301, %v3471
        %v3486 = vmul.f32 %v3342, %v3473
        %v3487 = vmul.f32 %v3344, %v3475
        %v3488 = vmul.f32 %v3303, %v3477
        %v3489 = vmul.f32 %v3305, %v3479
        %v3490 = vmul.f32 %v3346, %v3481
        %v3491 = vmul.f32 %v3348, %v3483
        %v3492 = vmul.f32 %v3484, %v3385
        %v3493 = vmul.f32 %v3485, %v3387
        %v3494 = vmul.f32 %v3486, %v3428
        %v3495 = vmul.f32 %v3487, %v3430
        %v3496 = vmul.f32 %v3488, %v3389
        %v3497 = vmul.f32 %v3489, %v3391
        %v3498 = vmul.f32 %v3490, %v3432
        %v3499 = vmul.f32 %v3491, %v3434
        %v3500 = vpack.c.bf16 %v3496, %v3492
        %v3501 = vpack.c.bf16 %v3497, %v3493
        %v3502 = vpack.c.bf16 %v3498, %v3494
        %v3503 = vpack.c.bf16 %v3499, %v3495
        %v3504 = vld [vmem:[%s798] sm:$0xff]
        %v3505 = vld [vmem:[%s798 + $0x8] sm:$0xff]
        %v3506 = vld [vmem:[%s798 + $0x10] sm:$0xff]
        %v3507 = vld [vmem:[%s798 + $0x18] sm:$0xff]
        %v3508 = vld [vmem:[%s798 + $0x20] sm:$0xff]
        %v3509 = vld [vmem:[%s798 + $0x28] sm:$0xff]
        %v3510 = vld [vmem:[%s798 + $0x30] sm:$0xff]
        %v3511 = vld [vmem:[%s798 + $0x38] sm:$0xff]
        %v3512 = vld [vmem:[%s798 + $0x40] sm:$0xff]
        %v3513 = vld [vmem:[%s798 + $0x48] sm:$0xff]
        %v3514 = vld [vmem:[%s798 + $0x50] sm:$0xff]
        %v3515 = vld [vmem:[%s798 + $0x58] sm:$0xff]
        %v3516 = vld [vmem:[%s798 + $0x60] sm:$0xff]
        %v3517 = vld [vmem:[%s798 + $0x68] sm:$0xff]
        %v3518 = vld [vmem:[%s798 + $0x70] sm:$0xff]
        %v3519 = vld [vmem:[%s798 + $0x78] sm:$0xff]
        %v3520 = vld [vmem:[%s798 + $0x80] sm:$0xff]
        %v3521 = vld [vmem:[%s798 + $0x88] sm:$0xff]
        %v3522 = vld [vmem:[%s798 + $0x90] sm:$0xff]
        %v3523 = vld [vmem:[%s798 + $0x98] sm:$0xff]
        %v3524 = vld [vmem:[%s798 + $0xa0] sm:$0xff]
        %v3525 = vld [vmem:[%s798 + $0xa8] sm:$0xff]
        %v3526 = vld [vmem:[%s798 + $0xb0] sm:$0xff]
        %v3527 = vld [vmem:[%s798 + $0xb8] sm:$0xff]
        %v3528 = vld [vmem:[%s798 + $0xc0] sm:$0xff]
        %v3529 = vld [vmem:[%s798 + $0xc8] sm:$0xff]
        %v3530 = vld [vmem:[%s798 + $0xd0] sm:$0xff]
        %v3531 = vld [vmem:[%s798 + $0xd8] sm:$0xff]
        %v3532 = vld [vmem:[%s798 + $0xe0] sm:$0xff]
        %v3533 = vld [vmem:[%s798 + $0xe8] sm:$0xff]
        %v3534 = vld [vmem:[%s798 + $0xf0] sm:$0xff]
        %v3535 = vld [vmem:[%s798 + $0xf8] sm:$0xff]
        %v3536 = vld [vmem:[%s798 + $0x100] sm:$0xff]
        %v3537 = vld [vmem:[%s798 + $0x108] sm:$0xff]
        %v3538 = vld [vmem:[%s798 + $0x110] sm:$0xff]
        %v3539 = vld [vmem:[%s798 + $0x118] sm:$0xff]
        %v3540 = vld [vmem:[%s798 + $0x120] sm:$0xff]
        %v3541 = vld [vmem:[%s798 + $0x128] sm:$0xff]
        %v3542 = vld [vmem:[%s798 + $0x130] sm:$0xff]
        %v3543 = vld [vmem:[%s798 + $0x138] sm:$0xff]
        %v3544 = vld [vmem:[%s798 + $0x140] sm:$0xff]
        %v3545 = vld [vmem:[%s798 + $0x148] sm:$0xff]
        %v3546 = vld [vmem:[%s798 + $0x150] sm:$0xff]
        %v3547 = vld [vmem:[%s798 + $0x158] sm:$0xff]
        %v3548 = vld [vmem:[%s798 + $0x160] sm:$0xff]
        %v3549 = vld [vmem:[%s798 + $0x168] sm:$0xff]
        %v3550 = vld [vmem:[%s798 + $0x170] sm:$0xff]
        %v3551 = vld [vmem:[%s798 + $0x178] sm:$0xff]
        %v3552 = vld [vmem:[%s798 + $0x180] sm:$0xff]
        %v3553 = vld [vmem:[%s798 + $0x188] sm:$0xff]
        %v3554 = vld [vmem:[%s798 + $0x190] sm:$0xff]
        %v3555 = vld [vmem:[%s798 + $0x198] sm:$0xff]
        %v3556 = vld [vmem:[%s798 + $0x1a0] sm:$0xff]
        %v3557 = vld [vmem:[%s798 + $0x1a8] sm:$0xff]
        %v3558 = vld [vmem:[%s798 + $0x1b0] sm:$0xff]
        %v3559 = vld [vmem:[%s798 + $0x1b8] sm:$0xff]
        %v3560 = vld [vmem:[%s798 + $0x1c0] sm:$0xff]
        %v3561 = vld [vmem:[%s798 + $0x1c8] sm:$0xff]
        %v3562 = vld [vmem:[%s798 + $0x1d0] sm:$0xff]
        %v3563 = vld [vmem:[%s798 + $0x1d8] sm:$0xff]
        %v3564 = vld [vmem:[%s798 + $0x1e0] sm:$0xff]
        %v3565 = vld [vmem:[%s798 + $0x1e8] sm:$0xff]
        %v3566 = vld [vmem:[%s798 + $0x1f0] sm:$0xff]
        %v3567 = vld [vmem:[%s798 + $0x1f8] sm:$0xff]
        %v3632 = vunpack.c.l.b16 %v3504
        %v3633 = vunpack.c.h.b16 %v3504
        %v3634 = vunpack.c.l.b16 %v3505
        %v3635 = vunpack.c.h.b16 %v3505
        %v3636 = vunpack.c.l.b16 %v3506
        %v3637 = vunpack.c.h.b16 %v3506
        %v3638 = vunpack.c.l.b16 %v3507
        %v3639 = vunpack.c.h.b16 %v3507
        %v3640 = vunpack.c.l.b16 %v3508
        %v3641 = vunpack.c.h.b16 %v3508
        %v3642 = vunpack.c.l.b16 %v3509
        %v3643 = vunpack.c.h.b16 %v3509
        %v3644 = vunpack.c.l.b16 %v3510
        %v3645 = vunpack.c.h.b16 %v3510
        %v3646 = vunpack.c.l.b16 %v3511
        %v3647 = vunpack.c.h.b16 %v3511
        %v3648 = vunpack.c.l.b16 %v3512
        %v3649 = vunpack.c.h.b16 %v3512
        %v3650 = vunpack.c.l.b16 %v3513
        %v3651 = vunpack.c.h.b16 %v3513
        %v3652 = vunpack.c.l.b16 %v3514
        %v3653 = vunpack.c.h.b16 %v3514
        %v3654 = vunpack.c.l.b16 %v3515
        %v3655 = vunpack.c.h.b16 %v3515
        %v3656 = vunpack.c.l.b16 %v3516
        %v3657 = vunpack.c.h.b16 %v3516
        %v3658 = vunpack.c.l.b16 %v3517
        %v3659 = vunpack.c.h.b16 %v3517
        %v3660 = vunpack.c.l.b16 %v3518
        %v3661 = vunpack.c.h.b16 %v3518
        %v3662 = vunpack.c.l.b16 %v3519
        %v3663 = vunpack.c.h.b16 %v3519
        %v3664 = vunpack.c.l.b16 %v3520
        %v3665 = vunpack.c.h.b16 %v3520
        %v3666 = vunpack.c.l.b16 %v3521
        %v3667 = vunpack.c.h.b16 %v3521
        %v3668 = vunpack.c.l.b16 %v3522
        %v3669 = vunpack.c.h.b16 %v3522
        %v3670 = vunpack.c.l.b16 %v3523
        %v3671 = vunpack.c.h.b16 %v3523
        %v3672 = vunpack.c.l.b16 %v3524
        %v3673 = vunpack.c.h.b16 %v3524
        %v3674 = vunpack.c.l.b16 %v3525
        %v3675 = vunpack.c.h.b16 %v3525
        %v3676 = vunpack.c.l.b16 %v3526
        %v3677 = vunpack.c.h.b16 %v3526
        %v3678 = vunpack.c.l.b16 %v3527
        %v3679 = vunpack.c.h.b16 %v3527
        %v3680 = vunpack.c.l.b16 %v3528
        %v3681 = vunpack.c.h.b16 %v3528
        %v3682 = vunpack.c.l.b16 %v3529
        %v3683 = vunpack.c.h.b16 %v3529
        %v3684 = vunpack.c.l.b16 %v3530
        %v3685 = vunpack.c.h.b16 %v3530
        %v3686 = vunpack.c.l.b16 %v3531
        %v3687 = vunpack.c.h.b16 %v3531
        %v3688 = vunpack.c.l.b16 %v3532
        %v3689 = vunpack.c.h.b16 %v3532
        %v3690 = vunpack.c.l.b16 %v3533
        %v3691 = vunpack.c.h.b16 %v3533
        %v3692 = vunpack.c.l.b16 %v3534
        %v3693 = vunpack.c.h.b16 %v3534
        %v3694 = vunpack.c.l.b16 %v3535
        %v3695 = vunpack.c.h.b16 %v3535
        %v3696 = vunpack.c.l.b16 %v3536
        %v3697 = vunpack.c.h.b16 %v3536
        %v3698 = vunpack.c.l.b16 %v3537
        %v3699 = vunpack.c.h.b16 %v3537
        %v3700 = vunpack.c.l.b16 %v3538
        %v3701 = vunpack.c.h.b16 %v3538
        %v3702 = vunpack.c.l.b16 %v3539
        %v3703 = vunpack.c.h.b16 %v3539
        %v3704 = vunpack.c.l.b16 %v3540
        %v3705 = vunpack.c.h.b16 %v3540
        %v3706 = vunpack.c.l.b16 %v3541
        %v3707 = vunpack.c.h.b16 %v3541
        %v3708 = vunpack.c.l.b16 %v3542
        %v3709 = vunpack.c.h.b16 %v3542
        %v3710 = vunpack.c.l.b16 %v3543
        %v3711 = vunpack.c.h.b16 %v3543
        %v3712 = vunpack.c.l.b16 %v3544
        %v3713 = vunpack.c.h.b16 %v3544
        %v3714 = vunpack.c.l.b16 %v3545
        %v3715 = vunpack.c.h.b16 %v3545
        %v3716 = vunpack.c.l.b16 %v3546
        %v3717 = vunpack.c.h.b16 %v3546
        %v3718 = vunpack.c.l.b16 %v3547
        %v3719 = vunpack.c.h.b16 %v3547
        %v3720 = vunpack.c.l.b16 %v3548
        %v3721 = vunpack.c.h.b16 %v3548
        %v3722 = vunpack.c.l.b16 %v3549
        %v3723 = vunpack.c.h.b16 %v3549
        %v3724 = vunpack.c.l.b16 %v3550
        %v3725 = vunpack.c.h.b16 %v3550
        %v3726 = vunpack.c.l.b16 %v3551
        %v3727 = vunpack.c.h.b16 %v3551
        %v3728 = vunpack.c.l.b16 %v3552
        %v3729 = vunpack.c.h.b16 %v3552
        %v3730 = vunpack.c.l.b16 %v3553
        %v3731 = vunpack.c.h.b16 %v3553
        %v3732 = vunpack.c.l.b16 %v3554
        %v3733 = vunpack.c.h.b16 %v3554
        %v3734 = vunpack.c.l.b16 %v3555
        %v3735 = vunpack.c.h.b16 %v3555
        %v3736 = vunpack.c.l.b16 %v3556
        %v3737 = vunpack.c.h.b16 %v3556
        %v3738 = vunpack.c.l.b16 %v3557
        %v3739 = vunpack.c.h.b16 %v3557
        %v3740 = vunpack.c.l.b16 %v3558
        %v3741 = vunpack.c.h.b16 %v3558
        %v3742 = vunpack.c.l.b16 %v3559
        %v3743 = vunpack.c.h.b16 %v3559
        %v3744 = vunpack.c.l.b16 %v3560
        %v3745 = vunpack.c.h.b16 %v3560
        %v3746 = vunpack.c.l.b16 %v3561
        %v3747 = vunpack.c.h.b16 %v3561
        %v3748 = vunpack.c.l.b16 %v3562
        %v3749 = vunpack.c.h.b16 %v3562
        %v3750 = vunpack.c.l.b16 %v3563
        %v3751 = vunpack.c.h.b16 %v3563
        %v3752 = vunpack.c.l.b16 %v3564
        %v3753 = vunpack.c.h.b16 %v3564
        %v3754 = vunpack.c.l.b16 %v3565
        %v3755 = vunpack.c.h.b16 %v3565
        %v3756 = vunpack.c.l.b16 %v3566
        %v3757 = vunpack.c.h.b16 %v3566
        %v3758 = vunpack.c.l.b16 %v3567
        %v3759 = vunpack.c.h.b16 %v3567
        %v3760 = vpack.c.b16 %v3634, %v3632
        %v3761 = vpack.c.b16 %v3635, %v3633
        %v3762 = vpack.c.b16 %v3638, %v3636
        %v3763 = vpack.c.b16 %v3639, %v3637
        %v3764 = vpack.c.b16 %v3642, %v3640
        %v3765 = vpack.c.b16 %v3643, %v3641
        %v3766 = vpack.c.b16 %v3646, %v3644
        %v3767 = vpack.c.b16 %v3647, %v3645
        %v3768 = vpack.c.b16 %v3650, %v3648
        %v3769 = vpack.c.b16 %v3651, %v3649
        %v3770 = vpack.c.b16 %v3654, %v3652
        %v3771 = vpack.c.b16 %v3655, %v3653
        %v3772 = vpack.c.b16 %v3658, %v3656
        %v3773 = vpack.c.b16 %v3659, %v3657
        %v3774 = vpack.c.b16 %v3662, %v3660
        %v3775 = vpack.c.b16 %v3663, %v3661
        %v3776 = vpack.c.b16 %v3666, %v3664
        %v3777 = vpack.c.b16 %v3667, %v3665
        %v3778 = vpack.c.b16 %v3670, %v3668
        %v3779 = vpack.c.b16 %v3671, %v3669
        %v3780 = vpack.c.b16 %v3674, %v3672
        %v3781 = vpack.c.b16 %v3675, %v3673
        %v3782 = vpack.c.b16 %v3678, %v3676
        %v3783 = vpack.c.b16 %v3679, %v3677
        %v3784 = vpack.c.b16 %v3682, %v3680
        %v3785 = vpack.c.b16 %v3683, %v3681
        %v3786 = vpack.c.b16 %v3686, %v3684
        %v3787 = vpack.c.b16 %v3687, %v3685
        %v3788 = vpack.c.b16 %v3690, %v3688
        %v3789 = vpack.c.b16 %v3691, %v3689
        %v3790 = vpack.c.b16 %v3694, %v3692
        %v3791 = vpack.c.b16 %v3695, %v3693
        %v3792 = vpack.c.b16 %v3698, %v3696
        %v3793 = vpack.c.b16 %v3699, %v3697
        %v3794 = vpack.c.b16 %v3702, %v3700
        %v3795 = vpack.c.b16 %v3703, %v3701
        %v3796 = vpack.c.b16 %v3706, %v3704
        %v3797 = vpack.c.b16 %v3707, %v3705
        %v3798 = vpack.c.b16 %v3710, %v3708
        %v3799 = vpack.c.b16 %v3711, %v3709
        %v3800 = vpack.c.b16 %v3714, %v3712
        %v3801 = vpack.c.b16 %v3715, %v3713
        %v3802 = vpack.c.b16 %v3718, %v3716
        %v3803 = vpack.c.b16 %v3719, %v3717
        %v3804 = vpack.c.b16 %v3722, %v3720
        %v3805 = vpack.c.b16 %v3723, %v3721
        %v3806 = vpack.c.b16 %v3726, %v3724
        %v3807 = vpack.c.b16 %v3727, %v3725
        %v3808 = vpack.c.b16 %v3730, %v3728
        %v3809 = vpack.c.b16 %v3731, %v3729
        %v3810 = vpack.c.b16 %v3734, %v3732
        %v3811 = vpack.c.b16 %v3735, %v3733
        %v3812 = vpack.c.b16 %v3738, %v3736
        %v3813 = vpack.c.b16 %v3739, %v3737
        %v3814 = vpack.c.b16 %v3742, %v3740
        %v3815 = vpack.c.b16 %v3743, %v3741
        %v3816 = vpack.c.b16 %v3746, %v3744
        %v3817 = vpack.c.b16 %v3747, %v3745
        %v3818 = vpack.c.b16 %v3750, %v3748
        %v3819 = vpack.c.b16 %v3751, %v3749
        %v3820 = vpack.c.b16 %v3754, %v3752
        %v3821 = vpack.c.b16 %v3755, %v3753
        %v3822 = vpack.c.b16 %v3758, %v3756
        %v3823 = vpack.c.b16 %v3759, %v3757
        %3888 = vmatprep.subr.bf16.mxu0 %v3775
        %3889 = vmatpush1.bf16.msra.mxu0 %v3774
        %3890 = vmatprep.subr.bf16.mxu0 %v3773
        %3891 = vmatpush1.bf16.msra.mxu0 %v3772
        %3892 = vmatprep.subr.bf16.mxu0 %v3771
        %3893 = vmatpush1.bf16.msra.mxu0 %v3770
        %3894 = vmatprep.subr.bf16.mxu0 %v3769
        %3895 = vmatpush1.bf16.msra.mxu0 %v3768
        %3896 = vmatprep.subr.bf16.mxu0 %v3767
        %3897 = vmatpush1.bf16.msra.mxu0 %v3766
        %3898 = vmatprep.subr.bf16.mxu0 %v3765
        %3899 = vmatpush1.bf16.msra.mxu0 %v3764
        %3900 = vmatprep.subr.bf16.mxu0 %v3763
        %3901 = vmatpush1.bf16.msra.mxu0 %v3762
        %3902 = vmatprep.subr.bf16.mxu0 %v3761
        %3903 = vmatpush1.bf16.msra.mxu0 %v3760
        %3904 = vmatprep.subr.bf16.mxu0 %v3791
        %3905 = vmatpush2.bf16.msra.mxu0 %v3790
        %3906 = vmatprep.subr.bf16.mxu0 %v3789
        %3907 = vmatpush2.bf16.msra.mxu0 %v3788
        %3908 = vmatprep.subr.bf16.mxu0 %v3787
        %3909 = vmatpush2.bf16.msra.mxu0 %v3786
        %3910 = vmatprep.subr.bf16.mxu0 %v3785
        %3911 = vmatpush2.bf16.msra.mxu0 %v3784
        %3912 = vmatprep.subr.bf16.mxu0 %v3783
        %3913 = vmatpush2.bf16.msra.mxu0 %v3782
        %3914 = vmatprep.subr.bf16.mxu0 %v3781
        %3915 = vmatpush2.bf16.msra.mxu0 %v3780
        %3916 = vmatprep.subr.bf16.mxu0 %v3779
        %3917 = vmatpush2.bf16.msra.mxu0 %v3778
        %3918 = vmatprep.subr.bf16.mxu0 %v3777
        %3919 = vmatpush2.bf16.msra.mxu0 %v3776
        %3920 = vmatprep.mubr.bf16.mxu0 %v3501
        %3921 = vmatmul.mubr.bf16.gmra.mxu0 %v3500
        %v3922 = vpop.f32.mrf.mxu0
        %v3923 = vadd.f32 0.0, %v3922
        %v3924 = vpop.f32.mrf.mxu0
        %v3925 = vadd.f32 0.0, %v3924
        %v3926 = vpop.f32.mrf.mxu0
        %v3927 = vadd.f32 0.0, %v3926
        %v3928 = vpop.f32.mrf.mxu0
        %v3929 = vadd.f32 0.0, %v3928
        %3930 = vdwg.mxu0
        %3931 = vmatprep.subr.bf16.mxu0 %v3807
        %3932 = vmatpush1.bf16.msra.mxu0 %v3806
        %3933 = vmatprep.subr.bf16.mxu0 %v3805
        %3934 = vmatpush1.bf16.msra.mxu0 %v3804
        %3935 = vmatprep.subr.bf16.mxu0 %v3803
        %3936 = vmatpush1.bf16.msra.mxu0 %v3802
        %3937 = vmatprep.subr.bf16.mxu0 %v3801
        %3938 = vmatpush1.bf16.msra.mxu0 %v3800
        %3939 = vmatprep.subr.bf16.mxu0 %v3799
        %3940 = vmatpush1.bf16.msra.mxu0 %v3798
        %3941 = vmatprep.subr.bf16.mxu0 %v3797
        %3942 = vmatpush1.bf16.msra.mxu0 %v3796
        %3943 = vmatprep.subr.bf16.mxu0 %v3795
        %3944 = vmatpush1.bf16.msra.mxu0 %v3794
        %3945 = vmatprep.subr.bf16.mxu0 %v3793
        %3946 = vmatpush1.bf16.msra.mxu0 %v3792
        %3947 = vmatprep.subr.bf16.mxu0 %v3823
        %3948 = vmatpush2.bf16.msra.mxu0 %v3822
        %3949 = vmatprep.subr.bf16.mxu0 %v3821
        %3950 = vmatpush2.bf16.msra.mxu0 %v3820
        %3951 = vmatprep.subr.bf16.mxu0 %v3819
        %3952 = vmatpush2.bf16.msra.mxu0 %v3818
        %3953 = vmatprep.subr.bf16.mxu0 %v3817
        %3954 = vmatpush2.bf16.msra.mxu0 %v3816
        %3955 = vmatprep.subr.bf16.mxu0 %v3815
        %3956 = vmatpush2.bf16.msra.mxu0 %v3814
        %3957 = vmatprep.subr.bf16.mxu0 %v3813
        %3958 = vmatpush2.bf16.msra.mxu0 %v3812
        %3959 = vmatprep.subr.bf16.mxu0 %v3811
        %3960 = vmatpush2.bf16.msra.mxu0 %v3810
        %3961 = vmatprep.subr.bf16.mxu0 %v3809
        %3962 = vmatpush2.bf16.msra.mxu0 %v3808
        %3963 = vmatprep.mubr.bf16.mxu0 %v3503
        %3964 = vmatmul.mubr.bf16.gmra.mxu0 %v3502
        %v3965 = vpop.f32.mrf.mxu0
        %v3966 = vadd.f32 %v3923, %v3965
        %v3967 = vpop.f32.mrf.mxu0
        %v3968 = vadd.f32 %v3925, %v3967
        %v3969 = vpop.f32.mrf.mxu0
        %v3970 = vadd.f32 %v3927, %v3969
        %v3971 = vpop.f32.mrf.mxu0
        %v3972 = vadd.f32 %v3929, %v3971
        %3973 = vdwg.mxu0
        %v3974 = vadd.f32 %v2454, %v3966
        %v3975 = vadd.f32 %v2455, %v3968
        %v3976 = vadd.f32 %v2456, %v3970
        %v3977 = vadd.f32 %v2457, %v3972
        %v3978 = vld [vmem:[%s1] sm:$0xff]
        %v3979 = vld [vmem:[%s1 + $0x8] sm:$0xff]
        %v3980 = vld [vmem:[%s1 + $0x10] sm:$0xff]
        %v3981 = vld [vmem:[%s1 + $0x18] sm:$0xff]
        %v3982 = vpack.c.bf16 %v3976, %v3974
        %v3983 = vpack.c.bf16 %v3977, %v3975
        %v3984 = vld [vmem:[%s807] sm:$0xff]
        %v3985 = vld [vmem:[%s807 + $0x8] sm:$0xff]
        %v3986 = vld [vmem:[%s807 + $0x10] sm:$0xff]
        %v3987 = vld [vmem:[%s807 + $0x18] sm:$0xff]
        %v3988 = vld [vmem:[%s807 + $0x20] sm:$0xff]
        %v3989 = vld [vmem:[%s807 + $0x28] sm:$0xff]
        %v3990 = vld [vmem:[%s807 + $0x30] sm:$0xff]
        %v3991 = vld [vmem:[%s807 + $0x38] sm:$0xff]
        %v3992 = vld [vmem:[%s807 + $0x40] sm:$0xff]
        %v3993 = vld [vmem:[%s807 + $0x48] sm:$0xff]
        %v3994 = vld [vmem:[%s807 + $0x50] sm:$0xff]
        %v3995 = vld [vmem:[%s807 + $0x58] sm:$0xff]
        %v3996 = vld [vmem:[%s807 + $0x60] sm:$0xff]
        %v3997 = vld [vmem:[%s807 + $0x68] sm:$0xff]
        %v3998 = vld [vmem:[%s807 + $0x70] sm:$0xff]
        %v3999 = vld [vmem:[%s807 + $0x78] sm:$0xff]
        %v4000 = vld [vmem:[%s807 + $0x80] sm:$0xff]
        %v4001 = vld [vmem:[%s807 + $0x88] sm:$0xff]
        %v4002 = vld [vmem:[%s807 + $0x90] sm:$0xff]
        %v4003 = vld [vmem:[%s807 + $0x98] sm:$0xff]
        %v4004 = vld [vmem:[%s807 + $0xa0] sm:$0xff]
        %v4005 = vld [vmem:[%s807 + $0xa8] sm:$0xff]
        %v4006 = vld [vmem:[%s807 + $0xb0] sm:$0xff]
        %v4007 = vld [vmem:[%s807 + $0xb8] sm:$0xff]
        %v4008 = vld [vmem:[%s807 + $0xc0] sm:$0xff]
        %v4009 = vld [vmem:[%s807 + $0xc8] sm:$0xff]
        %v4010 = vld [vmem:[%s807 + $0xd0] sm:$0xff]
        %v4011 = vld [vmem:[%s807 + $0xd8] sm:$0xff]
        %v4012 = vld [vmem:[%s807 + $0xe0] sm:$0xff]
        %v4013 = vld [vmem:[%s807 + $0xe8] sm:$0xff]
        %v4014 = vld [vmem:[%s807 + $0xf0] sm:$0xff]
        %v4015 = vld [vmem:[%s807 + $0xf8] sm:$0xff]
        %v4016 = vld [vmem:[%s951] sm:$0x3]
        %v4018 = vlaneseq
        %v4019 = vshrl.u32 %v4018, 7
        %v4020 = vsub.s32 0, %v4019
        %v4021 = vrot.slane %v4016, %v4020
        %v4022 = vlaneseq
        %v4023 = vshrl.u32 %v4022, 7
        %v4024 = vsub.s32 1, %v4023
        %v4025 = vrot.slane %v4016, %v4024
        %v4060 = vunpack.c.l.b16 %v3984
        %v4061 = vunpack.c.h.b16 %v3984
        %v4062 = vunpack.c.l.b16 %v3985
        %v4063 = vunpack.c.h.b16 %v3985
        %v4064 = vunpack.c.l.b16 %v3986
        %v4065 = vunpack.c.h.b16 %v3986
        %v4066 = vunpack.c.l.b16 %v3987
        %v4067 = vunpack.c.h.b16 %v3987
        %v4068 = vunpack.c.l.b16 %v3988
        %v4069 = vunpack.c.h.b16 %v3988
        %v4070 = vunpack.c.l.b16 %v3989
        %v4071 = vunpack.c.h.b16 %v3989
        %v4072 = vunpack.c.l.b16 %v3990
        %v4073 = vunpack.c.h.b16 %v3990
        %v4074 = vunpack.c.l.b16 %v3991
        %v4075 = vunpack.c.h.b16 %v3991
        %v4076 = vunpack.c.l.b16 %v3992
        %v4077 = vunpack.c.h.b16 %v3992
        %v4078 = vunpack.c.l.b16 %v3993
        %v4079 = vunpack.c.h.b16 %v3993
        %v4080 = vunpack.c.l.b16 %v3994
        %v4081 = vunpack.c.h.b16 %v3994
        %v4082 = vunpack.c.l.b16 %v3995
        %v4083 = vunpack.c.h.b16 %v3995
        %v4084 = vunpack.c.l.b16 %v3996
        %v4085 = vunpack.c.h.b16 %v3996
        %v4086 = vunpack.c.l.b16 %v3997
        %v4087 = vunpack.c.h.b16 %v3997
        %v4088 = vunpack.c.l.b16 %v3998
        %v4089 = vunpack.c.h.b16 %v3998
        %v4090 = vunpack.c.l.b16 %v3999
        %v4091 = vunpack.c.h.b16 %v3999
        %v4092 = vunpack.c.l.b16 %v4000
        %v4093 = vunpack.c.h.b16 %v4000
        %v4094 = vunpack.c.l.b16 %v4001
        %v4095 = vunpack.c.h.b16 %v4001
        %v4096 = vunpack.c.l.b16 %v4002
        %v4097 = vunpack.c.h.b16 %v4002
        %v4098 = vunpack.c.l.b16 %v4003
        %v4099 = vunpack.c.h.b16 %v4003
        %v4100 = vunpack.c.l.b16 %v4004
        %v4101 = vunpack.c.h.b16 %v4004
        %v4102 = vunpack.c.l.b16 %v4005
        %v4103 = vunpack.c.h.b16 %v4005
        %v4104 = vunpack.c.l.b16 %v4006
        %v4105 = vunpack.c.h.b16 %v4006
        %v4106 = vunpack.c.l.b16 %v4007
        %v4107 = vunpack.c.h.b16 %v4007
        %v4108 = vunpack.c.l.b16 %v4008
        %v4109 = vunpack.c.h.b16 %v4008
        %v4110 = vunpack.c.l.b16 %v4009
        %v4111 = vunpack.c.h.b16 %v4009
        %v4112 = vunpack.c.l.b16 %v4010
        %v4113 = vunpack.c.h.b16 %v4010
        %v4114 = vunpack.c.l.b16 %v4011
        %v4115 = vunpack.c.h.b16 %v4011
        %v4116 = vunpack.c.l.b16 %v4012
        %v4117 = vunpack.c.h.b16 %v4012
        %v4118 = vunpack.c.l.b16 %v4013
        %v4119 = vunpack.c.h.b16 %v4013
        %v4120 = vunpack.c.l.b16 %v4014
        %v4121 = vunpack.c.h.b16 %v4014
        %v4122 = vunpack.c.l.b16 %v4015
        %v4123 = vunpack.c.h.b16 %v4015
        %v4124 = vpack.c.b16 %v4062, %v4060
        %v4125 = vpack.c.b16 %v4063, %v4061
        %v4126 = vpack.c.b16 %v4066, %v4064
        %v4127 = vpack.c.b16 %v4067, %v4065
        %v4128 = vpack.c.b16 %v4070, %v4068
        %v4129 = vpack.c.b16 %v4071, %v4069
        %v4130 = vpack.c.b16 %v4074, %v4072
        %v4131 = vpack.c.b16 %v4075, %v4073
        %v4132 = vpack.c.b16 %v4078, %v4076
        %v4133 = vpack.c.b16 %v4079, %v4077
        %v4134 = vpack.c.b16 %v4082, %v4080
        %v4135 = vpack.c.b16 %v4083, %v4081
        %v4136 = vpack.c.b16 %v4086, %v4084
        %v4137 = vpack.c.b16 %v4087, %v4085
        %v4138 = vpack.c.b16 %v4090, %v4088
        %v4139 = vpack.c.b16 %v4091, %v4089
        %v4140 = vpack.c.b16 %v4094, %v4092
        %v4141 = vpack.c.b16 %v4095, %v4093
        %v4142 = vpack.c.b16 %v4098, %v4096
        %v4143 = vpack.c.b16 %v4099, %v4097
        %v4144 = vpack.c.b16 %v4102, %v4100
        %v4145 = vpack.c.b16 %v4103, %v4101
        %v4146 = vpack.c.b16 %v4106, %v4104
        %v4147 = vpack.c.b16 %v4107, %v4105
        %v4148 = vpack.c.b16 %v4110, %v4108
        %v4149 = vpack.c.b16 %v4111, %v4109
        %v4150 = vpack.c.b16 %v4114, %v4112
        %v4151 = vpack.c.b16 %v4115, %v4113
        %v4152 = vpack.c.b16 %v4118, %v4116
        %v4153 = vpack.c.b16 %v4119, %v4117
        %v4154 = vpack.c.b16 %v4122, %v4120
        %v4155 = vpack.c.b16 %v4123, %v4121
        %4188 = vmatprep.subr.bf16.mxu0 %v4139
        %4189 = vmatpush1.bf16.msra.mxu0 %v4138
        %4190 = vmatprep.subr.bf16.mxu0 %v4137
        %4191 = vmatpush1.bf16.msra.mxu0 %v4136
        %4192 = vmatprep.subr.bf16.mxu0 %v4135
        %4193 = vmatpush1.bf16.msra.mxu0 %v4134
        %4194 = vmatprep.subr.bf16.mxu0 %v4133
        %4195 = vmatpush1.bf16.msra.mxu0 %v4132
        %4196 = vmatprep.subr.bf16.mxu0 %v4131
        %4197 = vmatpush1.bf16.msra.mxu0 %v4130
        %4198 = vmatprep.subr.bf16.mxu0 %v4129
        %4199 = vmatpush1.bf16.msra.mxu0 %v4128
        %4200 = vmatprep.subr.bf16.mxu0 %v4127
        %4201 = vmatpush1.bf16.msra.mxu0 %v4126
        %4202 = vmatprep.subr.bf16.mxu0 %v4125
        %4203 = vmatpush1.bf16.msra.mxu0 %v4124
        %4204 = vmatprep.subr.bf16.mxu0 %v4155
        %4205 = vmatpush2.bf16.msra.mxu0 %v4154
        %4206 = vmatprep.subr.bf16.mxu0 %v4153
        %4207 = vmatpush2.bf16.msra.mxu0 %v4152
        %4208 = vmatprep.subr.bf16.mxu0 %v4151
        %4209 = vmatpush2.bf16.msra.mxu0 %v4150
        %4210 = vmatprep.subr.bf16.mxu0 %v4149
        %4211 = vmatpush2.bf16.msra.mxu0 %v4148
        %4212 = vmatprep.subr.bf16.mxu0 %v4147
        %4213 = vmatpush2.bf16.msra.mxu0 %v4146
        %4214 = vmatprep.subr.bf16.mxu0 %v4145
        %4215 = vmatpush2.bf16.msra.mxu0 %v4144
        %4216 = vmatprep.subr.bf16.mxu0 %v4143
        %4217 = vmatpush2.bf16.msra.mxu0 %v4142
        %4218 = vmatprep.subr.bf16.mxu0 %v4141
        %4219 = vmatpush2.bf16.msra.mxu0 %v4140
        %4220 = vmatprep.mubr.bf16.mxu0 %v3983
        %4221 = vmatmul.mubr.bf16.gmra.mxu0 %v3982
        %v4222 = vpop.f32.mrf.mxu0
        %v4223 = vadd.f32 %v4021, %v4222
        %v4224 = vpop.f32.mrf.mxu0
        %v4225 = vadd.f32 %v4025, %v4224
        %v4226 = vpop.f32.mrf.mxu0
        %v4227 = vadd.f32 %v4021, %v4226
        %v4228 = vpop.f32.mrf.mxu0
        %v4229 = vadd.f32 %v4025, %v4228
        %4230 = vdwg.mxu0
        %v4231 = vpack.c.bf16 %v3980, %v3978
        %v4232 = vpack.c.bf16 %v3981, %v3979
        %v4233 = vld [vmem:[%s816] sm:$0xff]
        %v4234 = vld [vmem:[%s816 + $0x8] sm:$0xff]
        %v4235 = vld [vmem:[%s816 + $0x10] sm:$0xff]
        %v4236 = vld [vmem:[%s816 + $0x18] sm:$0xff]
        %v4237 = vld [vmem:[%s816 + $0x20] sm:$0xff]
        %v4238 = vld [vmem:[%s816 + $0x28] sm:$0xff]
        %v4239 = vld [vmem:[%s816 + $0x30] sm:$0xff]
        %v4240 = vld [vmem:[%s816 + $0x38] sm:$0xff]
        %v4241 = vld [vmem:[%s816 + $0x40] sm:$0xff]
        %v4242 = vld [vmem:[%s816 + $0x48] sm:$0xff]
        %v4243 = vld [vmem:[%s816 + $0x50] sm:$0xff]
        %v4244 = vld [vmem:[%s816 + $0x58] sm:$0xff]
        %v4245 = vld [vmem:[%s816 + $0x60] sm:$0xff]
        %v4246 = vld [vmem:[%s816 + $0x68] sm:$0xff]
        %v4247 = vld [vmem:[%s816 + $0x70] sm:$0xff]
        %v4248 = vld [vmem:[%s816 + $0x78] sm:$0xff]
        %v4249 = vld [vmem:[%s816 + $0x80] sm:$0xff]
        %v4250 = vld [vmem:[%s816 + $0x88] sm:$0xff]
        %v4251 = vld [vmem:[%s816 + $0x90] sm:$0xff]
        %v4252 = vld [vmem:[%s816 + $0x98] sm:$0xff]
        %v4253 = vld [vmem:[%s816 + $0xa0] sm:$0xff]
        %v4254 = vld [vmem:[%s816 + $0xa8] sm:$0xff]
        %v4255 = vld [vmem:[%s816 + $0xb0] sm:$0xff]
        %v4256 = vld [vmem:[%s816 + $0xb8] sm:$0xff]
        %v4257 = vld [vmem:[%s816 + $0xc0] sm:$0xff]
        %v4258 = vld [vmem:[%s816 + $0xc8] sm:$0xff]
        %v4259 = vld [vmem:[%s816 + $0xd0] sm:$0xff]
        %v4260 = vld [vmem:[%s816 + $0xd8] sm:$0xff]
        %v4261 = vld [vmem:[%s816 + $0xe0] sm:$0xff]
        %v4262 = vld [vmem:[%s816 + $0xe8] sm:$0xff]
        %v4263 = vld [vmem:[%s816 + $0xf0] sm:$0xff]
        %v4264 = vld [vmem:[%s816 + $0xf8] sm:$0xff]
        %v4265 = vld [vmem:[%s816 + $0x100] sm:$0xff]
        %v4266 = vld [vmem:[%s816 + $0x108] sm:$0xff]
        %v4267 = vld [vmem:[%s816 + $0x110] sm:$0xff]
        %v4268 = vld [vmem:[%s816 + $0x118] sm:$0xff]
        %v4269 = vld [vmem:[%s816 + $0x120] sm:$0xff]
        %v4270 = vld [vmem:[%s816 + $0x128] sm:$0xff]
        %v4271 = vld [vmem:[%s816 + $0x130] sm:$0xff]
        %v4272 = vld [vmem:[%s816 + $0x138] sm:$0xff]
        %v4273 = vld [vmem:[%s816 + $0x140] sm:$0xff]
        %v4274 = vld [vmem:[%s816 + $0x148] sm:$0xff]
        %v4275 = vld [vmem:[%s816 + $0x150] sm:$0xff]
        %v4276 = vld [vmem:[%s816 + $0x158] sm:$0xff]
        %v4277 = vld [vmem:[%s816 + $0x160] sm:$0xff]
        %v4278 = vld [vmem:[%s816 + $0x168] sm:$0xff]
        %v4279 = vld [vmem:[%s816 + $0x170] sm:$0xff]
        %v4280 = vld [vmem:[%s816 + $0x178] sm:$0xff]
        %v4281 = vld [vmem:[%s816 + $0x180] sm:$0xff]
        %v4282 = vld [vmem:[%s816 + $0x188] sm:$0xff]
        %v4283 = vld [vmem:[%s816 + $0x190] sm:$0xff]
        %v4284 = vld [vmem:[%s816 + $0x198] sm:$0xff]
        %v4285 = vld [vmem:[%s816 + $0x1a0] sm:$0xff]
        %v4286 = vld [vmem:[%s816 + $0x1a8] sm:$0xff]
        %v4287 = vld [vmem:[%s816 + $0x1b0] sm:$0xff]
        %v4288 = vld [vmem:[%s816 + $0x1b8] sm:$0xff]
        %v4289 = vld [vmem:[%s816 + $0x1c0] sm:$0xff]
        %v4290 = vld [vmem:[%s816 + $0x1c8] sm:$0xff]
        %v4291 = vld [vmem:[%s816 + $0x1d0] sm:$0xff]
        %v4292 = vld [vmem:[%s816 + $0x1d8] sm:$0xff]
        %v4293 = vld [vmem:[%s816 + $0x1e0] sm:$0xff]
        %v4294 = vld [vmem:[%s816 + $0x1e8] sm:$0xff]
        %v4295 = vld [vmem:[%s816 + $0x1f0] sm:$0xff]
        %v4296 = vld [vmem:[%s816 + $0x1f8] sm:$0xff]
        %v4297 = vld [vmem:[%s955] sm:$0xf]
        %v4299 = vlaneseq
        %v4300 = vshrl.u32 %v4299, 7
        %v4301 = vsub.s32 0, %v4300
        %v4302 = vrot.slane %v4297, %v4301
        %v4303 = vlaneseq
        %v4304 = vshrl.u32 %v4303, 7
        %v4305 = vsub.s32 1, %v4304
        %v4306 = vrot.slane %v4297, %v4305
        %v4307 = vlaneseq
        %v4308 = vshrl.u32 %v4307, 7
        %v4309 = vsub.s32 2, %v4308
        %v4310 = vrot.slane %v4297, %v4309
        %v4311 = vlaneseq
        %v4312 = vshrl.u32 %v4311, 7
        %v4313 = vsub.s32 3, %v4312
        %v4314 = vrot.slane %v4297, %v4313
        %v4383 = vunpack.c.l.b16 %v4233
        %v4384 = vunpack.c.h.b16 %v4233
        %v4385 = vunpack.c.l.b16 %v4234
        %v4386 = vunpack.c.h.b16 %v4234
        %v4387 = vunpack.c.l.b16 %v4235
        %v4388 = vunpack.c.h.b16 %v4235
        %v4389 = vunpack.c.l.b16 %v4236
        %v4390 = vunpack.c.h.b16 %v4236
        %v4391 = vunpack.c.l.b16 %v4237
        %v4392 = vunpack.c.h.b16 %v4237
        %v4393 = vunpack.c.l.b16 %v4238
        %v4394 = vunpack.c.h.b16 %v4238
        %v4395 = vunpack.c.l.b16 %v4239
        %v4396 = vunpack.c.h.b16 %v4239
        %v4397 = vunpack.c.l.b16 %v4240
        %v4398 = vunpack.c.h.b16 %v4240
        %v4399 = vunpack.c.l.b16 %v4241
        %v4400 = vunpack.c.h.b16 %v4241
        %v4401 = vunpack.c.l.b16 %v4242
        %v4402 = vunpack.c.h.b16 %v4242
        %v4403 = vunpack.c.l.b16 %v4243
        %v4404 = vunpack.c.h.b16 %v4243
        %v4405 = vunpack.c.l.b16 %v4244
        %v4406 = vunpack.c.h.b16 %v4244
        %v4407 = vunpack.c.l.b16 %v4245
        %v4408 = vunpack.c.h.b16 %v4245
        %v4409 = vunpack.c.l.b16 %v4246
        %v4410 = vunpack.c.h.b16 %v4246
        %v4411 = vunpack.c.l.b16 %v4247
        %v4412 = vunpack.c.h.b16 %v4247
        %v4413 = vunpack.c.l.b16 %v4248
        %v4414 = vunpack.c.h.b16 %v4248
        %v4415 = vunpack.c.l.b16 %v4249
        %v4416 = vunpack.c.h.b16 %v4249
        %v4417 = vunpack.c.l.b16 %v4250
        %v4418 = vunpack.c.h.b16 %v4250
        %v4419 = vunpack.c.l.b16 %v4251
        %v4420 = vunpack.c.h.b16 %v4251
        %v4421 = vunpack.c.l.b16 %v4252
        %v4422 = vunpack.c.h.b16 %v4252
        %v4423 = vunpack.c.l.b16 %v4253
        %v4424 = vunpack.c.h.b16 %v4253
        %v4425 = vunpack.c.l.b16 %v4254
        %v4426 = vunpack.c.h.b16 %v4254
        %v4427 = vunpack.c.l.b16 %v4255
        %v4428 = vunpack.c.h.b16 %v4255
        %v4429 = vunpack.c.l.b16 %v4256
        %v4430 = vunpack.c.h.b16 %v4256
        %v4431 = vunpack.c.l.b16 %v4257
        %v4432 = vunpack.c.h.b16 %v4257
        %v4433 = vunpack.c.l.b16 %v4258
        %v4434 = vunpack.c.h.b16 %v4258
        %v4435 = vunpack.c.l.b16 %v4259
        %v4436 = vunpack.c.h.b16 %v4259
        %v4437 = vunpack.c.l.b16 %v4260
        %v4438 = vunpack.c.h.b16 %v4260
        %v4439 = vunpack.c.l.b16 %v4261
        %v4440 = vunpack.c.h.b16 %v4261
        %v4441 = vunpack.c.l.b16 %v4262
        %v4442 = vunpack.c.h.b16 %v4262
        %v4443 = vunpack.c.l.b16 %v4263
        %v4444 = vunpack.c.h.b16 %v4263
        %v4445 = vunpack.c.l.b16 %v4264
        %v4446 = vunpack.c.h.b16 %v4264
        %v4447 = vunpack.c.l.b16 %v4265
        %v4448 = vunpack.c.h.b16 %v4265
        %v4449 = vunpack.c.l.b16 %v4266
        %v4450 = vunpack.c.h.b16 %v4266
        %v4451 = vunpack.c.l.b16 %v4267
        %v4452 = vunpack.c.h.b16 %v4267
        %v4453 = vunpack.c.l.b16 %v4268
        %v4454 = vunpack.c.h.b16 %v4268
        %v4455 = vunpack.c.l.b16 %v4269
        %v4456 = vunpack.c.h.b16 %v4269
        %v4457 = vunpack.c.l.b16 %v4270
        %v4458 = vunpack.c.h.b16 %v4270
        %v4459 = vunpack.c.l.b16 %v4271
        %v4460 = vunpack.c.h.b16 %v4271
        %v4461 = vunpack.c.l.b16 %v4272
        %v4462 = vunpack.c.h.b16 %v4272
        %v4463 = vunpack.c.l.b16 %v4273
        %v4464 = vunpack.c.h.b16 %v4273
        %v4465 = vunpack.c.l.b16 %v4274
        %v4466 = vunpack.c.h.b16 %v4274
        %v4467 = vunpack.c.l.b16 %v4275
        %v4468 = vunpack.c.h.b16 %v4275
        %v4469 = vunpack.c.l.b16 %v4276
        %v4470 = vunpack.c.h.b16 %v4276
        %v4471 = vunpack.c.l.b16 %v4277
        %v4472 = vunpack.c.h.b16 %v4277
        %v4473 = vunpack.c.l.b16 %v4278
        %v4474 = vunpack.c.h.b16 %v4278
        %v4475 = vunpack.c.l.b16 %v4279
        %v4476 = vunpack.c.h.b16 %v4279
        %v4477 = vunpack.c.l.b16 %v4280
        %v4478 = vunpack.c.h.b16 %v4280
        %v4479 = vunpack.c.l.b16 %v4281
        %v4480 = vunpack.c.h.b16 %v4281
        %v4481 = vunpack.c.l.b16 %v4282
        %v4482 = vunpack.c.h.b16 %v4282
        %v4483 = vunpack.c.l.b16 %v4283
        %v4484 = vunpack.c.h.b16 %v4283
        %v4485 = vunpack.c.l.b16 %v4284
        %v4486 = vunpack.c.h.b16 %v4284
        %v4487 = vunpack.c.l.b16 %v4285
        %v4488 = vunpack.c.h.b16 %v4285
        %v4489 = vunpack.c.l.b16 %v4286
        %v4490 = vunpack.c.h.b16 %v4286
        %v4491 = vunpack.c.l.b16 %v4287
        %v4492 = vunpack.c.h.b16 %v4287
        %v4493 = vunpack.c.l.b16 %v4288
        %v4494 = vunpack.c.h.b16 %v4288
        %v4495 = vunpack.c.l.b16 %v4289
        %v4496 = vunpack.c.h.b16 %v4289
        %v4497 = vunpack.c.l.b16 %v4290
        %v4498 = vunpack.c.h.b16 %v4290
        %v4499 = vunpack.c.l.b16 %v4291
        %v4500 = vunpack.c.h.b16 %v4291
        %v4501 = vunpack.c.l.b16 %v4292
        %v4502 = vunpack.c.h.b16 %v4292
        %v4503 = vunpack.c.l.b16 %v4293
        %v4504 = vunpack.c.h.b16 %v4293
        %v4505 = vunpack.c.l.b16 %v4294
        %v4506 = vunpack.c.h.b16 %v4294
        %v4507 = vunpack.c.l.b16 %v4295
        %v4508 = vunpack.c.h.b16 %v4295
        %v4509 = vunpack.c.l.b16 %v4296
        %v4510 = vunpack.c.h.b16 %v4296
        %v4511 = vpack.c.b16 %v4387, %v4383
        %v4512 = vpack.c.b16 %v4388, %v4384
        %v4513 = vpack.c.b16 %v4389, %v4385
        %v4514 = vpack.c.b16 %v4390, %v4386
        %v4515 = vpack.c.b16 %v4395, %v4391
        %v4516 = vpack.c.b16 %v4396, %v4392
        %v4517 = vpack.c.b16 %v4397, %v4393
        %v4518 = vpack.c.b16 %v4398, %v4394
        %v4519 = vpack.c.b16 %v4403, %v4399
        %v4520 = vpack.c.b16 %v4404, %v4400
        %v4521 = vpack.c.b16 %v4405, %v4401
        %v4522 = vpack.c.b16 %v4406, %v4402
        %v4523 = vpack.c.b16 %v4411, %v4407
        %v4524 = vpack.c.b16 %v4412, %v4408
        %v4525 = vpack.c.b16 %v4413, %v4409
        %v4526 = vpack.c.b16 %v4414, %v4410
        %v4527 = vpack.c.b16 %v4419, %v4415
        %v4528 = vpack.c.b16 %v4420, %v4416
        %v4529 = vpack.c.b16 %v4421, %v4417
        %v4530 = vpack.c.b16 %v4422, %v4418
        %v4531 = vpack.c.b16 %v4427, %v4423
        %v4532 = vpack.c.b16 %v4428, %v4424
        %v4533 = vpack.c.b16 %v4429, %v4425
        %v4534 = vpack.c.b16 %v4430, %v4426
        %v4535 = vpack.c.b16 %v4435, %v4431
        %v4536 = vpack.c.b16 %v4436, %v4432
        %v4537 = vpack.c.b16 %v4437, %v4433
        %v4538 = vpack.c.b16 %v4438, %v4434
        %v4539 = vpack.c.b16 %v4443, %v4439
        %v4540 = vpack.c.b16 %v4444, %v4440
        %v4541 = vpack.c.b16 %v4445, %v4441
        %v4542 = vpack.c.b16 %v4446, %v4442
        %v4543 = vpack.c.b16 %v4451, %v4447
        %v4544 = vpack.c.b16 %v4452, %v4448
        %v4545 = vpack.c.b16 %v4453, %v4449
        %v4546 = vpack.c.b16 %v4454, %v4450
        %v4547 = vpack.c.b16 %v4459, %v4455
        %v4548 = vpack.c.b16 %v4460, %v4456
        %v4549 = vpack.c.b16 %v4461, %v4457
        %v4550 = vpack.c.b16 %v4462, %v4458
        %v4551 = vpack.c.b16 %v4467, %v4463
        %v4552 = vpack.c.b16 %v4468, %v4464
        %v4553 = vpack.c.b16 %v4469, %v4465
        %v4554 = vpack.c.b16 %v4470, %v4466
        %v4555 = vpack.c.b16 %v4475, %v4471
        %v4556 = vpack.c.b16 %v4476, %v4472
        %v4557 = vpack.c.b16 %v4477, %v4473
        %v4558 = vpack.c.b16 %v4478, %v4474
        %v4559 = vpack.c.b16 %v4483, %v4479
        %v4560 = vpack.c.b16 %v4484, %v4480
        %v4561 = vpack.c.b16 %v4485, %v4481
        %v4562 = vpack.c.b16 %v4486, %v4482
        %v4563 = vpack.c.b16 %v4491, %v4487
        %v4564 = vpack.c.b16 %v4492, %v4488
        %v4565 = vpack.c.b16 %v4493, %v4489
        %v4566 = vpack.c.b16 %v4494, %v4490
        %v4567 = vpack.c.b16 %v4499, %v4495
        %v4568 = vpack.c.b16 %v4500, %v4496
        %v4569 = vpack.c.b16 %v4501, %v4497
        %v4570 = vpack.c.b16 %v4502, %v4498
        %v4571 = vpack.c.b16 %v4507, %v4503
        %v4572 = vpack.c.b16 %v4508, %v4504
        %v4573 = vpack.c.b16 %v4509, %v4505
        %v4574 = vpack.c.b16 %v4510, %v4506
        %4639 = vmatprep.subr.bf16.mxu0 %v4540
        %4640 = vmatpush1.bf16.msra.mxu0 %v4539
        %4641 = vmatprep.subr.bf16.mxu0 %v4536
        %4642 = vmatpush1.bf16.msra.mxu0 %v4535
        %4643 = vmatprep.subr.bf16.mxu0 %v4532
        %4644 = vmatpush1.bf16.msra.mxu0 %v4531
        %4645 = vmatprep.subr.bf16.mxu0 %v4528
        %4646 = vmatpush1.bf16.msra.mxu0 %v4527
        %4647 = vmatprep.subr.bf16.mxu0 %v4524
        %4648 = vmatpush1.bf16.msra.mxu0 %v4523
        %4649 = vmatprep.subr.bf16.mxu0 %v4520
        %4650 = vmatpush1.bf16.msra.mxu0 %v4519
        %4651 = vmatprep.subr.bf16.mxu0 %v4516
        %4652 = vmatpush1.bf16.msra.mxu0 %v4515
        %4653 = vmatprep.subr.bf16.mxu0 %v4512
        %4654 = vmatpush1.bf16.msra.mxu0 %v4511
        %4655 = vmatprep.subr.bf16.mxu0 %v4572
        %4656 = vmatpush2.bf16.msra.mxu0 %v4571
        %4657 = vmatprep.subr.bf16.mxu0 %v4568
        %4658 = vmatpush2.bf16.msra.mxu0 %v4567
        %4659 = vmatprep.subr.bf16.mxu0 %v4564
        %4660 = vmatpush2.bf16.msra.mxu0 %v4563
        %4661 = vmatprep.subr.bf16.mxu0 %v4560
        %4662 = vmatpush2.bf16.msra.mxu0 %v4559
        %4663 = vmatprep.subr.bf16.mxu0 %v4556
        %4664 = vmatpush2.bf16.msra.mxu0 %v4555
        %4665 = vmatprep.subr.bf16.mxu0 %v4552
        %4666 = vmatpush2.bf16.msra.mxu0 %v4551
        %4667 = vmatprep.subr.bf16.mxu0 %v4548
        %4668 = vmatpush2.bf16.msra.mxu0 %v4547
        %4669 = vmatprep.subr.bf16.mxu0 %v4544
        %4670 = vmatpush2.bf16.msra.mxu0 %v4543
        %4671 = vmatprep.mubr.bf16.mxu0 %v4232
        %4672 = vmatmul.mubr.bf16.gmra.mxu0 %v4231
        %v4673 = vpop.f32.mrf.mxu0
        %v4674 = vadd.f32 %v4302, %v4673
        %v4675 = vpop.f32.mrf.mxu0
        %v4676 = vadd.f32 %v4306, %v4675
        %v4677 = vpop.f32.mrf.mxu0
        %v4678 = vadd.f32 %v4302, %v4677
        %v4679 = vpop.f32.mrf.mxu0
        %v4680 = vadd.f32 %v4306, %v4679
        %4681 = vdwg.mxu0
        %4682 = vmatprep.subr.bf16.mxu0 %v4542
        %4683 = vmatpush1.bf16.msra.mxu0 %v4541
        %4684 = vmatprep.subr.bf16.mxu0 %v4538
        %4685 = vmatpush1.bf16.msra.mxu0 %v4537
        %4686 = vmatprep.subr.bf16.mxu0 %v4534
        %4687 = vmatpush1.bf16.msra.mxu0 %v4533
        %4688 = vmatprep.subr.bf16.mxu0 %v4530
        %4689 = vmatpush1.bf16.msra.mxu0 %v4529
        %4690 = vmatprep.subr.bf16.mxu0 %v4526
        %4691 = vmatpush1.bf16.msra.mxu0 %v4525
        %4692 = vmatprep.subr.bf16.mxu0 %v4522
        %4693 = vmatpush1.bf16.msra.mxu0 %v4521
        %4694 = vmatprep.subr.bf16.mxu0 %v4518
        %4695 = vmatpush1.bf16.msra.mxu0 %v4517
        %4696 = vmatprep.subr.bf16.mxu0 %v4514
        %4697 = vmatpush1.bf16.msra.mxu0 %v4513
        %4698 = vmatprep.subr.bf16.mxu0 %v4574
        %4699 = vmatpush2.bf16.msra.mxu0 %v4573
        %4700 = vmatprep.subr.bf16.mxu0 %v4570
        %4701 = vmatpush2.bf16.msra.mxu0 %v4569
        %4702 = vmatprep.subr.bf16.mxu0 %v4566
        %4703 = vmatpush2.bf16.msra.mxu0 %v4565
        %4704 = vmatprep.subr.bf16.mxu0 %v4562
        %4705 = vmatpush2.bf16.msra.mxu0 %v4561
        %4706 = vmatprep.subr.bf16.mxu0 %v4558
        %4707 = vmatpush2.bf16.msra.mxu0 %v4557
        %4708 = vmatprep.subr.bf16.mxu0 %v4554
        %4709 = vmatpush2.bf16.msra.mxu0 %v4553
        %4710 = vmatprep.subr.bf16.mxu0 %v4550
        %4711 = vmatpush2.bf16.msra.mxu0 %v4549
        %4712 = vmatprep.subr.bf16.mxu0 %v4546
        %4713 = vmatpush2.bf16.msra.mxu0 %v4545
        %4714 = vmatprep.mubr.bf16.mxu0 %v4232
        %4715 = vmatmul.mubr.bf16.gmra.mxu0 %v4231
        %v4716 = vpop.f32.mrf.mxu0
        %v4717 = vadd.f32 %v4310, %v4716
        %v4718 = vpop.f32.mrf.mxu0
        %v4719 = vadd.f32 %v4314, %v4718
        %v4720 = vpop.f32.mrf.mxu0
        %v4721 = vadd.f32 %v4310, %v4720
        %v4722 = vpop.f32.mrf.mxu0
        %v4723 = vadd.f32 %v4314, %v4722
        %4724 = vdwg.mxu0
        %v4725 = vmul.f32 %v4223, 0.088388346
        %v4726 = vmul.f32 %v4227, 0.088388346
        %v4727 = vpack.c.bf16 %v4725, %v4725
        %v4728 = vpack.c.bf16 %v4726, %v4726
        %v4729 = vpack.c.bf16 %v4674, %v4674
        %v4730 = vpack.c.bf16 %v4678, %v4678
        %v4731 = vpack.c.bf16 %v4717, %v4717
        %v4732 = vpack.c.bf16 %v4721, %v4721
        %4733 = vmatprep.subr.bf16.mxu0 0
        %4734 = vmatpush1.bf16.xpose.msra.mxu0 0
        %4735 = vmatprep.subr.bf16.mxu0 0
        %4736 = vmatpush1.bf16.xpose.msra.mxu0 0
        %4737 = vmatprep.subr.bf16.mxu0 0
        %4738 = vmatpush1.bf16.xpose.msra.mxu0 0
        %4739 = vmatprep.subr.bf16.mxu0 0
        %4740 = vmatpush1.bf16.xpose.msra.mxu0 0
        %4741 = vmatprep.subr.bf16.mxu0 0
        %4742 = vmatpush1.bf16.xpose.msra.mxu0 0
        %4743 = vmatprep.subr.bf16.mxu0 0
        %4744 = vmatpush1.bf16.xpose.msra.mxu0 0
        %4745 = vmatprep.subr.bf16.mxu0 0
        %4746 = vmatpush1.bf16.xpose.msra.mxu0 0
        %4747 = vmatprep.subr.bf16.mxu0 0
        %4748 = vmatpush1.bf16.xpose.msra.mxu0 %v4729
        %4749 = vmatprep.subr.bf16.mxu0 0
        %4750 = vmatpush2.bf16.xpose.msra.mxu0 0
        %4751 = vmatprep.subr.bf16.mxu0 0
        %4752 = vmatpush2.bf16.xpose.msra.mxu0 0
        %4753 = vmatprep.subr.bf16.mxu0 0
        %4754 = vmatpush2.bf16.xpose.msra.mxu0 0
        %4755 = vmatprep.subr.bf16.mxu0 0
        %4756 = vmatpush2.bf16.xpose.msra.mxu0 0
        %4757 = vmatprep.subr.bf16.mxu0 0
        %4758 = vmatpush2.bf16.xpose.msra.mxu0 0
        %4759 = vmatprep.subr.bf16.mxu0 0
        %4760 = vmatpush2.bf16.xpose.msra.mxu0 0
        %4761 = vmatprep.subr.bf16.mxu0 0
        %4762 = vmatpush2.bf16.xpose.msra.mxu0 0
        %4763 = vmatprep.subr.bf16.mxu0 0
        %4764 = vmatpush2.bf16.xpose.msra.mxu0 0
        %4765 = vmatprep.mubr.bf16.mxu0 0
        %4766 = vmatmul.mubr.bf16.gmra.mxu0 %v4727
        %v4767 = vpop.f32.mrf.mxu0
        %v4768 = vadd.f32 0.0, %v4767
        %v4769 = vpop.f32.mrf.mxu0
        %v4770 = vpop.f32.mrf.mxu0
        %v4771 = vpop.f32.mrf.mxu0
        %4772 = vdwg.mxu0
        %4773 = vmatprep.subr.bf16.mxu0 0
        %4774 = vmatpush1.bf16.xpose.msra.mxu0 0
        %4775 = vmatprep.subr.bf16.mxu0 0
        %4776 = vmatpush1.bf16.xpose.msra.mxu0 0
        %4777 = vmatprep.subr.bf16.mxu0 0
        %4778 = vmatpush1.bf16.xpose.msra.mxu0 0
        %4779 = vmatprep.subr.bf16.mxu0 0
        %4780 = vmatpush1.bf16.xpose.msra.mxu0 0
        %4781 = vmatprep.subr.bf16.mxu0 0
        %4782 = vmatpush1.bf16.xpose.msra.mxu0 0
        %4783 = vmatprep.subr.bf16.mxu0 0
        %4784 = vmatpush1.bf16.xpose.msra.mxu0 0
        %4785 = vmatprep.subr.bf16.mxu0 0
        %4786 = vmatpush1.bf16.xpose.msra.mxu0 0
        %4787 = vmatprep.subr.bf16.mxu0 0
        %4788 = vmatpush1.bf16.xpose.msra.mxu0 %v4730
        %4789 = vmatprep.subr.bf16.mxu0 0
        %4790 = vmatpush2.bf16.xpose.msra.mxu0 0
        %4791 = vmatprep.subr.bf16.mxu0 0
        %4792 = vmatpush2.bf16.xpose.msra.mxu0 0
        %4793 = vmatprep.subr.bf16.mxu0 0
        %4794 = vmatpush2.bf16.xpose.msra.mxu0 0
        %4795 = vmatprep.subr.bf16.mxu0 0
        %4796 = vmatpush2.bf16.xpose.msra.mxu0 0
        %4797 = vmatprep.subr.bf16.mxu0 0
        %4798 = vmatpush2.bf16.xpose.msra.mxu0 0
        %4799 = vmatprep.subr.bf16.mxu0 0
        %4800 = vmatpush2.bf16.xpose.msra.mxu0 0
        %4801 = vmatprep.subr.bf16.mxu0 0
        %4802 = vmatpush2.bf16.xpose.msra.mxu0 0
        %4803 = vmatprep.subr.bf16.mxu0 0
        %4804 = vmatpush2.bf16.xpose.msra.mxu0 0
        %4805 = vmatprep.mubr.bf16.mxu0 0
        %4806 = vmatmul.mubr.bf16.gmra.mxu0 %v4728
        %v4807 = vpop.f32.mrf.mxu0
        %v4808 = vadd.f32 0.0, %v4807
        %v4809 = vpop.f32.mrf.mxu0
        %v4810 = vpop.f32.mrf.mxu0
        %v4811 = vpop.f32.mrf.mxu0
        %4812 = vdwg.mxu0
        %v4813 = vsel %vm1865, %v4768, -inf
        %4814 = vmax.xlane.f32.xlu0 %v4813
        %v4815 = vpop.xlane.xlu0 %4814
        %v4816 = vsel %vm1865, %v4808, -inf
        %4817 = vmax.xlane.f32.xlu0 %v4816
        %v4818 = vpop.xlane.xlu0 %4817
        %v4819 = vsub.f32 %v4768, %v4815
        %v4820 = vsub.f32 %v4808, %v4818
        %v4821 = vmul.f32 %v4819, 1.442695
        %v4822 = vpow.pop %v4821
        %v4823 = vmul.f32 %v4820, 1.442695
        %v4824 = vpow.pop %v4823
        %v4825 = vsel %vm1865, %v4822, 0.0
        %4826 = vadd.xlane.f32.xlu0 %v4825
        %v4827 = vpop.xlane.xlu0 %4826
        %v4828 = vsel %vm1865, %v4824, 0.0
        %4829 = vadd.xlane.f32.xlu0 %v4828
        %v4830 = vpop.xlane.xlu0 %4829
        %v4831 = vrcp.pop %v4827
        %v4832 = vrcp.pop %v4830
        %v4833 = vmul.f32 %v4822, %v4831
        %v4834 = vmul.f32 %v4824, %v4832
        %v4835 = vpack.c.bf16 %v4833, %v4833
        %v4836 = vpack.c.bf16 %v4834, %v4834
        %v4838 = vsel %vm1865, %v4835, 0
        %v4841 = vsel %vm1895, %v4731, 0
        %4843 = vmatprep.subr.bf16.mxu0 0
        %4844 = vmatpush1.bf16.msra.mxu0 0
        %4845 = vmatprep.subr.bf16.mxu0 0
        %4846 = vmatpush1.bf16.msra.mxu0 0
        %4847 = vmatprep.subr.bf16.mxu0 0
        %4848 = vmatpush1.bf16.msra.mxu0 0
        %4849 = vmatprep.subr.bf16.mxu0 0
        %4850 = vmatpush1.bf16.msra.mxu0 0
        %4851 = vmatprep.subr.bf16.mxu0 0
        %4852 = vmatpush1.bf16.msra.mxu0 0
        %4853 = vmatprep.subr.bf16.mxu0 0
        %4854 = vmatpush1.bf16.msra.mxu0 0
        %4855 = vmatprep.subr.bf16.mxu0 0
        %4856 = vmatpush1.bf16.msra.mxu0 0
        %4857 = vmatprep.subr.bf16.mxu0 0
        %4858 = vmatpush1.bf16.msra.mxu0 %v4841
        %4859 = vmatprep.subr.bf16.mxu0 0
        %4860 = vmatpush2.bf16.msra.mxu0 0
        %4861 = vmatprep.subr.bf16.mxu0 0
        %4862 = vmatpush2.bf16.msra.mxu0 0
        %4863 = vmatprep.subr.bf16.mxu0 0
        %4864 = vmatpush2.bf16.msra.mxu0 0
        %4865 = vmatprep.subr.bf16.mxu0 0
        %4866 = vmatpush2.bf16.msra.mxu0 0
        %4867 = vmatprep.subr.bf16.mxu0 0
        %4868 = vmatpush2.bf16.msra.mxu0 0
        %4869 = vmatprep.subr.bf16.mxu0 0
        %4870 = vmatpush2.bf16.msra.mxu0 0
        %4871 = vmatprep.subr.bf16.mxu0 0
        %4872 = vmatpush2.bf16.msra.mxu0 0
        %4873 = vmatprep.subr.bf16.mxu0 0
        %4874 = vmatpush2.bf16.msra.mxu0 0
        %4875 = vmatprep.mubr.bf16.mxu0 0
        %4876 = vmatmul.mubr.bf16.gmra.mxu0 %v4838
        %v4877 = vpop.f32.mrf.mxu0
        %v4878 = vadd.f32 0.0, %v4877
        %v4879 = vpop.f32.mrf.mxu0
        %v4880 = vpop.f32.mrf.mxu0
        %v4881 = vpop.f32.mrf.mxu0
        %4882 = vdwg.mxu0
        %v4884 = vsel %vm1865, %v4836, 0
        %v4887 = vsel %vm1895, %v4732, 0
        %4889 = vmatprep.subr.bf16.mxu0 0
        %4890 = vmatpush1.bf16.msra.mxu0 0
        %4891 = vmatprep.subr.bf16.mxu0 0
        %4892 = vmatpush1.bf16.msra.mxu0 0
        %4893 = vmatprep.subr.bf16.mxu0 0
        %4894 = vmatpush1.bf16.msra.mxu0 0
        %4895 = vmatprep.subr.bf16.mxu0 0
        %4896 = vmatpush1.bf16.msra.mxu0 0
        %4897 = vmatprep.subr.bf16.mxu0 0
        %4898 = vmatpush1.bf16.msra.mxu0 0
        %4899 = vmatprep.subr.bf16.mxu0 0
        %4900 = vmatpush1.bf16.msra.mxu0 0
        %4901 = vmatprep.subr.bf16.mxu0 0
        %4902 = vmatpush1.bf16.msra.mxu0 0
        %4903 = vmatprep.subr.bf16.mxu0 0
        %4904 = vmatpush1.bf16.msra.mxu0 %v4887
        %4905 = vmatprep.subr.bf16.mxu0 0
        %4906 = vmatpush2.bf16.msra.mxu0 0
        %4907 = vmatprep.subr.bf16.mxu0 0
        %4908 = vmatpush2.bf16.msra.mxu0 0
        %4909 = vmatprep.subr.bf16.mxu0 0
        %4910 = vmatpush2.bf16.msra.mxu0 0
        %4911 = vmatprep.subr.bf16.mxu0 0
        %4912 = vmatpush2.bf16.msra.mxu0 0
        %4913 = vmatprep.subr.bf16.mxu0 0
        %4914 = vmatpush2.bf16.msra.mxu0 0
        %4915 = vmatprep.subr.bf16.mxu0 0
        %4916 = vmatpush2.bf16.msra.mxu0 0
        %4917 = vmatprep.subr.bf16.mxu0 0
        %4918 = vmatpush2.bf16.msra.mxu0 0
        %4919 = vmatprep.subr.bf16.mxu0 0
        %4920 = vmatpush2.bf16.msra.mxu0 0
        %4921 = vmatprep.mubr.bf16.mxu0 0
        %4922 = vmatmul.mubr.bf16.gmra.mxu0 %v4884
        %v4923 = vpop.f32.mrf.mxu0
        %v4924 = vadd.f32 0.0, %v4923
        %v4925 = vpop.f32.mrf.mxu0
        %v4926 = vpop.f32.mrf.mxu0
        %v4927 = vpop.f32.mrf.mxu0
        %4928 = vdwg.mxu0
        %4929 = vst [vmem:[#allocation2] sm:$0xff] %v4878
        %4930 = vst [vmem:[#allocation2 + $0x10] sm:$0xff] %v4924
        %v4931 = vmul.f32 %v4225, 0.088388346
        %v4932 = vmul.f32 %v4229, 0.088388346
        %v4933 = vpack.c.bf16 %v4931, %v4931
        %v4934 = vpack.c.bf16 %v4932, %v4932
        %v4935 = vpack.c.bf16 %v4676, %v4676
        %v4936 = vpack.c.bf16 %v4680, %v4680
        %v4937 = vpack.c.bf16 %v4719, %v4719
        %v4938 = vpack.c.bf16 %v4723, %v4723
        %4939 = vmatprep.subr.bf16.mxu0 0
        %4940 = vmatpush1.bf16.xpose.msra.mxu0 0
        %4941 = vmatprep.subr.bf16.mxu0 0
        %4942 = vmatpush1.bf16.xpose.msra.mxu0 0
        %4943 = vmatprep.subr.bf16.mxu0 0
        %4944 = vmatpush1.bf16.xpose.msra.mxu0 0
        %4945 = vmatprep.subr.bf16.mxu0 0
        %4946 = vmatpush1.bf16.xpose.msra.mxu0 0
        %4947 = vmatprep.subr.bf16.mxu0 0
        %4948 = vmatpush1.bf16.xpose.msra.mxu0 0
        %4949 = vmatprep.subr.bf16.mxu0 0
        %4950 = vmatpush1.bf16.xpose.msra.mxu0 0
        %4951 = vmatprep.subr.bf16.mxu0 0
        %4952 = vmatpush1.bf16.xpose.msra.mxu0 0
        %4953 = vmatprep.subr.bf16.mxu0 0
        %4954 = vmatpush1.bf16.xpose.msra.mxu0 %v4935
        %4955 = vmatprep.subr.bf16.mxu0 0
        %4956 = vmatpush2.bf16.xpose.msra.mxu0 0
        %4957 = vmatprep.subr.bf16.mxu0 0
        %4958 = vmatpush2.bf16.xpose.msra.mxu0 0
        %4959 = vmatprep.subr.bf16.mxu0 0
        %4960 = vmatpush2.bf16.xpose.msra.mxu0 0
        %4961 = vmatprep.subr.bf16.mxu0 0
        %4962 = vmatpush2.bf16.xpose.msra.mxu0 0
        %4963 = vmatprep.subr.bf16.mxu0 0
        %4964 = vmatpush2.bf16.xpose.msra.mxu0 0
        %4965 = vmatprep.subr.bf16.mxu0 0
        %4966 = vmatpush2.bf16.xpose.msra.mxu0 0
        %4967 = vmatprep.subr.bf16.mxu0 0
        %4968 = vmatpush2.bf16.xpose.msra.mxu0 0
        %4969 = vmatprep.subr.bf16.mxu0 0
        %4970 = vmatpush2.bf16.xpose.msra.mxu0 0
        %4971 = vmatprep.mubr.bf16.mxu0 0
        %4972 = vmatmul.mubr.bf16.gmra.mxu0 %v4933
        %v4973 = vpop.f32.mrf.mxu0
        %v4974 = vadd.f32 0.0, %v4973
        %v4975 = vpop.f32.mrf.mxu0
        %v4976 = vpop.f32.mrf.mxu0
        %v4977 = vpop.f32.mrf.mxu0
        %4978 = vdwg.mxu0
        %4979 = vmatprep.subr.bf16.mxu0 0
        %4980 = vmatpush1.bf16.xpose.msra.mxu0 0
        %4981 = vmatprep.subr.bf16.mxu0 0
        %4982 = vmatpush1.bf16.xpose.msra.mxu0 0
        %4983 = vmatprep.subr.bf16.mxu0 0
        %4984 = vmatpush1.bf16.xpose.msra.mxu0 0
        %4985 = vmatprep.subr.bf16.mxu0 0
        %4986 = vmatpush1.bf16.xpose.msra.mxu0 0
        %4987 = vmatprep.subr.bf16.mxu0 0
        %4988 = vmatpush1.bf16.xpose.msra.mxu0 0
        %4989 = vmatprep.subr.bf16.mxu0 0
        %4990 = vmatpush1.bf16.xpose.msra.mxu0 0
        %4991 = vmatprep.subr.bf16.mxu0 0
        %4992 = vmatpush1.bf16.xpose.msra.mxu0 0
        %4993 = vmatprep.subr.bf16.mxu0 0
        %4994 = vmatpush1.bf16.xpose.msra.mxu0 %v4936
        %4995 = vmatprep.subr.bf16.mxu0 0
        %4996 = vmatpush2.bf16.xpose.msra.mxu0 0
        %4997 = vmatprep.subr.bf16.mxu0 0
        %4998 = vmatpush2.bf16.xpose.msra.mxu0 0
        %4999 = vmatprep.subr.bf16.mxu0 0
        %5000 = vmatpush2.bf16.xpose.msra.mxu0 0
        %5001 = vmatprep.subr.bf16.mxu0 0
        %5002 = vmatpush2.bf16.xpose.msra.mxu0 0
        %5003 = vmatprep.subr.bf16.mxu0 0
        %5004 = vmatpush2.bf16.xpose.msra.mxu0 0
        %5005 = vmatprep.subr.bf16.mxu0 0
        %5006 = vmatpush2.bf16.xpose.msra.mxu0 0
        %5007 = vmatprep.subr.bf16.mxu0 0
        %5008 = vmatpush2.bf16.xpose.msra.mxu0 0
        %5009 = vmatprep.subr.bf16.mxu0 0
        %5010 = vmatpush2.bf16.xpose.msra.mxu0 0
        %5011 = vmatprep.mubr.bf16.mxu0 0
        %5012 = vmatmul.mubr.bf16.gmra.mxu0 %v4934
        %v5013 = vpop.f32.mrf.mxu0
        %v5014 = vadd.f32 0.0, %v5013
        %v5015 = vpop.f32.mrf.mxu0
        %v5016 = vpop.f32.mrf.mxu0
        %v5017 = vpop.f32.mrf.mxu0
        %5018 = vdwg.mxu0
        %v5019 = vsel %vm1865, %v4974, -inf
        %5020 = vmax.xlane.f32.xlu0 %v5019
        %v5021 = vpop.xlane.xlu0 %5020
        %v5022 = vsel %vm1865, %v5014, -inf
        %5023 = vmax.xlane.f32.xlu0 %v5022
        %v5024 = vpop.xlane.xlu0 %5023
        %v5025 = vsub.f32 %v4974, %v5021
        %v5026 = vsub.f32 %v5014, %v5024
        %v5027 = vmul.f32 %v5025, 1.442695
        %v5028 = vpow.pop %v5027
        %v5029 = vmul.f32 %v5026, 1.442695
        %v5030 = vpow.pop %v5029
        %v5031 = vsel %vm1865, %v5028, 0.0
        %5032 = vadd.xlane.f32.xlu0 %v5031
        %v5033 = vpop.xlane.xlu0 %5032
        %v5034 = vsel %vm1865, %v5030, 0.0
        %5035 = vadd.xlane.f32.xlu0 %v5034
        %v5036 = vpop.xlane.xlu0 %5035
        %v5037 = vrcp.pop %v5033
        %v5038 = vrcp.pop %v5036
        %v5039 = vmul.f32 %v5028, %v5037
        %v5040 = vmul.f32 %v5030, %v5038
        %v5041 = vpack.c.bf16 %v5039, %v5039
        %v5042 = vpack.c.bf16 %v5040, %v5040
        %v5044 = vsel %vm1865, %v5041, 0
        %v5047 = vsel %vm1895, %v4937, 0
        %5049 = vmatprep.subr.bf16.mxu0 0
        %5050 = vmatpush1.bf16.msra.mxu0 0
        %5051 = vmatprep.subr.bf16.mxu0 0
        %5052 = vmatpush1.bf16.msra.mxu0 0
        %5053 = vmatprep.subr.bf16.mxu0 0
        %5054 = vmatpush1.bf16.msra.mxu0 0
        %5055 = vmatprep.subr.bf16.mxu0 0
        %5056 = vmatpush1.bf16.msra.mxu0 0
        %5057 = vmatprep.subr.bf16.mxu0 0
        %5058 = vmatpush1.bf16.msra.mxu0 0
        %5059 = vmatprep.subr.bf16.mxu0 0
        %5060 = vmatpush1.bf16.msra.mxu0 0
        %5061 = vmatprep.subr.bf16.mxu0 0
        %5062 = vmatpush1.bf16.msra.mxu0 0
        %5063 = vmatprep.subr.bf16.mxu0 0
        %5064 = vmatpush1.bf16.msra.mxu0 %v5047
        %5065 = vmatprep.subr.bf16.mxu0 0
        %5066 = vmatpush2.bf16.msra.mxu0 0
        %5067 = vmatprep.subr.bf16.mxu0 0
        %5068 = vmatpush2.bf16.msra.mxu0 0
        %5069 = vmatprep.subr.bf16.mxu0 0
        %5070 = vmatpush2.bf16.msra.mxu0 0
        %5071 = vmatprep.subr.bf16.mxu0 0
        %5072 = vmatpush2.bf16.msra.mxu0 0
        %5073 = vmatprep.subr.bf16.mxu0 0
        %5074 = vmatpush2.bf16.msra.mxu0 0
        %5075 = vmatprep.subr.bf16.mxu0 0
        %5076 = vmatpush2.bf16.msra.mxu0 0
        %5077 = vmatprep.subr.bf16.mxu0 0
        %5078 = vmatpush2.bf16.msra.mxu0 0
        %5079 = vmatprep.subr.bf16.mxu0 0
        %5080 = vmatpush2.bf16.msra.mxu0 0
        %5081 = vmatprep.mubr.bf16.mxu0 0
        %5082 = vmatmul.mubr.bf16.gmra.mxu0 %v5044
        %v5083 = vpop.f32.mrf.mxu0
        %v5084 = vadd.f32 0.0, %v5083
        %v5085 = vpop.f32.mrf.mxu0
        %v5086 = vpop.f32.mrf.mxu0
        %v5087 = vpop.f32.mrf.mxu0
        %5088 = vdwg.mxu0
        %v5090 = vsel %vm1865, %v5042, 0
        %v5093 = vsel %vm1895, %v4938, 0
        %5095 = vmatprep.subr.bf16.mxu0 0
        %5096 = vmatpush1.bf16.msra.mxu0 0
        %5097 = vmatprep.subr.bf16.mxu0 0
        %5098 = vmatpush1.bf16.msra.mxu0 0
        %5099 = vmatprep.subr.bf16.mxu0 0
        %5100 = vmatpush1.bf16.msra.mxu0 0
        %5101 = vmatprep.subr.bf16.mxu0 0
        %5102 = vmatpush1.bf16.msra.mxu0 0
        %5103 = vmatprep.subr.bf16.mxu0 0
        %5104 = vmatpush1.bf16.msra.mxu0 0
        %5105 = vmatprep.subr.bf16.mxu0 0
        %5106 = vmatpush1.bf16.msra.mxu0 0
        %5107 = vmatprep.subr.bf16.mxu0 0
        %5108 = vmatpush1.bf16.msra.mxu0 0
        %5109 = vmatprep.subr.bf16.mxu0 0
        %5110 = vmatpush1.bf16.msra.mxu0 %v5093
        %5111 = vmatprep.subr.bf16.mxu0 0
        %5112 = vmatpush2.bf16.msra.mxu0 0
        %5113 = vmatprep.subr.bf16.mxu0 0
        %5114 = vmatpush2.bf16.msra.mxu0 0
        %5115 = vmatprep.subr.bf16.mxu0 0
        %5116 = vmatpush2.bf16.msra.mxu0 0
        %5117 = vmatprep.subr.bf16.mxu0 0
        %5118 = vmatpush2.bf16.msra.mxu0 0
        %5119 = vmatprep.subr.bf16.mxu0 0
        %5120 = vmatpush2.bf16.msra.mxu0 0
        %5121 = vmatprep.subr.bf16.mxu0 0
        %5122 = vmatpush2.bf16.msra.mxu0 0
        %5123 = vmatprep.subr.bf16.mxu0 0
        %5124 = vmatpush2.bf16.msra.mxu0 0
        %5125 = vmatprep.subr.bf16.mxu0 0
        %5126 = vmatpush2.bf16.msra.mxu0 0
        %5127 = vmatprep.mubr.bf16.mxu0 0
        %5128 = vmatmul.mubr.bf16.gmra.mxu0 %v5090
        %v5129 = vpop.f32.mrf.mxu0
        %v5130 = vadd.f32 0.0, %v5129
        %v5131 = vpop.f32.mrf.mxu0
        %v5132 = vpop.f32.mrf.mxu0
        %v5133 = vpop.f32.mrf.mxu0
        %5134 = vdwg.mxu0
        %5135 = vst [vmem:[#allocation2 + $0x8] sm:$0xff] %v5084
        %5136 = vst [vmem:[#allocation2 + $0x18] sm:$0xff] %v5130
        %v5137 = vld [vmem:[#allocation2] sm:$0xff]
        %v5138 = vld [vmem:[#allocation2 + $0x8] sm:$0xff]
        %v5139 = vld [vmem:[#allocation2 + $0x10] sm:$0xff]
        %v5140 = vld [vmem:[#allocation2 + $0x18] sm:$0xff]
        %v5141 = vpack.c.bf16 %v5139, %v5137
        %v5142 = vpack.c.bf16 %v5140, %v5138
        %v5143 = vld [vmem:[%s825] sm:$0xff]
        %v5144 = vld [vmem:[%s825 + $0x8] sm:$0xff]
        %v5145 = vld [vmem:[%s825 + $0x10] sm:$0xff]
        %v5146 = vld [vmem:[%s825 + $0x18] sm:$0xff]
        %v5147 = vld [vmem:[%s825 + $0x20] sm:$0xff]
        %v5148 = vld [vmem:[%s825 + $0x28] sm:$0xff]
        %v5149 = vld [vmem:[%s825 + $0x30] sm:$0xff]
        %v5150 = vld [vmem:[%s825 + $0x38] sm:$0xff]
        %v5151 = vld [vmem:[%s825 + $0x40] sm:$0xff]
        %v5152 = vld [vmem:[%s825 + $0x48] sm:$0xff]
        %v5153 = vld [vmem:[%s825 + $0x50] sm:$0xff]
        %v5154 = vld [vmem:[%s825 + $0x58] sm:$0xff]
        %v5155 = vld [vmem:[%s825 + $0x60] sm:$0xff]
        %v5156 = vld [vmem:[%s825 + $0x68] sm:$0xff]
        %v5157 = vld [vmem:[%s825 + $0x70] sm:$0xff]
        %v5158 = vld [vmem:[%s825 + $0x78] sm:$0xff]
        %v5159 = vld [vmem:[%s825 + $0x80] sm:$0xff]
        %v5160 = vld [vmem:[%s825 + $0x88] sm:$0xff]
        %v5161 = vld [vmem:[%s825 + $0x90] sm:$0xff]
        %v5162 = vld [vmem:[%s825 + $0x98] sm:$0xff]
        %v5163 = vld [vmem:[%s825 + $0xa0] sm:$0xff]
        %v5164 = vld [vmem:[%s825 + $0xa8] sm:$0xff]
        %v5165 = vld [vmem:[%s825 + $0xb0] sm:$0xff]
        %v5166 = vld [vmem:[%s825 + $0xb8] sm:$0xff]
        %v5167 = vld [vmem:[%s825 + $0xc0] sm:$0xff]
        %v5168 = vld [vmem:[%s825 + $0xc8] sm:$0xff]
        %v5169 = vld [vmem:[%s825 + $0xd0] sm:$0xff]
        %v5170 = vld [vmem:[%s825 + $0xd8] sm:$0xff]
        %v5171 = vld [vmem:[%s825 + $0xe0] sm:$0xff]
        %v5172 = vld [vmem:[%s825 + $0xe8] sm:$0xff]
        %v5173 = vld [vmem:[%s825 + $0xf0] sm:$0xff]
        %v5174 = vld [vmem:[%s825 + $0xf8] sm:$0xff]
        %v5175 = vld [vmem:[%s959] sm:$0x3]
        %v5177 = vlaneseq
        %v5178 = vshrl.u32 %v5177, 7
        %v5179 = vsub.s32 0, %v5178
        %v5180 = vrot.slane %v5175, %v5179
        %v5181 = vlaneseq
        %v5182 = vshrl.u32 %v5181, 7
        %v5183 = vsub.s32 1, %v5182
        %v5184 = vrot.slane %v5175, %v5183
        %v5219 = vunpack.c.l.b16 %v5143
        %v5220 = vunpack.c.h.b16 %v5143
        %v5221 = vunpack.c.l.b16 %v5144
        %v5222 = vunpack.c.h.b16 %v5144
        %v5223 = vunpack.c.l.b16 %v5145
        %v5224 = vunpack.c.h.b16 %v5145
        %v5225 = vunpack.c.l.b16 %v5146
        %v5226 = vunpack.c.h.b16 %v5146
        %v5227 = vunpack.c.l.b16 %v5147
        %v5228 = vunpack.c.h.b16 %v5147
        %v5229 = vunpack.c.l.b16 %v5148
        %v5230 = vunpack.c.h.b16 %v5148
        %v5231 = vunpack.c.l.b16 %v5149
        %v5232 = vunpack.c.h.b16 %v5149
        %v5233 = vunpack.c.l.b16 %v5150
        %v5234 = vunpack.c.h.b16 %v5150
        %v5235 = vunpack.c.l.b16 %v5151
        %v5236 = vunpack.c.h.b16 %v5151
        %v5237 = vunpack.c.l.b16 %v5152
        %v5238 = vunpack.c.h.b16 %v5152
        %v5239 = vunpack.c.l.b16 %v5153
        %v5240 = vunpack.c.h.b16 %v5153
        %v5241 = vunpack.c.l.b16 %v5154
        %v5242 = vunpack.c.h.b16 %v5154
        %v5243 = vunpack.c.l.b16 %v5155
        %v5244 = vunpack.c.h.b16 %v5155
        %v5245 = vunpack.c.l.b16 %v5156
        %v5246 = vunpack.c.h.b16 %v5156
        %v5247 = vunpack.c.l.b16 %v5157
        %v5248 = vunpack.c.h.b16 %v5157
        %v5249 = vunpack.c.l.b16 %v5158
        %v5250 = vunpack.c.h.b16 %v5158
        %v5251 = vunpack.c.l.b16 %v5159
        %v5252 = vunpack.c.h.b16 %v5159
        %v5253 = vunpack.c.l.b16 %v5160
        %v5254 = vunpack.c.h.b16 %v5160
        %v5255 = vunpack.c.l.b16 %v5161
        %v5256 = vunpack.c.h.b16 %v5161
        %v5257 = vunpack.c.l.b16 %v5162
        %v5258 = vunpack.c.h.b16 %v5162
        %v5259 = vunpack.c.l.b16 %v5163
        %v5260 = vunpack.c.h.b16 %v5163
        %v5261 = vunpack.c.l.b16 %v5164
        %v5262 = vunpack.c.h.b16 %v5164
        %v5263 = vunpack.c.l.b16 %v5165
        %v5264 = vunpack.c.h.b16 %v5165
        %v5265 = vunpack.c.l.b16 %v5166
        %v5266 = vunpack.c.h.b16 %v5166
        %v5267 = vunpack.c.l.b16 %v5167
        %v5268 = vunpack.c.h.b16 %v5167
        %v5269 = vunpack.c.l.b16 %v5168
        %v5270 = vunpack.c.h.b16 %v5168
        %v5271 = vunpack.c.l.b16 %v5169
        %v5272 = vunpack.c.h.b16 %v5169
        %v5273 = vunpack.c.l.b16 %v5170
        %v5274 = vunpack.c.h.b16 %v5170
        %v5275 = vunpack.c.l.b16 %v5171
        %v5276 = vunpack.c.h.b16 %v5171
        %v5277 = vunpack.c.l.b16 %v5172
        %v5278 = vunpack.c.h.b16 %v5172
        %v5279 = vunpack.c.l.b16 %v5173
        %v5280 = vunpack.c.h.b16 %v5173
        %v5281 = vunpack.c.l.b16 %v5174
        %v5282 = vunpack.c.h.b16 %v5174
        %v5283 = vpack.c.b16 %v5221, %v5219
        %v5284 = vpack.c.b16 %v5222, %v5220
        %v5285 = vpack.c.b16 %v5225, %v5223
        %v5286 = vpack.c.b16 %v5226, %v5224
        %v5287 = vpack.c.b16 %v5229, %v5227
        %v5288 = vpack.c.b16 %v5230, %v5228
        %v5289 = vpack.c.b16 %v5233, %v5231
        %v5290 = vpack.c.b16 %v5234, %v5232
        %v5291 = vpack.c.b16 %v5237, %v5235
        %v5292 = vpack.c.b16 %v5238, %v5236
        %v5293 = vpack.c.b16 %v5241, %v5239
        %v5294 = vpack.c.b16 %v5242, %v5240
        %v5295 = vpack.c.b16 %v5245, %v5243
        %v5296 = vpack.c.b16 %v5246, %v5244
        %v5297 = vpack.c.b16 %v5249, %v5247
        %v5298 = vpack.c.b16 %v5250, %v5248
        %v5299 = vpack.c.b16 %v5253, %v5251
        %v5300 = vpack.c.b16 %v5254, %v5252
        %v5301 = vpack.c.b16 %v5257, %v5255
        %v5302 = vpack.c.b16 %v5258, %v5256
        %v5303 = vpack.c.b16 %v5261, %v5259
        %v5304 = vpack.c.b16 %v5262, %v5260
        %v5305 = vpack.c.b16 %v5265, %v5263
        %v5306 = vpack.c.b16 %v5266, %v5264
        %v5307 = vpack.c.b16 %v5269, %v5267
        %v5308 = vpack.c.b16 %v5270, %v5268
        %v5309 = vpack.c.b16 %v5273, %v5271
        %v5310 = vpack.c.b16 %v5274, %v5272
        %v5311 = vpack.c.b16 %v5277, %v5275
        %v5312 = vpack.c.b16 %v5278, %v5276
        %v5313 = vpack.c.b16 %v5281, %v5279
        %v5314 = vpack.c.b16 %v5282, %v5280
        %5347 = vmatprep.subr.bf16.mxu0 %v5298
        %5348 = vmatpush1.bf16.msra.mxu0 %v5297
        %5349 = vmatprep.subr.bf16.mxu0 %v5296
        %5350 = vmatpush1.bf16.msra.mxu0 %v5295
        %5351 = vmatprep.subr.bf16.mxu0 %v5294
        %5352 = vmatpush1.bf16.msra.mxu0 %v5293
        %5353 = vmatprep.subr.bf16.mxu0 %v5292
        %5354 = vmatpush1.bf16.msra.mxu0 %v5291
        %5355 = vmatprep.subr.bf16.mxu0 %v5290
        %5356 = vmatpush1.bf16.msra.mxu0 %v5289
        %5357 = vmatprep.subr.bf16.mxu0 %v5288
        %5358 = vmatpush1.bf16.msra.mxu0 %v5287
        %5359 = vmatprep.subr.bf16.mxu0 %v5286
        %5360 = vmatpush1.bf16.msra.mxu0 %v5285
        %5361 = vmatprep.subr.bf16.mxu0 %v5284
        %5362 = vmatpush1.bf16.msra.mxu0 %v5283
        %5363 = vmatprep.subr.bf16.mxu0 %v5314
        %5364 = vmatpush2.bf16.msra.mxu0 %v5313
        %5365 = vmatprep.subr.bf16.mxu0 %v5312
        %5366 = vmatpush2.bf16.msra.mxu0 %v5311
        %5367 = vmatprep.subr.bf16.mxu0 %v5310
        %5368 = vmatpush2.bf16.msra.mxu0 %v5309
        %5369 = vmatprep.subr.bf16.mxu0 %v5308
        %5370 = vmatpush2.bf16.msra.mxu0 %v5307
        %5371 = vmatprep.subr.bf16.mxu0 %v5306
        %5372 = vmatpush2.bf16.msra.mxu0 %v5305
        %5373 = vmatprep.subr.bf16.mxu0 %v5304
        %5374 = vmatpush2.bf16.msra.mxu0 %v5303
        %5375 = vmatprep.subr.bf16.mxu0 %v5302
        %5376 = vmatpush2.bf16.msra.mxu0 %v5301
        %5377 = vmatprep.subr.bf16.mxu0 %v5300
        %5378 = vmatpush2.bf16.msra.mxu0 %v5299
        %5379 = vmatprep.mubr.bf16.mxu0 %v5142
        %5380 = vmatmul.mubr.bf16.gmra.mxu0 %v5141
        %v5381 = vpop.f32.mrf.mxu0
        %v5382 = vadd.f32 %v5180, %v5381
        %v5383 = vpop.f32.mrf.mxu0
        %v5384 = vadd.f32 %v5184, %v5383
        %v5385 = vpop.f32.mrf.mxu0
        %v5386 = vadd.f32 %v5180, %v5385
        %v5387 = vpop.f32.mrf.mxu0
        %v5388 = vadd.f32 %v5184, %v5387
        %5389 = vdwg.mxu0
        %v5390 = vadd.f32 %v3974, %v5382
        %v5391 = vadd.f32 %v3975, %v5384
        %v5392 = vadd.f32 %v3976, %v5386
        %v5393 = vadd.f32 %v3977, %v5388
        %v5394 = vld [vmem:[%s963] sm:$0x3]
        %v5395 = vld [vmem:[%s967] sm:$0x3]
        %v5396 = vadd.f32 %v5390, %v5391
        %5397 = vadd.xlane.f32.xlu0 %v5396
        %v5398 = vpop.xlane.xlu0 %5397
        %v5399 = vadd.f32 %v5392, %v5393
        %5400 = vadd.xlane.f32.xlu0 %v5399
        %v5401 = vpop.xlane.xlu0 %5400
        %v5402 = vmul.f32 %v5398, %v1004
        %v5403 = vmul.f32 %v5401, %v1004
        %v5404 = vsub.f32 %v5390, %v5402
        %v5405 = vsub.f32 %v5391, %v5402
        %v5406 = vsub.f32 %v5392, %v5403
        %v5407 = vsub.f32 %v5393, %v5403
        %v5408 = vmul.f32 %v5404, %v5404
        %v5409 = vmul.f32 %v5405, %v5405
        %v5410 = vmul.f32 %v5406, %v5406
        %v5411 = vmul.f32 %v5407, %v5407
        %v5412 = vadd.f32 %v5408, %v5409
        %5413 = vadd.xlane.f32.xlu0 %v5412
        %v5414 = vpop.xlane.xlu0 %5413
        %v5415 = vadd.f32 %v5410, %v5411
        %5416 = vadd.xlane.f32.xlu0 %v5415
        %v5417 = vpop.xlane.xlu0 %5416
        %v5418 = vmul.f32 %v5414, %v1004
        %v5419 = vmul.f32 %v5417, %v1004
        %v5420 = vadd.f32 %v5418, 1e-05
        %v5421 = vadd.f32 %v5419, 1e-05
        %v5422 = vrsqrt.pop %v5420
        %v5423 = vrsqrt.pop %v5421
        %v5424 = vmul.f32 %v5404, %v5422
        %v5425 = vmul.f32 %v5405, %v5422
        %v5426 = vmul.f32 %v5406, %v5423
        %v5427 = vmul.f32 %v5407, %v5423
        %v5429 = vlaneseq
        %v5430 = vshrl.u32 %v5429, 7
        %v5431 = vsub.s32 0, %v5430
        %v5432 = vrot.slane %v5394, %v5431
        %v5433 = vlaneseq
        %v5434 = vshrl.u32 %v5433, 7
        %v5435 = vsub.s32 1, %v5434
        %v5436 = vrot.slane %v5394, %v5435
        %v5439 = vmul.f32 %v5424, %v5432
        %v5440 = vmul.f32 %v5425, %v5436
        %v5441 = vmul.f32 %v5426, %v5432
        %v5442 = vmul.f32 %v5427, %v5436
        %v5444 = vlaneseq
        %v5445 = vshrl.u32 %v5444, 7
        %v5446 = vsub.s32 0, %v5445
        %v5447 = vrot.slane %v5395, %v5446
        %v5448 = vlaneseq
        %v5449 = vshrl.u32 %v5448, 7
        %v5450 = vsub.s32 1, %v5449
        %v5451 = vrot.slane %v5395, %v5450
        %v5454 = vadd.f32 %v5439, %v5447
        %v5455 = vadd.f32 %v5440, %v5451
        %v5456 = vadd.f32 %v5441, %v5447
        %v5457 = vadd.f32 %v5442, %v5451
        %5458 = vst [vmem:[%s20] sm:$0xff] %v5454
        %5459 = vst [vmem:[%s20 + $0x8] sm:$0xff] %v5455
        %5460 = vst [vmem:[%s20 + $0x10] sm:$0xff] %v5456
        %5461 = vst [vmem:[%s20 + $0x18] sm:$0xff] %v5457
        %p5462 = scmp.eq.s32.totalorder %s43, 1
        // Predicated region
        $region129: #{forward.4} parent=99 // pred_check
          %p5463 = pneg %p5462
        $region130: #{forward.4} parent=99 // pred_check_branch
          %5465 = sbr.rel (%p5463) target = $region132
        $region131: #{forward.4} parent=99 // pred_region
          %v5466 = vld [vmem:[%s5] sm:$0x3]
          %v5467 = vmul.f32 %v5454, %v5454
          %v5468 = vmul.f32 %v5455, %v5455
          %v5469 = vmul.f32 %v5456, %v5456
          %v5470 = vmul.f32 %v5457, %v5457
          %v5471 = vadd.f32 %v5467, %v5468
          %5472 = vadd.xlane.f32.xlu0 %v5471
          %v5473 = vpop.xlane.xlu0 %5472
          %v5474 = vadd.f32 %v5469, %v5470
          %5475 = vadd.xlane.f32.xlu0 %v5474
          %v5476 = vpop.xlane.xlu0 %5475
          %v5477 = vmul.f32 %v5473, %v1004
          %v5478 = vmul.f32 %v5476, %v1004
          %v5479 = vadd.f32 %v5477, 1e-05
          %v5480 = vadd.f32 %v5478, 1e-05
          %v5481 = vrsqrt.pop %v5479
          %v5482 = vrsqrt.pop %v5480
          %v5483 = vmul.f32 %v5454, %v5481
          %v5484 = vmul.f32 %v5455, %v5481
          %v5485 = vmul.f32 %v5456, %v5482
          %v5486 = vmul.f32 %v5457, %v5482
          %v5488 = vlaneseq
          %v5489 = vshrl.u32 %v5488, 7
          %v5490 = vsub.s32 0, %v5489
          %v5491 = vrot.slane %v5466, %v5490
          %v5492 = vlaneseq
          %v5493 = vshrl.u32 %v5492, 7
          %v5494 = vsub.s32 1, %v5493
          %v5495 = vrot.slane %v5466, %v5494
          %v5498 = vmul.f32 %v5483, %v5491
          %v5499 = vmul.f32 %v5484, %v5495
          %v5500 = vmul.f32 %v5485, %v5491
          %v5501 = vmul.f32 %v5486, %v5495
          %5502 = vst [vmem:[%s20] sm:$0xff] %v5498
          %5503 = vst [vmem:[%s20 + $0x8] sm:$0xff] %v5499
          %5504 = vst [vmem:[%s20 + $0x10] sm:$0xff] %v5500
          %5505 = vst [vmem:[%s20 + $0x18] sm:$0xff] %v5501
        $region132: #{forward.4} parent=99 // pred_fallthru
          _
        // Predicated region
        $region133: #{forward.4} parent=99 // pred_check
          %p5506 = pneg %p546
        $region134: #{forward.4} parent=99 // pred_check_branch
          %5508 = sbr.rel (%p5506) target = $region136
        $region135: #{forward.4} parent=99 // pred_region
          _
        $region136: #{forward.4} parent=99 // pred_fallthru
          _
        // Predicated region
        $region137: #{forward.4} parent=99 // pred_check
          %p5509 = pneg %p546
        $region138: #{forward.4} parent=99 // pred_check_branch
          %5511 = sbr.rel (%p5509) target = $region140
        $region139: #{forward.4} parent=99 // pred_region
          _
        $region140: #{forward.4} parent=99 // pred_fallthru
          _
      $region100: #{forward.4} parent=5 // pred_fallthru
        _
      %p5512 = scmp.le.s32.totalorder 2, %s38
      // Predicated region
      $region141: #{forward.4} parent=5 // pred_check
        %p5513 = pneg %p5512
      $region142: #{forward.4} parent=5 // pred_check_branch
        %5515 = sbr.rel (%p5513) target = $region144
      $region143: #{forward.4} parent=5 // pred_region
        %s5516 = ssub.s32 %s38, 2
      $region144: #{forward.4} parent=5 // pred_fallthru
        _
    $region6: #{forward.4} parent=1 // loop_footer
      %s42 = sadd.s32 1, %s38
    $region7: #{forward.4} parent=1 // loop_footer_branch
      %37 = sbr.rel target = $region3
    $region8: #{forward.4} parent=1 // loop_exit
      _
    %5517 = vsyncpa [#allocation4], 1
    %s5518 = scalar_lea.sflag [#allocation4], 1
    %5519 = vsyncpa %s5518, 1
    %5520 = vsyncpa [#allocation6], 1
    %s5521 = scalar_lea.sflag [#allocation6], 1
    %5522 = vsyncpa %s5521, 1
    %5523 = vsyncpa [#allocation9], 1
    %s5524 = scalar_lea.sflag [#allocation9], 1
    %5525 = vsyncpa %s5524, 1
    %5526 = vsyncpa [#allocation12], 1
    %s5527 = scalar_lea.sflag [#allocation12], 1
    %5528 = vsyncpa %s5527, 1

</llo_original>
